<compile_context>
chip_gen: v5e
topology: v5e:2x2
jax: 0.10.0
libtpu: 0.0.40
codegen_flags: <defaults>
</compile_context>

<pallas_src>
import math
import functools

import jax
import jax.numpy as jnp
from jax.experimental import pallas as pl
from jax.experimental.pallas import tpu as pltpu


def _round_up(x, m):
    return ((x + m - 1) // m) * m


# ----------------------------------------------------------------------------
# Pallas kernels
# ----------------------------------------------------------------------------
def _conv_matmul_kernel(w_ref, b_ref, p_ref, o_ref, acc_ref, *, act):
    """acc += W(N,TK)@P(TK,TM) (bf16 in, f32 acc); last K step: act(acc+bias)."""

    @pl.when(pl.program_id(1) == 0)
    def _init():
        acc_ref[...] = jnp.zeros_like(acc_ref)

    acc_ref[...] += jnp.dot(w_ref[...], p_ref[...],
                            preferred_element_type=jnp.float32)

    @pl.when(pl.program_id(1) == pl.num_programs(1) - 1)
    def _finalize():
        acc = acc_ref[...] + b_ref[...]          # (N, 1) broadcast over lanes
        if act == "leaky":
            acc = jnp.where(acc > 0, acc, 0.2 * acc)
        elif act == "tanh":
            acc = jnp.tanh(acc)
        o_ref[...] = acc.astype(o_ref.dtype)


def matmul_bias_act(wm, patches, bias, n_true, act, out_dtype):
    """out = act(wm @ patches + bias)[:n_true]  via a tiled Pallas matmul.

    wm: (N, K) f32 (BN scale already folded in), patches: (K, M) bf16,
    bias: (N,) f32 or None.  Returns (n_true, M) in out_dtype.
    """
    N, K = wm.shape
    K2, M = patches.shape
    assert K == K2

    n_pad = _round_up(max(N, 8), 16)            # bf16 sublane packing
    k_pad = _round_up(K, 128)
    tk = min(512, k_pad)
    if k_pad % tk != 0:                          # k_pad is a multiple of 128
        tk = 128
    tm = min(256, _round_up(M, 128))             # lane-dense output tiles
    m_pad = _round_up(M, tm)

    wm_p = jnp.pad(wm.astype(jnp.bfloat16), ((0, n_pad - N), (0, k_pad - K)))
    p_p = jnp.pad(patches, ((0, k_pad - K), (0, m_pad - M)))
    b = jnp.zeros((n_pad, 1), jnp.float32)
    if bias is not None:
        b = b.at[:N, 0].set(bias.astype(jnp.float32))

    grid = (m_pad // tm, k_pad // tk)            # reduction (K) axis last
    out = pl.pallas_call(
        functools.partial(_conv_matmul_kernel, act=act),
        out_shape=jax.ShapeDtypeStruct((n_pad, m_pad), out_dtype),
        grid=grid,
        in_specs=[
            pl.BlockSpec((n_pad, tk), lambda m, k: (0, k)),
            pl.BlockSpec((n_pad, 1), lambda m, k: (0, 0)),
            pl.BlockSpec((tk, tm), lambda m, k: (k, m)),
        ],
        out_specs=pl.BlockSpec((n_pad, tm), lambda m, k: (0, m)),
        scratch_shapes=[pltpu.VMEM((n_pad, tm), jnp.float32)],
        compiler_params=pltpu.CompilerParams(
            dimension_semantics=("parallel", "arbitrary"),
            vmem_limit_bytes=32 * 1024 * 1024,
        ),
    )(wm_p, b, p_p)
    return out[:n_true, :M]


def _score_kernel(li_ref, lo_ref, o_ref, *, inv_l):
    d = li_ref[...] - lo_ref[...]
    o_ref[...] = jnp.sum(d * d, axis=0, keepdims=True) * inv_l


def anomaly_score(latent_i, latent_o):
    """mean((li - lo)^2) over the channel axis; latents are CNHW (L,B,H,W)."""
    L = latent_i.shape[0]
    li = latent_i.reshape(L, -1).astype(jnp.float32)
    lo = latent_o.reshape(L, -1).astype(jnp.float32)
    R = li.shape[1]                              # B*H*W
    r_pad = _round_up(R, 128)                    # lane-dense output row
    li = jnp.pad(li, ((0, 0), (0, r_pad - R)))
    lo = jnp.pad(lo, ((0, 0), (0, r_pad - R)))
    out = pl.pallas_call(
        functools.partial(_score_kernel, inv_l=1.0 / L),
        out_shape=jax.ShapeDtypeStruct((1, r_pad), jnp.float32),
        grid=(1,),
        in_specs=[pl.BlockSpec((L, r_pad), lambda i: (0, 0)),
                  pl.BlockSpec((L, r_pad), lambda i: (0, 0))],
        out_specs=pl.BlockSpec((1, r_pad), lambda i: (0, 0)),
    )(li, lo)
    return out[0, :R]


# ----------------------------------------------------------------------------
# Conv / ConvTranspose glue (CNHW activations, PyTorch semantics)
# ----------------------------------------------------------------------------
def _im2col_cnhw(x, k, stride, pad, dtype=jnp.bfloat16):
    """x: (C, B, H, W) -> patches (C*k*k, B*Ho*Wo), row order (c, u, v)."""
    xp = jnp.pad(x.astype(dtype), ((0, 0), (0, 0), (pad, pad), (pad, pad)))
    C, B, Hp, Wp = xp.shape
    Ho = (Hp - k) // stride + 1
    Wo = (Wp - k) // stride + 1
    cols = []
    for u in range(k):
        for v in range(k):
            cols.append(xp[:, :, u:u + stride * Ho:stride, v:v + stride * Wo:stride])
    patches = jnp.stack(cols, axis=1)            # (C, k*k, B, Ho, Wo)
    patches = patches.reshape(C * k * k, B * Ho * Wo)
    return patches, Ho, Wo


def conv2d_cnhw(x, w, *, stride, pad, scale=None, bias=None, act="none",
                out_dtype=jnp.bfloat16):
    """PyTorch Conv2d(bias=False) + fused BN affine + activation, CNHW layout.

    x: (Cin, B, H, W), w: (Cout, Cin, k, k) -> (Cout, B, Ho, Wo)
    """
    cout, cin, k, _ = w.shape
    B = x.shape[1]
    patches, Ho, Wo = _im2col_cnhw(x, k, stride, pad)
    wm = w.reshape(cout, cin * k * k).astype(jnp.float32)
    if scale is not None:
        wm = wm * scale[:, None]                 # fold BN scale into weights
    out2d = matmul_bias_act(wm, patches, bias, cout, act, out_dtype)
    return out2d.reshape(cout, B, Ho, Wo)


# Sub-pixel tap map for ConvTranspose2d(k=4, s=2, p=1):
#   output row 2m   (phase 0): xp[m]  *w[3] + xp[m+1]*w[1]
#   output row 2m+1 (phase 1): xp[m+1]*w[2] + xp[m+2]*w[0]
# where xp is the input zero-padded by 1.  (offset_in_3tap_window, kernel_tap)
_SUBPIX_TAPS = {0: ((0, 3), (1, 1)), 1: ((1, 2), (2, 0))}


def conv_transpose2d_s2_cnhw(x, w_t, *, scale=None, bias=None, act="none",
                             out_dtype=jnp.bfloat16):
    """ConvTranspose2d(k=4, stride=2, pad=1, bias=False) via phase decomposition.

    x: (Cin, B, H, W), w_t: (Cin, Cout, 4, 4) -> (Cout, B, 2H, 2W)
    All 4 output phases come from ONE 3x3 im2col + ONE matmul (no dilation zeros).
    """
    cin, cout = w_t.shape[0], w_t.shape[1]
    C, B, H, W = x.shape

    # Combined weight: rows ordered (phase_row, phase_col, out_channel),
    # cols ordered (cin, a, b) over the 3x3 window of the padded input.
    w_oc = jnp.transpose(w_t, (1, 0, 2, 3)).astype(jnp.float32)   # (cout, cin, 4, 4)
    wc = jnp.zeros((2, 2, cout, cin, 3, 3), jnp.float32)
    for pr in (0, 1):
        for pc in (0, 1):
            for (a, u) in _SUBPIX_TAPS[pr]:
                for (b_, v) in _SUBPIX_TAPS[pc]:
                    wc = wc.at[pr, pc, :, :, a, b_].set(w_oc[:, :, u, v])
    wm = wc.reshape(4 * cout, cin * 9)
    if scale is not None:
        wm = wm * jnp.tile(scale, 4)[:, None]
    bias4 = None if bias is None else jnp.tile(bias, 4)

    xp = jnp.pad(x, ((0, 0), (0, 0), (1, 1), (1, 1)))
    patches, Ho, Wo = _im2col_cnhw(xp, 3, 1, 0)                   # Ho=H, Wo=W
    out2d = matmul_bias_act(wm, patches, bias4, 4 * cout, act, out_dtype)
    out = out2d.reshape(2, 2, cout, B, H, W)
    # interleave phases: out_full[o, b, 2m+pr, 2n+pc] = out[pr, pc, o, b, m, n]
    out = out.transpose(2, 3, 4, 0, 5, 1).reshape(cout, B, 2 * H, 2 * W)
    return out


def bn_eval_scale_bias(gamma, beta, eps=1e-5):
    # eval-mode BatchNorm with freshly-initialized running stats (mean=0, var=1)
    # TODO(synk): fold real running_mean/var here when loading trained weights.
    scale = gamma / jnp.sqrt(1.0 + eps)
    bias = beta
    return scale, bias


def pad_nextpow2(batch):
    target = 2 ** math.ceil(math.log2(max(batch.shape[-2], batch.shape[-1])))
    dh = target - batch.shape[-2]
    dw = target - batch.shape[-1]
    pad_h = (math.ceil(dh / 2), math.floor(dh / 2))
    pad_w = (math.ceil(dw / 2), math.floor(dw / 2))
    return jnp.pad(batch, ((0, 0), (0, 0), pad_h, pad_w))


# ----------------------------------------------------------------------------
# Parameter initialization (DCGAN init: conv ~ N(0, .02), BN gamma ~ N(1, .02))
# ----------------------------------------------------------------------------
class _KeyGen:
    def __init__(self, key):
        self._key = key

    def __call__(self):
        self._key, sub = jax.random.split(self._key)
        return sub


def init_encoder_params(kg, img_size, latent_vec_size, img_channels, n_features):
    p = {}
    p["initial_w"] = 0.02 * jax.random.normal(
        kg(), (n_features, img_channels, 4, 4), jnp.float32)
    pyramid = []
    pyramid_dim = min(img_size) // 2
    nf = n_features
    while pyramid_dim > 4:
        w = 0.02 * jax.random.normal(kg(), (2 * nf, nf, 4, 4), jnp.float32)
        g = 1.0 + 0.02 * jax.random.normal(kg(), (2 * nf,), jnp.float32)
        b = jnp.zeros((2 * nf,), jnp.float32)
        pyramid.append((w, g, b))
        nf *= 2
        pyramid_dim //= 2
    p["pyramid"] = pyramid
    p["final_w"] = 0.02 * jax.random.normal(
        kg(), (latent_vec_size, nf, 4, 4), jnp.float32)
    return p


def init_decoder_params(kg, img_size, latent_vec_size, img_channels, n_features):
    p = {}
    exp_factor = math.ceil(math.log(min(img_size) // 2, 2)) - 2
    nin = n_features * 2 ** exp_factor
    p["latent_w"] = 0.02 * jax.random.normal(
        kg(), (latent_vec_size, nin, 4, 4), jnp.float32)   # ConvT: (in, out, k, k)
    p["latent_g"] = 1.0 + 0.02 * jax.random.normal(kg(), (nin,), jnp.float32)
    p["latent_b"] = jnp.zeros((nin,), jnp.float32)
    pyramid = []
    pyramid_dim = min(img_size) // 2
    while pyramid_dim > 4:
        w = 0.02 * jax.random.normal(kg(), (nin, nin // 2, 4, 4), jnp.float32)
        g = 1.0 + 0.02 * jax.random.normal(kg(), (nin // 2,), jnp.float32)
        b = jnp.zeros((nin // 2,), jnp.float32)
        pyramid.append((w, g, b))
        nin //= 2
        pyramid_dim //= 2
    p["pyramid"] = pyramid
    p["final_w"] = 0.02 * jax.random.normal(
        kg(), (nin, img_channels, 4, 4), jnp.float32)
    return p


def init_ganomaly_params(key, img_size, latent_vec_size, img_channels, n_features):
    kg = _KeyGen(key)
    return {
        "encoder1": init_encoder_params(kg, img_size, latent_vec_size,
                                        img_channels, n_features),
        "decoder": init_decoder_params(kg, img_size, latent_vec_size,
                                       img_channels, n_features),
        "encoder2": init_encoder_params(kg, img_size, latent_vec_size,
                                        img_channels, n_features),
    }
    # TODO(synk): the Discriminator is instantiated in Ganomaly.__init__ but is
    # never used by Ganomaly.forward, so it is intentionally not implemented.


# ----------------------------------------------------------------------------
# Forward passes (activations in CNHW layout: (C, B, H, W))
# ----------------------------------------------------------------------------
def encoder_forward(x, p):
    x = conv2d_cnhw(x, p["initial_w"], stride=2, pad=4, act="leaky")
    for w, g, b in p["pyramid"]:
        s, bb = bn_eval_scale_bias(g, b)
        x = conv2d_cnhw(x, w, stride=2, pad=1, scale=s, bias=bb, act="leaky")
    # latents kept in f32 (they feed the anomaly-score reduction)
    x = conv2d_cnhw(x, p["final_w"], stride=1, pad=0, act="none",
                    out_dtype=jnp.float32)
    return x


def decoder_forward(z, p):
    s, b = bn_eval_scale_bias(p["latent_g"], p["latent_b"])
    # stride-1 ConvTranspose == plain conv with flipped kernel, pad = k-1
    k = p["latent_w"].shape[2]
    w_conv = jnp.flip(p["latent_w"], axis=(2, 3)).transpose(1, 0, 2, 3)
    x = conv2d_cnhw(z, w_conv, stride=1, pad=k - 1, scale=s, bias=b, act="leaky")
    for w, g, bb in p["pyramid"]:
        s2, b2 = bn_eval_scale_bias(g, bb)
        x = conv_transpose2d_s2_cnhw(x, w, scale=s2, bias=b2, act="leaky")
    x = conv_transpose2d_s2_cnhw(x, p["final_w"], act="tanh",
                                 out_dtype=jnp.float32)
    return x


def generator_forward(x_cnhw, params):
    latent_i = encoder_forward(x_cnhw, params["encoder1"])
    gen_image = decoder_forward(latent_i, params["decoder"])
    latent_o = encoder_forward(gen_image, params["encoder2"])
    return gen_image, latent_i, latent_o


def ganomaly_forward(batch, params, training=False):
    padded_batch = pad_nextpow2(batch)                  # NCHW
    x_cnhw = padded_batch.transpose(1, 0, 2, 3)         # -> CNHW
    fake, latent_i, latent_o = generator_forward(x_cnhw, params)
    if training:
        # TODO(synk): training-mode (batch-statistic) BatchNorm not implemented;
        # eval-mode running stats are used here as well.
        return (padded_batch,
                fake.transpose(1, 0, 2, 3),
                latent_i.transpose(1, 0, 2, 3),
                latent_o.transpose(1, 0, 2, 3))
    # eval: mean((latent_i - latent_o)^2, dim=channel).view(-1)
    return anomaly_score(latent_i, latent_o)


# ----------------------------------------------------------------------------
if __name__ == "__main__":
    img_size = (32, 32)
    latent_vec_size = 16
    img_channels = 3
    n_features = 8
    batch = 2

    key = jax.random.PRNGKey(0)
    k_param, k_input = jax.random.split(key)
    params = init_ganomaly_params(k_param, img_size, latent_vec_size,
                                  img_channels, n_features)
    x = jax.random.normal(k_input, (batch, img_channels, *img_size), jnp.float32)

    fwd = jax.jit(lambda b: ganomaly_forward(b, params, training=False))
    scores = jax.block_until_ready(fwd(x))
    assert scores.shape == (batch,), scores.shape
    assert scores.dtype == jnp.float32
    assert bool(jnp.all(jnp.isfinite(scores)))
    print("KERNEL_OK")
</pallas_src>

<mosaic_0001>
module attributes {stable_mosaic.version = 11 : i64} {
  func.func @_conv_matmul_kernel(%arg0: i32, %arg1: i32, %arg2: memref<16x128xbf16, #tpu.memory_space<vmem>>, %arg3: memref<16x1xf32, #tpu.memory_space<vmem>>, %arg4: memref<128x256xbf16, #tpu.memory_space<vmem>>, %arg5: memref<16x256xbf16, #tpu.memory_space<vmem>>, %arg6: memref<16x256xf32, #tpu.memory_space<vmem>>) attributes {dimension_semantics = [#tpu.dimension_semantics<parallel>, #tpu.dimension_semantics<arbitrary>], iteration_bounds = array<i64: 3, 1>, scalar_prefetch = 0 : i64, scratch_operands = 1 : i64, tpu.core_type = #tpu.core_type<tc>, window_params = [{transform_indices = @transform_0, window_bounds = array<i64: 16, 128>}, {pipeline_mode = #tpu.pipeline_mode<synchronous>, transform_indices = @transform_1, window_bounds = array<i64: 16, 1>}, {transform_indices = @transform_2, window_bounds = array<i64: 128, 256>}, {transform_indices = @transform_3, window_bounds = array<i64: 16, 256>}]} {
    %c0_i32 = arith.constant 0 : i32
    %0 = arith.cmpi eq, %arg1, %c0_i32 : i32
    %1 = arith.extui %0 : i1 to i32
    %c0_i32_0 = arith.constant 0 : i32
    %2 = arith.cmpi ne, %1, %c0_i32_0 : i32
    scf.if %2 {
      %cst_10 = arith.constant 0.000000e+00 : f32
      %12 = vector.broadcast %cst_10 : f32 to vector<16x256xf32>
      %c0_11 = arith.constant 0 : index
      %c0_12 = arith.constant 0 : index
      %13 = vector.load %arg6[%c0_11, %c0_12] : memref<16x256xf32, #tpu.memory_space<vmem>>, vector<16x256xf32>
      tpu.vector_store %arg6[%c0_11, %c0_12], %12 {strides = array<i32>} : memref<16x256xf32, #tpu.memory_space<vmem>>, vector<16x256xf32>,
    } else {
    }
    %c0 = arith.constant 0 : index
    %c0_1 = arith.constant 0 : index
    %3 = vector.load %arg6[%c0, %c0_1] : memref<16x256xf32, #tpu.memory_space<vmem>>, vector<16x256xf32>
    %c0_2 = arith.constant 0 : index
    %c0_3 = arith.constant 0 : index
    %4 = vector.load %arg2[%c0_2, %c0_3] : memref<16x128xbf16, #tpu.memory_space<vmem>>, vector<16x128xbf16>
    %c0_4 = arith.constant 0 : index
    %c0_5 = arith.constant 0 : index
    %5 = vector.load %arg4[%c0_4, %c0_5] : memref<128x256xbf16, #tpu.memory_space<vmem>>, vector<128x256xbf16>
    %cst = arith.constant dense<0.000000e+00> : vector<16x256xf32>
    %6 = tpu.matmul %4, %5, %cst {dimension_numbers = #tpu.dot_dimension_numbers<[1], [0], [0], [1], [0, 0, 1, 1], [], []>} : vector<16x128xbf16>, vector<128x256xbf16>, vector<16x256xf32> -> vector<16x256xf32>
    %7 = arith.addf %3, %6 : vector<16x256xf32>
    %c0_6 = arith.constant 0 : index
    %c0_7 = arith.constant 0 : index
    %8 = vector.load %arg6[%c0_6, %c0_7] : memref<16x256xf32, #tpu.memory_space<vmem>>, vector<16x256xf32>
    tpu.vector_store %arg6[%c0_6, %c0_7], %7 {strides = array<i32>} : memref<16x256xf32, #tpu.memory_space<vmem>>, vector<16x256xf32>,
    %c0_i32_8 = arith.constant 0 : i32
    %9 = arith.cmpi eq, %arg1, %c0_i32_8 : i32
    %10 = arith.extui %9 : i1 to i32
    %c0_i32_9 = arith.constant 0 : i32
    %11 = arith.cmpi ne, %10, %c0_i32_9 : i32
    scf.if %11 {
      %c0_10 = arith.constant 0 : index
      %c0_11 = arith.constant 0 : index
      %12 = vector.load %arg6[%c0_10, %c0_11] : memref<16x256xf32, #tpu.memory_space<vmem>>, vector<16x256xf32>
      %c0_12 = arith.constant 0 : index
      %c0_13 = arith.constant 0 : index
      %13 = vector.load %arg3[%c0_12, %c0_13] : memref<16x1xf32, #tpu.memory_space<vmem>>, vector<16x1xf32>
      %14 = vector.broadcast %13 : vector<16x1xf32> to vector<16x256xf32>
      %15 = arith.addf %12, %14 : vector<16x256xf32>
      %cst_14 = arith.constant 0.000000e+00 : f32
      %16 = vector.broadcast %cst_14 : f32 to vector<16x256xf32>
      %17 = arith.cmpf ogt, %15, %16 : vector<16x256xf32>
      %cst_15 = arith.constant 2.000000e-01 : f32
      %18 = vector.broadcast %cst_15 : f32 to vector<16x256xf32>
      %19 = arith.mulf %18, %15 : vector<16x256xf32>
      %20 = arith.select %17, %15, %19 : vector<16x256xi1>, vector<16x256xf32>
      %21 = arith.truncf %20 : vector<16x256xf32> to vector<16x256xbf16>
      %c0_16 = arith.constant 0 : index
      %c0_17 = arith.constant 0 : index
      %22 = vector.load %arg5[%c0_16, %c0_17] : memref<16x256xbf16, #tpu.memory_space<vmem>>, vector<16x256xbf16>
      tpu.vector_store %arg5[%c0_16, %c0_17], %21 {strides = array<i32>} : memref<16x256xbf16, #tpu.memory_space<vmem>>, vector<16x256xbf16>,
    } else {
    }
    return
  }
  func.func @transform_0(%arg0: i32, %arg1: i32) -> (i32, i32) {
    %c0_i32 = arith.constant 0 : i32
    %c0_i32_0 = arith.constant 0 : i32
    return %c0_i32, %arg1 : i32, i32
  }
  func.func @transform_1(%arg0: i32, %arg1: i32) -> (i32, i32) {
    %c0_i32 = arith.constant 0 : i32
    %c0_i32_0 = arith.constant 0 : i32
    %c0_i32_1 = arith.constant 0 : i32
    return %c0_i32, %c0_i32_0 : i32, i32
  }
  func.func @transform_2(%arg0: i32, %arg1: i32) -> (i32, i32) {
    %c0_i32 = arith.constant 0 : i32
    return %arg1, %arg0 : i32, i32
  }
  func.func @transform_3(%arg0: i32, %arg1: i32) -> (i32, i32) {
    %c0_i32 = arith.constant 0 : i32
    %c0_i32_0 = arith.constant 0 : i32
    return %c0_i32, %arg0 : i32, i32
  }
}

module attributes {stable_mosaic.version = 11 : i64} {
  func.func @_conv_matmul_kernel(%arg0: i32, %arg1: i32, %arg2: memref<16x128xbf16, #tpu.memory_space<vmem>>, %arg3: memref<16x1xf32, #tpu.memory_space<vmem>>, %arg4: memref<128x256xbf16, #tpu.memory_space<vmem>>, %arg5: memref<16x256xbf16, #tpu.memory_space<vmem>>, %arg6: memref<16x256xf32, #tpu.memory_space<vmem>>) attributes {dimension_semantics = [#tpu.dimension_semantics<parallel>, #tpu.dimension_semantics<arbitrary>], iteration_bounds = array<i64: 1, 1>, scalar_prefetch = 0 : i64, scratch_operands = 1 : i64, tpu.core_type = #tpu.core_type<tc>, window_params = [{transform_indices = @transform_0, window_bounds = array<i64: 16, 128>}, {pipeline_mode = #tpu.pipeline_mode<synchronous>, transform_indices = @transform_1, window_bounds = array<i64: 16, 1>}, {transform_indices = @transform_2, window_bounds = array<i64: 128, 256>}, {transform_indices = @transform_3, window_bounds = array<i64: 16, 256>}]} {
    %c0_i32 = arith.constant 0 : i32
    %0 = arith.cmpi eq, %arg1, %c0_i32 : i32
    %1 = arith.extui %0 : i1 to i32
    %c0_i32_0 = arith.constant 0 : i32
    %2 = arith.cmpi ne, %1, %c0_i32_0 : i32
    scf.if %2 {
      %cst_10 = arith.constant 0.000000e+00 : f32
      %12 = vector.broadcast %cst_10 : f32 to vector<16x256xf32>
      %c0_11 = arith.constant 0 : index
      %c0_12 = arith.constant 0 : index
      %13 = vector.load %arg6[%c0_11, %c0_12] : memref<16x256xf32, #tpu.memory_space<vmem>>, vector<16x256xf32>
      tpu.vector_store %arg6[%c0_11, %c0_12], %12 {strides = array<i32>} : memref<16x256xf32, #tpu.memory_space<vmem>>, vector<16x256xf32>,
    } else {
    }
    %c0 = arith.constant 0 : index
    %c0_1 = arith.constant 0 : index
    %3 = vector.load %arg6[%c0, %c0_1] : memref<16x256xf32, #tpu.memory_space<vmem>>, vector<16x256xf32>
    %c0_2 = arith.constant 0 : index
    %c0_3 = arith.constant 0 : index
    %4 = vector.load %arg2[%c0_2, %c0_3] : memref<16x128xbf16, #tpu.memory_space<vmem>>, vector<16x128xbf16>
    %c0_4 = arith.constant 0 : index
    %c0_5 = arith.constant 0 : index
    %5 = vector.load %arg4[%c0_4, %c0_5] : memref<128x256xbf16, #tpu.memory_space<vmem>>, vector<128x256xbf16>
    %cst = arith.constant dense<0.000000e+00> : vector<16x256xf32>
    %6 = tpu.matmul %4, %5, %cst {dimension_numbers = #tpu.dot_dimension_numbers<[1], [0], [0], [1], [0, 0, 1, 1], [], []>} : vector<16x128xbf16>, vector<128x256xbf16>, vector<16x256xf32> -> vector<16x256xf32>
    %7 = arith.addf %3, %6 : vector<16x256xf32>
    %c0_6 = arith.constant 0 : index
    %c0_7 = arith.constant 0 : index
    %8 = vector.load %arg6[%c0_6, %c0_7] : memref<16x256xf32, #tpu.memory_space<vmem>>, vector<16x256xf32>
    tpu.vector_store %arg6[%c0_6, %c0_7], %7 {strides = array<i32>} : memref<16x256xf32, #tpu.memory_space<vmem>>, vector<16x256xf32>,
    %c0_i32_8 = arith.constant 0 : i32
    %9 = arith.cmpi eq, %arg1, %c0_i32_8 : i32
    %10 = arith.extui %9 : i1 to i32
    %c0_i32_9 = arith.constant 0 : i32
    %11 = arith.cmpi ne, %10, %c0_i32_9 : i32
    scf.if %11 {
      %c0_10 = arith.constant 0 : index
      %c0_11 = arith.constant 0 : index
      %12 = vector.load %arg6[%c0_10, %c0_11] : memref<16x256xf32, #tpu.memory_space<vmem>>, vector<16x256xf32>
      %c0_12 = arith.constant 0 : index
      %c0_13 = arith.constant 0 : index
      %13 = vector.load %arg3[%c0_12, %c0_13] : memref<16x1xf32, #tpu.memory_space<vmem>>, vector<16x1xf32>
      %14 = vector.broadcast %13 : vector<16x1xf32> to vector<16x256xf32>
      %15 = arith.addf %12, %14 : vector<16x256xf32>
      %cst_14 = arith.constant 0.000000e+00 : f32
      %16 = vector.broadcast %cst_14 : f32 to vector<16x256xf32>
      %17 = arith.cmpf ogt, %15, %16 : vector<16x256xf32>
      %cst_15 = arith.constant 2.000000e-01 : f32
      %18 = vector.broadcast %cst_15 : f32 to vector<16x256xf32>
      %19 = arith.mulf %18, %15 : vector<16x256xf32>
      %20 = arith.select %17, %15, %19 : vector<16x256xi1>, vector<16x256xf32>
      %21 = arith.truncf %20 : vector<16x256xf32> to vector<16x256xbf16>
      %c0_16 = arith.constant 0 : index
      %c0_17 = arith.constant 0 : index
      %22 = vector.load %arg5[%c0_16, %c0_17] : memref<16x256xbf16, #tpu.memory_space<vmem>>, vector<16x256xbf16>
      tpu.vector_store %arg5[%c0_16, %c0_17], %21 {strides = array<i32>} : memref<16x256xbf16, #tpu.memory_space<vmem>>, vector<16x256xbf16>,
    } else {
    }
    return
  }
  func.func @transform_0(%arg0: i32, %arg1: i32) -> (i32, i32) {
    %c0_i32 = arith.constant 0 : i32
    %c0_i32_0 = arith.constant 0 : i32
    return %c0_i32, %arg1 : i32, i32
  }
  func.func @transform_1(%arg0: i32, %arg1: i32) -> (i32, i32) {
    %c0_i32 = arith.constant 0 : i32
    %c0_i32_0 = arith.constant 0 : i32
    %c0_i32_1 = arith.constant 0 : i32
    return %c0_i32, %c0_i32_0 : i32, i32
  }
  func.func @transform_2(%arg0: i32, %arg1: i32) -> (i32, i32) {
    %c0_i32 = arith.constant 0 : i32
    return %arg1, %arg0 : i32, i32
  }
  func.func @transform_3(%arg0: i32, %arg1: i32) -> (i32, i32) {
    %c0_i32 = arith.constant 0 : i32
    %c0_i32_0 = arith.constant 0 : i32
    return %c0_i32, %arg0 : i32, i32
  }
}

module attributes {stable_mosaic.version = 11 : i64} {
  func.func @_conv_matmul_kernel(%arg0: i32, %arg1: i32, %arg2: memref<32x256xbf16, #tpu.memory_space<vmem>>, %arg3: memref<32x1xf32, #tpu.memory_space<vmem>>, %arg4: memref<256x128xbf16, #tpu.memory_space<vmem>>, %arg5: memref<32x128xbf16, #tpu.memory_space<vmem>>, %arg6: memref<32x128xf32, #tpu.memory_space<vmem>>) attributes {dimension_semantics = [#tpu.dimension_semantics<parallel>, #tpu.dimension_semantics<arbitrary>], iteration_bounds = array<i64: 1, 1>, scalar_prefetch = 0 : i64, scratch_operands = 1 : i64, tpu.core_type = #tpu.core_type<tc>, window_params = [{transform_indices = @transform_0, window_bounds = array<i64: 32, 256>}, {pipeline_mode = #tpu.pipeline_mode<synchronous>, transform_indices = @transform_1, window_bounds = array<i64: 32, 1>}, {transform_indices = @transform_2, window_bounds = array<i64: 256, 128>}, {transform_indices = @transform_3, window_bounds = array<i64: 32, 128>}]} {
    %c0_i32 = arith.constant 0 : i32
    %0 = arith.cmpi eq, %arg1, %c0_i32 : i32
    %1 = arith.extui %0 : i1 to i32
    %c0_i32_0 = arith.constant 0 : i32
    %2 = arith.cmpi ne, %1, %c0_i32_0 : i32
    scf.if %2 {
      %cst_10 = arith.constant 0.000000e+00 : f32
      %12 = vector.broadcast %cst_10 : f32 to vector<32x128xf32>
      %c0_11 = arith.constant 0 : index
      %c0_12 = arith.constant 0 : index
      %13 = vector.load %arg6[%c0_11, %c0_12] : memref<32x128xf32, #tpu.memory_space<vmem>>, vector<32x128xf32>
      tpu.vector_store %arg6[%c0_11, %c0_12], %12 {strides = array<i32>} : memref<32x128xf32, #tpu.memory_space<vmem>>, vector<32x128xf32>,
    } else {
    }
    %c0 = arith.constant 0 : index
    %c0_1 = arith.constant 0 : index
    %3 = vector.load %arg6[%c0, %c0_1] : memref<32x128xf32, #tpu.memory_space<vmem>>, vector<32x128xf32>
    %c0_2 = arith.constant 0 : index
    %c0_3 = arith.constant 0 : index
    %4 = vector.load %arg2[%c0_2, %c0_3] : memref<32x256xbf16, #tpu.memory_space<vmem>>, vector<32x256xbf16>
    %c0_4 = arith.constant 0 : index
    %c0_5 = arith.constant 0 : index
    %5 = vector.load %arg4[%c0_4, %c0_5] : memref<256x128xbf16, #tpu.memory_space<vmem>>, vector<256x128xbf16>
    %cst = arith.constant dense<0.000000e+00> : vector<32x128xf32>
    %6 = tpu.matmul %4, %5, %cst {dimension_numbers = #tpu.dot_dimension_numbers<[1], [0], [0], [1], [0, 0, 1, 1], [], []>} : vector<32x256xbf16>, vector<256x128xbf16>, vector<32x128xf32> -> vector<32x128xf32>
    %7 = arith.addf %3, %6 : vector<32x128xf32>
    %c0_6 = arith.constant 0 : index
    %c0_7 = arith.constant 0 : index
    %8 = vector.load %arg6[%c0_6, %c0_7] : memref<32x128xf32, #tpu.memory_space<vmem>>, vector<32x128xf32>
    tpu.vector_store %arg6[%c0_6, %c0_7], %7 {strides = array<i32>} : memref<32x128xf32, #tpu.memory_space<vmem>>, vector<32x128xf32>,
    %c0_i32_8 = arith.constant 0 : i32
    %9 = arith.cmpi eq, %arg1, %c0_i32_8 : i32
    %10 = arith.extui %9 : i1 to i32
    %c0_i32_9 = arith.constant 0 : i32
    %11 = arith.cmpi ne, %10, %c0_i32_9 : i32
    scf.if %11 {
      %c0_10 = arith.constant 0 : index
      %c0_11 = arith.constant 0 : index
      %12 = vector.load %arg6[%c0_10, %c0_11] : memref<32x128xf32, #tpu.memory_space<vmem>>, vector<32x128xf32>
      %c0_12 = arith.constant 0 : index
      %c0_13 = arith.constant 0 : index
      %13 = vector.load %arg3[%c0_12, %c0_13] : memref<32x1xf32, #tpu.memory_space<vmem>>, vector<32x1xf32>
      %14 = vector.broadcast %13 : vector<32x1xf32> to vector<32x128xf32>
      %15 = arith.addf %12, %14 : vector<32x128xf32>
      %cst_14 = arith.constant 0.000000e+00 : f32
      %16 = vector.broadcast %cst_14 : f32 to vector<32x128xf32>
      %17 = arith.cmpf ogt, %15, %16 : vector<32x128xf32>
      %cst_15 = arith.constant 2.000000e-01 : f32
      %18 = vector.broadcast %cst_15 : f32 to vector<32x128xf32>
      %19 = arith.mulf %18, %15 : vector<32x128xf32>
      %20 = arith.select %17, %15, %19 : vector<32x128xi1>, vector<32x128xf32>
      %21 = arith.truncf %20 : vector<32x128xf32> to vector<32x128xbf16>
      %c0_16 = arith.constant 0 : index
      %c0_17 = arith.constant 0 : index
      %22 = vector.load %arg5[%c0_16, %c0_17] : memref<32x128xbf16, #tpu.memory_space<vmem>>, vector<32x128xbf16>
      tpu.vector_store %arg5[%c0_16, %c0_17], %21 {strides = array<i32>} : memref<32x128xbf16, #tpu.memory_space<vmem>>, vector<32x128xbf16>,
    } else {
    }
    return
  }
  func.func @transform_0(%arg0: i32, %arg1: i32) -> (i32, i32) {
    %c0_i32 = arith.constant 0 : i32
    %c0_i32_0 = arith.constant 0 : i32
    return %c0_i32, %arg1 : i32, i32
  }
  func.func @transform_1(%arg0: i32, %arg1: i32) -> (i32, i32) {
    %c0_i32 = arith.constant 0 : i32
    %c0_i32_0 = arith.constant 0 : i32
    %c0_i32_1 = arith.constant 0 : i32
    return %c0_i32, %c0_i32_0 : i32, i32
  }
  func.func @transform_2(%arg0: i32, %arg1: i32) -> (i32, i32) {
    %c0_i32 = arith.constant 0 : i32
    return %arg1, %arg0 : i32, i32
  }
  func.func @transform_3(%arg0: i32, %arg1: i32) -> (i32, i32) {
    %c0_i32 = arith.constant 0 : i32
    %c0_i32_0 = arith.constant 0 : i32
    return %c0_i32, %arg0 : i32, i32
  }
}

module attributes {stable_mosaic.version = 11 : i64} {
  func.func @_conv_matmul_kernel(%arg0: i32, %arg1: i32, %arg2: memref<16x512xbf16, #tpu.memory_space<vmem>>, %arg3: memref<16x1xf32, #tpu.memory_space<vmem>>, %arg4: memref<512x128xbf16, #tpu.memory_space<vmem>>, %arg5: memref<16x128xf32, #tpu.memory_space<vmem>>, %arg6: memref<16x128xf32, #tpu.memory_space<vmem>>) attributes {dimension_semantics = [#tpu.dimension_semantics<parallel>, #tpu.dimension_semantics<arbitrary>], iteration_bounds = array<i64: 1, 1>, scalar_prefetch = 0 : i64, scratch_operands = 1 : i64, tpu.core_type = #tpu.core_type<tc>, window_params = [{transform_indices = @transform_0, window_bounds = array<i64: 16, 512>}, {pipeline_mode = #tpu.pipeline_mode<synchronous>, transform_indices = @transform_1, window_bounds = array<i64: 16, 1>}, {transform_indices = @transform_2, window_bounds = array<i64: 512, 128>}, {transform_indices = @transform_3, window_bounds = array<i64: 16, 128>}]} {
    %c0_i32 = arith.constant 0 : i32
    %0 = arith.cmpi eq, %arg1, %c0_i32 : i32
    %1 = arith.extui %0 : i1 to i32
    %c0_i32_0 = arith.constant 0 : i32
    %2 = arith.cmpi ne, %1, %c0_i32_0 : i32
    scf.if %2 {
      %cst_10 = arith.constant 0.000000e+00 : f32
      %12 = vector.broadcast %cst_10 : f32 to vector<16x128xf32>
      %c0_11 = arith.constant 0 : index
      %c0_12 = arith.constant 0 : index
      %13 = vector.load %arg6[%c0_11, %c0_12] : memref<16x128xf32, #tpu.memory_space<vmem>>, vector<16x128xf32>
      tpu.vector_store %arg6[%c0_11, %c0_12], %12 {strides = array<i32>} : memref<16x128xf32, #tpu.memory_space<vmem>>, vector<16x128xf32>,
    } else {
    }
    %c0 = arith.constant 0 : index
    %c0_1 = arith.constant 0 : index
    %3 = vector.load %arg6[%c0, %c0_1] : memref<16x128xf32, #tpu.memory_space<vmem>>, vector<16x128xf32>
    %c0_2 = arith.constant 0 : index
    %c0_3 = arith.constant 0 : index
    %4 = vector.load %arg2[%c0_2, %c0_3] : memref<16x512xbf16, #tpu.memory_space<vmem>>, vector<16x512xbf16>
    %c0_4 = arith.constant 0 : index
    %c0_5 = arith.constant 0 : index
    %5 = vector.load %arg4[%c0_4, %c0_5] : memref<512x128xbf16, #tpu.memory_space<vmem>>, vector<512x128xbf16>
    %cst = arith.constant dense<0.000000e+00> : vector<16x128xf32>
    %6 = tpu.matmul %4, %5, %cst {dimension_numbers = #tpu.dot_dimension_numbers<[1], [0], [0], [1], [0, 0, 1, 1], [], []>} : vector<16x512xbf16>, vector<512x128xbf16>, vector<16x128xf32> -> vector<16x128xf32>
    %7 = arith.addf %3, %6 : vector<16x128xf32>
    %c0_6 = arith.constant 0 : index
    %c0_7 = arith.constant 0 : index
    %8 = vector.load %arg6[%c0_6, %c0_7] : memref<16x128xf32, #tpu.memory_space<vmem>>, vector<16x128xf32>
    tpu.vector_store %arg6[%c0_6, %c0_7], %7 {strides = array<i32>} : memref<16x128xf32, #tpu.memory_space<vmem>>, vector<16x128xf32>,
    %c0_i32_8 = arith.constant 0 : i32
    %9 = arith.cmpi eq, %arg1, %c0_i32_8 : i32
    %10 = arith.extui %9 : i1 to i32
    %c0_i32_9 = arith.constant 0 : i32
    %11 = arith.cmpi ne, %10, %c0_i32_9 : i32
    scf.if %11 {
      %c0_10 = arith.constant 0 : index
      %c0_11 = arith.constant 0 : index
      %12 = vector.load %arg6[%c0_10, %c0_11] : memref<16x128xf32, #tpu.memory_space<vmem>>, vector<16x128xf32>
      %c0_12 = arith.constant 0 : index
      %c0_13 = arith.constant 0 : index
      %13 = vector.load %arg3[%c0_12, %c0_13] : memref<16x1xf32, #tpu.memory_space<vmem>>, vector<16x1xf32>
      %14 = vector.broadcast %13 : vector<16x1xf32> to vector<16x128xf32>
      %15 = arith.addf %12, %14 : vector<16x128xf32>
      %c0_14 = arith.constant 0 : index
      %c0_15 = arith.constant 0 : index
      %16 = vector.load %arg5[%c0_14, %c0_15] : memref<16x128xf32, #tpu.memory_space<vmem>>, vector<16x128xf32>
      tpu.vector_store %arg5[%c0_14, %c0_15], %15 {strides = array<i32>} : memref<16x128xf32, #tpu.memory_space<vmem>>, vector<16x128xf32>,
    } else {
    }
    return
  }
  func.func @transform_0(%arg0: i32, %arg1: i32) -> (i32, i32) {
    %c0_i32 = arith.constant 0 : i32
    %c0_i32_0 = arith.constant 0 : i32
    return %c0_i32, %arg1 : i32, i32
  }
  func.func @transform_1(%arg0: i32, %arg1: i32) -> (i32, i32) {
    %c0_i32 = arith.constant 0 : i32
    %c0_i32_0 = arith.constant 0 : i32
    %c0_i32_1 = arith.constant 0 : i32
    return %c0_i32, %c0_i32_0 : i32, i32
  }
  func.func @transform_2(%arg0: i32, %arg1: i32) -> (i32, i32) {
    %c0_i32 = arith.constant 0 : i32
    return %arg1, %arg0 : i32, i32
  }
  func.func @transform_3(%arg0: i32, %arg1: i32) -> (i32, i32) {
    %c0_i32 = arith.constant 0 : i32
    %c0_i32_0 = arith.constant 0 : i32
    return %c0_i32, %arg0 : i32, i32
  }
}

module attributes {stable_mosaic.version = 11 : i64} {
  func.func @_conv_matmul_kernel(%arg0: i32, %arg1: i32, %arg2: memref<64x384xbf16, #tpu.memory_space<vmem>>, %arg3: memref<64x1xf32, #tpu.memory_space<vmem>>, %arg4: memref<384x128xbf16, #tpu.memory_space<vmem>>, %arg5: memref<64x128xbf16, #tpu.memory_space<vmem>>, %arg6: memref<64x128xf32, #tpu.memory_space<vmem>>) attributes {dimension_semantics = [#tpu.dimension_semantics<parallel>, #tpu.dimension_semantics<arbitrary>], iteration_bounds = array<i64: 1, 1>, scalar_prefetch = 0 : i64, scratch_operands = 1 : i64, tpu.core_type = #tpu.core_type<tc>, window_params = [{transform_indices = @transform_0, window_bounds = array<i64: 64, 384>}, {pipeline_mode = #tpu.pipeline_mode<synchronous>, transform_indices = @transform_1, window_bounds = array<i64: 64, 1>}, {transform_indices = @transform_2, window_bounds = array<i64: 384, 128>}, {transform_indices = @transform_3, window_bounds = array<i64: 64, 128>}]} {
    %c0_i32 = arith.constant 0 : i32
    %0 = arith.cmpi eq, %arg1, %c0_i32 : i32
    %1 = arith.extui %0 : i1 to i32
    %c0_i32_0 = arith.constant 0 : i32
    %2 = arith.cmpi ne, %1, %c0_i32_0 : i32
    scf.if %2 {
      %cst_10 = arith.constant 0.000000e+00 : f32
      %12 = vector.broadcast %cst_10 : f32 to vector<64x128xf32>
      %c0_11 = arith.constant 0 : index
      %c0_12 = arith.constant 0 : index
      %13 = vector.load %arg6[%c0_11, %c0_12] : memref<64x128xf32, #tpu.memory_space<vmem>>, vector<64x128xf32>
      tpu.vector_store %arg6[%c0_11, %c0_12], %12 {strides = array<i32>} : memref<64x128xf32, #tpu.memory_space<vmem>>, vector<64x128xf32>,
    } else {
    }
    %c0 = arith.constant 0 : index
    %c0_1 = arith.constant 0 : index
    %3 = vector.load %arg6[%c0, %c0_1] : memref<64x128xf32, #tpu.memory_space<vmem>>, vector<64x128xf32>
    %c0_2 = arith.constant 0 : index
    %c0_3 = arith.constant 0 : index
    %4 = vector.load %arg2[%c0_2, %c0_3] : memref<64x384xbf16, #tpu.memory_space<vmem>>, vector<64x384xbf16>
    %c0_4 = arith.constant 0 : index
    %c0_5 = arith.constant 0 : index
    %5 = vector.load %arg4[%c0_4, %c0_5] : memref<384x128xbf16, #tpu.memory_space<vmem>>, vector<384x128xbf16>
    %cst = arith.constant dense<0.000000e+00> : vector<64x128xf32>
    %6 = tpu.matmul %4, %5, %cst {dimension_numbers = #tpu.dot_dimension_numbers<[1], [0], [0], [1], [0, 0, 1, 1], [], []>} : vector<64x384xbf16>, vector<384x128xbf16>, vector<64x128xf32> -> vector<64x128xf32>
    %7 = arith.addf %3, %6 : vector<64x128xf32>
    %c0_6 = arith.constant 0 : index
    %c0_7 = arith.constant 0 : index
    %8 = vector.load %arg6[%c0_6, %c0_7] : memref<64x128xf32, #tpu.memory_space<vmem>>, vector<64x128xf32>
    tpu.vector_store %arg6[%c0_6, %c0_7], %7 {strides = array<i32>} : memref<64x128xf32, #tpu.memory_space<vmem>>, vector<64x128xf32>,
    %c0_i32_8 = arith.constant 0 : i32
    %9 = arith.cmpi eq, %arg1, %c0_i32_8 : i32
    %10 = arith.extui %9 : i1 to i32
    %c0_i32_9 = arith.constant 0 : i32
    %11 = arith.cmpi ne, %10, %c0_i32_9 : i32
    scf.if %11 {
      %c0_10 = arith.constant 0 : index
      %c0_11 = arith.constant 0 : index
      %12 = vector.load %arg6[%c0_10, %c0_11] : memref<64x128xf32, #tpu.memory_space<vmem>>, vector<64x128xf32>
      %c0_12 = arith.constant 0 : index
      %c0_13 = arith.constant 0 : index
      %13 = vector.load %arg3[%c0_12, %c0_13] : memref<64x1xf32, #tpu.memory_space<vmem>>, vector<64x1xf32>
      %14 = vector.broadcast %13 : vector<64x1xf32> to vector<64x128xf32>
      %15 = arith.addf %12, %14 : vector<64x128xf32>
      %cst_14 = arith.constant 0.000000e+00 : f32
      %16 = vector.broadcast %cst_14 : f32 to vector<64x128xf32>
      %17 = arith.cmpf ogt, %15, %16 : vector<64x128xf32>
      %cst_15 = arith.constant 2.000000e-01 : f32
      %18 = vector.broadcast %cst_15 : f32 to vector<64x128xf32>
      %19 = arith.mulf %18, %15 : vector<64x128xf32>
      %20 = arith.select %17, %15, %19 : vector<64x128xi1>, vector<64x128xf32>
      %21 = arith.truncf %20 : vector<64x128xf32> to vector<64x128xbf16>
      %c0_16 = arith.constant 0 : index
      %c0_17 = arith.constant 0 : index
      %22 = vector.load %arg5[%c0_16, %c0_17] : memref<64x128xbf16, #tpu.memory_space<vmem>>, vector<64x128xbf16>
      tpu.vector_store %arg5[%c0_16, %c0_17], %21 {strides = array<i32>} : memref<64x128xbf16, #tpu.memory_space<vmem>>, vector<64x128xbf16>,
    } else {
    }
    return
  }
  func.func @transform_0(%arg0: i32, %arg1: i32) -> (i32, i32) {
    %c0_i32 = arith.constant 0 : i32
    %c0_i32_0 = arith.constant 0 : i32
    return %c0_i32, %arg1 : i32, i32
  }
  func.func @transform_1(%arg0: i32, %arg1: i32) -> (i32, i32) {
    %c0_i32 = arith.constant 0 : i32
    %c0_i32_0 = arith.constant 0 : i32
    %c0_i32_1 = arith.constant 0 : i32
    return %c0_i32, %c0_i32_0 : i32, i32
  }
  func.func @transform_2(%arg0: i32, %arg1: i32) -> (i32, i32) {
    %c0_i32 = arith.constant 0 : i32
    return %arg1, %arg0 : i32, i32
  }
  func.func @transform_3(%arg0: i32, %arg1: i32) -> (i32, i32) {
    %c0_i32 = arith.constant 0 : i32
    %c0_i32_0 = arith.constant 0 : i32
    return %c0_i32, %arg0 : i32, i32
  }
}

module attributes {stable_mosaic.version = 11 : i64} {
  func.func @_conv_matmul_kernel(%arg0: i32, %arg1: i32, %arg2: memref<16x128xbf16, #tpu.memory_space<vmem>>, %arg3: memref<16x1xf32, #tpu.memory_space<vmem>>, %arg4: memref<128x256xbf16, #tpu.memory_space<vmem>>, %arg5: memref<16x256xf32, #tpu.memory_space<vmem>>, %arg6: memref<16x256xf32, #tpu.memory_space<vmem>>) attributes {dimension_semantics = [#tpu.dimension_semantics<parallel>, #tpu.dimension_semantics<arbitrary>], iteration_bounds = array<i64: 2, 1>, scalar_prefetch = 0 : i64, scratch_operands = 1 : i64, tpu.core_type = #tpu.core_type<tc>, window_params = [{transform_indices = @transform_0, window_bounds = array<i64: 16, 128>}, {pipeline_mode = #tpu.pipeline_mode<synchronous>, transform_indices = @transform_1, window_bounds = array<i64: 16, 1>}, {transform_indices = @transform_2, window_bounds = array<i64: 128, 256>}, {transform_indices = @transform_3, window_bounds = array<i64: 16, 256>}]} {
    %c0_i32 = arith.constant 0 : i32
    %0 = arith.cmpi eq, %arg1, %c0_i32 : i32
    %1 = arith.extui %0 : i1 to i32
    %c0_i32_0 = arith.constant 0 : i32
    %2 = arith.cmpi ne, %1, %c0_i32_0 : i32
    scf.if %2 {
      %cst_10 = arith.constant 0.000000e+00 : f32
      %12 = vector.broadcast %cst_10 : f32 to vector<16x256xf32>
      %c0_11 = arith.constant 0 : index
      %c0_12 = arith.constant 0 : index
      %13 = vector.load %arg6[%c0_11, %c0_12] : memref<16x256xf32, #tpu.memory_space<vmem>>, vector<16x256xf32>
      tpu.vector_store %arg6[%c0_11, %c0_12], %12 {strides = array<i32>} : memref<16x256xf32, #tpu.memory_space<vmem>>, vector<16x256xf32>,
    } else {
    }
    %c0 = arith.constant 0 : index
    %c0_1 = arith.constant 0 : index
    %3 = vector.load %arg6[%c0, %c0_1] : memref<16x256xf32, #tpu.memory_space<vmem>>, vector<16x256xf32>
    %c0_2 = arith.constant 0 : index
    %c0_3 = arith.constant 0 : index
    %4 = vector.load %arg2[%c0_2, %c0_3] : memref<16x128xbf16, #tpu.memory_space<vmem>>, vector<16x128xbf16>
    %c0_4 = arith.constant 0 : index
    %c0_5 = arith.constant 0 : index
    %5 = vector.load %arg4[%c0_4, %c0_5] : memref<128x256xbf16, #tpu.memory_space<vmem>>, vector<128x256xbf16>
    %cst = arith.constant dense<0.000000e+00> : vector<16x256xf32>
    %6 = tpu.matmul %4, %5, %cst {dimension_numbers = #tpu.dot_dimension_numbers<[1], [0], [0], [1], [0, 0, 1, 1], [], []>} : vector<16x128xbf16>, vector<128x256xbf16>, vector<16x256xf32> -> vector<16x256xf32>
    %7 = arith.addf %3, %6 : vector<16x256xf32>
    %c0_6 = arith.constant 0 : index
    %c0_7 = arith.constant 0 : index
    %8 = vector.load %arg6[%c0_6, %c0_7] : memref<16x256xf32, #tpu.memory_space<vmem>>, vector<16x256xf32>
    tpu.vector_store %arg6[%c0_6, %c0_7], %7 {strides = array<i32>} : memref<16x256xf32, #tpu.memory_space<vmem>>, vector<16x256xf32>,
    %c0_i32_8 = arith.constant 0 : i32
    %9 = arith.cmpi eq, %arg1, %c0_i32_8 : i32
    %10 = arith.extui %9 : i1 to i32
    %c0_i32_9 = arith.constant 0 : i32
    %11 = arith.cmpi ne, %10, %c0_i32_9 : i32
    scf.if %11 {
      %c0_10 = arith.constant 0 : index
      %c0_11 = arith.constant 0 : index
      %12 = vector.load %arg6[%c0_10, %c0_11] : memref<16x256xf32, #tpu.memory_space<vmem>>, vector<16x256xf32>
      %c0_12 = arith.constant 0 : index
      %c0_13 = arith.constant 0 : index
      %13 = vector.load %arg3[%c0_12, %c0_13] : memref<16x1xf32, #tpu.memory_space<vmem>>, vector<16x1xf32>
      %14 = vector.broadcast %13 : vector<16x1xf32> to vector<16x256xf32>
      %15 = arith.addf %12, %14 : vector<16x256xf32>
      %16 = math.tanh %15 : vector<16x256xf32>
      %c0_14 = arith.constant 0 : index
      %c0_15 = arith.constant 0 : index
      %17 = vector.load %arg5[%c0_14, %c0_15] : memref<16x256xf32, #tpu.memory_space<vmem>>, vector<16x256xf32>
      tpu.vector_store %arg5[%c0_14, %c0_15], %16 {strides = array<i32>} : memref<16x256xf32, #tpu.memory_space<vmem>>, vector<16x256xf32>,
    } else {
    }
    return
  }
  func.func @transform_0(%arg0: i32, %arg1: i32) -> (i32, i32) {
    %c0_i32 = arith.constant 0 : i32
    %c0_i32_0 = arith.constant 0 : i32
    return %c0_i32, %arg1 : i32, i32
  }
  func.func @transform_1(%arg0: i32, %arg1: i32) -> (i32, i32) {
    %c0_i32 = arith.constant 0 : i32
    %c0_i32_0 = arith.constant 0 : i32
    %c0_i32_1 = arith.constant 0 : i32
    return %c0_i32, %c0_i32_0 : i32, i32
  }
  func.func @transform_2(%arg0: i32, %arg1: i32) -> (i32, i32) {
    %c0_i32 = arith.constant 0 : i32
    return %arg1, %arg0 : i32, i32
  }
  func.func @transform_3(%arg0: i32, %arg1: i32) -> (i32, i32) {
    %c0_i32 = arith.constant 0 : i32
    %c0_i32_0 = arith.constant 0 : i32
    return %c0_i32, %arg0 : i32, i32
  }
}

module attributes {stable_mosaic.version = 11 : i64} {
  func.func @_score_kernel(%arg0: i32, %arg1: memref<16x128xf32, #tpu.memory_space<vmem>>, %arg2: memref<16x128xf32, #tpu.memory_space<vmem>>, %arg3: memref<1x128xf32, #tpu.memory_space<vmem>>) attributes {dimension_semantics = [#tpu.dimension_semantics<arbitrary>], iteration_bounds = array<i64: 1>, scalar_prefetch = 0 : i64, scratch_operands = 0 : i64, tpu.core_type = #tpu.core_type<tc>, window_params = [{pipeline_mode = #tpu.pipeline_mode<synchronous>, transform_indices = @transform_0, window_bounds = array<i64: 16, 128>}, {pipeline_mode = #tpu.pipeline_mode<synchronous>, transform_indices = @transform_1, window_bounds = array<i64: 16, 128>}, {pipeline_mode = #tpu.pipeline_mode<synchronous>, transform_indices = @transform_2, window_bounds = array<i64: 1, 128>}]} {
    %c0 = arith.constant 0 : index
    %c0_0 = arith.constant 0 : index
    %0 = vector.load %arg1[%c0, %c0_0] : memref<16x128xf32, #tpu.memory_space<vmem>>, vector<16x128xf32>
    %c0_1 = arith.constant 0 : index
    %c0_2 = arith.constant 0 : index
    %1 = vector.load %arg2[%c0_1, %c0_2] : memref<16x128xf32, #tpu.memory_space<vmem>>, vector<16x128xf32>
    %2 = arith.subf %0, %1 : vector<16x128xf32>
    %3 = arith.mulf %2, %2 : vector<16x128xf32>
    %cst = arith.constant dense<0.000000e+00> : vector<128xf32>
    %4 = vector.multi_reduction <add>, %3, %cst [0] : vector<16x128xf32> to vector<128xf32>
    %5 = vector.shape_cast %4 : vector<128xf32> to vector<1x128xf32>
    %cst_3 = arith.constant 6.250000e-02 : f32
    %6 = vector.broadcast %cst_3 : f32 to vector<1x128xf32>
    %7 = arith.mulf %5, %6 : vector<1x128xf32>
    %c0_4 = arith.constant 0 : index
    %c0_5 = arith.constant 0 : index
    %8 = vector.load %arg3[%c0_4, %c0_5] : memref<1x128xf32, #tpu.memory_space<vmem>>, vector<1x128xf32>
    tpu.vector_store %arg3[%c0_4, %c0_5], %7 {strides = array<i32>} : memref<1x128xf32, #tpu.memory_space<vmem>>, vector<1x128xf32>,
    return
  }
  func.func @transform_0(%arg0: i32) -> (i32, i32) {
    %c0_i32 = arith.constant 0 : i32
    %c0_i32_0 = arith.constant 0 : i32
    %c0_i32_1 = arith.constant 0 : i32
    return %c0_i32, %c0_i32_0 : i32, i32
  }
  func.func @transform_1(%arg0: i32) -> (i32, i32) {
    %c0_i32 = arith.constant 0 : i32
    %c0_i32_0 = arith.constant 0 : i32
    %c0_i32_1 = arith.constant 0 : i32
    return %c0_i32, %c0_i32_0 : i32, i32
  }
  func.func @transform_2(%arg0: i32) -> (i32, i32) {
    %c0_i32 = arith.constant 0 : i32
    %c0_i32_0 = arith.constant 0 : i32
    %c0_i32_1 = arith.constant 0 : i32
    return %c0_i32, %c0_i32_0 : i32, i32
  }
}

</mosaic_0001>

<llo_original>
// kernel: _lambda_.13
$region0: #{_lambda_.13}
  #allocation0 [shape = 'u32[]', space=smem, size = 0x4, offset = 0x4, fixed_abs, tag = 'smem constant byte address 0x4 - core index']
  #allocation1 [shape = 'u32[72,128]{1,0:T(1,128)}', space=vmem, size = 0x9000, scoped, tag = 'internal scratch']
  #allocation2 [shape = 'f32[16,256]{1,0:T(8,128)}', space=vmem, size = 0x4000, scoped, tag = 'scratch operand']
  %s0 = inlined_call_operand.vmem [shape: bf16[16,128], index: 0, kind: input, shape index: {}]
  %s1 = inlined_call_operand.vmem [shape: f32[16,1], index: 1, kind: input, shape index: {}]
  %s2 = inlined_call_operand.vmem [shape: bf16[128,768], index: 2, kind: input, shape index: {}]
  %s3 = inlined_call_operand.vmem [shape: bf16[16,768], index: 3, kind: output, shape index: {}]
  %s4 = sld [smem:[#allocation0]]
  $region125: #{_lambda_.13} parent=0
    _
  %s6 = ssub.s32 1, %s4
  %s7 = scalar_select 0, %s6, %s4
  $region1: #{_lambda_.13} parent=0
    #allocation3 [shape = 'u8[131072]{0}', space=vmem, size = 0x20000, scoped, tag = 'input window, operand 2']
    #allocation4 [shape = 'u8[16384]{0}', space=vmem, size = 0x4000, scoped, tag = 'output window, operand 0']
    loop: start=0, step=1, limit=5
    $region2: #{_lambda_.13} parent=1 // loop_pre_header
      _
    $region3: #{_lambda_.13} parent=1 // loop_header
      %s9 = sphi 0, %s13
      %p10 = scmp.ge.s32.totalorder %s9, 5
      %s16 = sphi 0, %s28
      %s17 = sphi 0, %s24
      %s18 = sphi 0, %s16
      %s19 = sphi 0, %s17
      %s20 = sphi 0, %s18
      %s21 = sphi 0, %s19
      %s31 = sphi 0, %s33
      %s34 = sphi 0, %s31
      %s35 = sphi 0, %s34
      %s51 = sphi 0, %s35
      %s55 = sphi 0, %s55
      %s57 = sphi 0, %s55
      %s58 = sphi 0, %s57
      %s72 = sphi 0, %s58
      %s80 = sphi 0, %s82
      %s83 = sphi 0, %s80
      %s84 = sphi 0, %s83
      %s100 = sphi 0, %s84
      %s106 = sphi 0, %s108
      %s109 = sphi 0, %s106
      %s110 = sphi 0, %s109
      %s126 = sphi 0, %s110
    $region4: #{_lambda_.13} parent=1 // loop_header_branch
      %12 = sbr.rel (%p10) target = $region8
    $region5: #{_lambda_.13} parent=1 // loop_body
      %s14 = ssub.s32 %s9, 1
      %s15 = ssub.s32 %s9, 2
      %s22 = sadd.s32 1, %s17
      %p23 = scmp.ge.s32.totalorder %s22, 1
      %s24 = scalar_select %p23, 0, %s22
      %s25 = sadd.s32 1, %s16
      %s26 = scalar_select %p23, %s25, %s16
      %p27 = scmp.ge.s32.totalorder %s26, 3
      %s28 = scalar_select %p27, 0, %s26
      %s29 = ssub.s32 %s17, %s24
      %p30 = scmp.eq.s32.totalorder %s29, 0
      %s32 = sadd.s32 %s31, 1
      %s33 = scalar_select %p30, %s31, %s32
      %p36 = pneg %p30
      %p37 = scmp.eq.s32.totalorder %s9, 2
      %p38 = por %p36, %p37
      %p39 = scmp.ne.s32.totalorder %s31, %s34
      %p40 = scmp.eq.s32.totalorder %s9, 0
      %p41 = por %p39, %p40
      %p42 = scmp.ne.s32.totalorder %s31, %s34
      %p43 = scmp.eq.s32.totalorder %s14, 2
      %p44 = por %p42, %p43
      %p45 = scmp.ne.s32.totalorder %s34, %s35
      %p46 = scmp.eq.s32.totalorder %s14, 0
      %p47 = por %p45, %p46
      %p48 = scmp.ne.s32.totalorder %s34, %s35
      %p49 = scmp.eq.s32.totalorder %s15, 2
      %p50 = por %p48, %p49
      %p52 = scmp.ne.s32.totalorder %s35, %s51
      %p53 = scmp.eq.s32.totalorder %s15, 0
      %p54 = por %p52, %p53
      %s56 = sadd.s32 %s55, 1
      %p59 = scmp.eq.s32.totalorder %s9, 2
      %p60 = scmp.ne.s32.totalorder %s55, %s57
      %p61 = scmp.eq.s32.totalorder %s9, 0
      %p62 = por %p60, %p61
      %p63 = scmp.ne.s32.totalorder %s55, %s57
      %p64 = scmp.eq.s32.totalorder %s14, 2
      %p65 = por %p63, %p64
      %p66 = scmp.ne.s32.totalorder %s57, %s58
      %p67 = scmp.eq.s32.totalorder %s14, 0
      %p68 = por %p66, %p67
      %p69 = scmp.ne.s32.totalorder %s57, %s58
      %p70 = scmp.eq.s32.totalorder %s15, 2
      %p71 = por %p69, %p70
      %p73 = scmp.ne.s32.totalorder %s58, %s72
      %p74 = scmp.eq.s32.totalorder %s15, 0
      %p75 = por %p73, %p74
      %s76 = ssub.s32 %s17, %s24
      %s77 = ssub.s32 %s16, %s28
      %s78 = sor.u32 %s76, %s77
      %p79 = scmp.eq.s32.totalorder %s78, 0
      %s81 = sadd.s32 %s80, 1
      %s82 = scalar_select %p79, %s80, %s81
      %p85 = pneg %p79
      %p86 = scmp.eq.s32.totalorder %s9, 2
      %p87 = por %p85, %p86
      %p88 = scmp.ne.s32.totalorder %s80, %s83
      %p89 = scmp.eq.s32.totalorder %s9, 0
      %p90 = por %p88, %p89
      %p91 = scmp.ne.s32.totalorder %s80, %s83
      %p92 = scmp.eq.s32.totalorder %s14, 2
      %p93 = por %p91, %p92
      %p94 = scmp.ne.s32.totalorder %s83, %s84
      %p95 = scmp.eq.s32.totalorder %s14, 0
      %p96 = por %p94, %p95
      %p97 = scmp.ne.s32.totalorder %s83, %s84
      %p98 = scmp.eq.s32.totalorder %s15, 2
      %p99 = por %p97, %p98
      %p101 = scmp.ne.s32.totalorder %s84, %s100
      %p102 = scmp.eq.s32.totalorder %s15, 0
      %p103 = por %p101, %p102
      %s104 = ssub.s32 %s16, %s28
      %p105 = scmp.eq.s32.totalorder %s104, 0
      %s107 = sadd.s32 %s106, 1
      %s108 = scalar_select %p105, %s106, %s107
      %p111 = pneg %p105
      %p112 = scmp.eq.s32.totalorder %s9, 2
      %p113 = por %p111, %p112
      %p114 = scmp.ne.s32.totalorder %s106, %s109
      %p115 = scmp.eq.s32.totalorder %s9, 0
      %p116 = por %p114, %p115
      %p117 = scmp.ne.s32.totalorder %s106, %s109
      %p118 = scmp.eq.s32.totalorder %s14, 2
      %p119 = por %p117, %p118
      %p120 = scmp.ne.s32.totalorder %s109, %s110
      %p121 = scmp.eq.s32.totalorder %s14, 0
      %p122 = por %p120, %p121
      %p123 = scmp.ne.s32.totalorder %s109, %s110
      %p124 = scmp.eq.s32.totalorder %s15, 2
      %p125 = por %p123, %p124
      %p127 = scmp.ne.s32.totalorder %s110, %s126
      %p128 = scmp.eq.s32.totalorder %s15, 0
      %p129 = por %p127, %p128
      %p130 = scmp.le.s32.totalorder 1, %s9
      %p131 = scmp.lt.s32.totalorder %s9, 4
      %p132 = pnand %p130, %p131
      %p133 = pneg %p132
      // Predicated region
      $region9: #{_lambda_.13} parent=5 // pred_check
        _
      $region10: #{_lambda_.13} parent=5 // pred_check_branch
        %135 = sbr.rel (%p132) target = $region12
      $region11: #{_lambda_.13} parent=5 // pred_region
        %s136 = ssub.s32 %s9, 1
        // Predicated region
        $region13: #{_lambda_.13} parent=11 // pred_check
          %p137 = pneg %p47
        $region14: #{_lambda_.13} parent=11 // pred_check_branch
          %139 = sbr.rel (%p137) target = $region16
        $region15: #{_lambda_.13} parent=11 // pred_region
          %p140 = scmp.lt.s32.totalorder %s19, 0
          %s141 = scalar_select %p140, %s19, 0
          %s142 = smul.addr %s141, 4
          %s143 = scalar_lea.vmem %s0, %s142
        $region16: #{_lambda_.13} parent=11 // pred_fallthru
          _
        // Predicated region
        $region17: #{_lambda_.13} parent=11 // pred_check
          %p144 = pneg %p68
        $region18: #{_lambda_.13} parent=11 // pred_check_branch
          %146 = sbr.rel (%p144) target = $region20
        $region19: #{_lambda_.13} parent=11 // pred_region
          _
        $region20: #{_lambda_.13} parent=11 // pred_fallthru
          _
      $region12: #{_lambda_.13} parent=5 // pred_fallthru
        _
      %p147 = scmp.lt.s32.totalorder %s9, 3
      // Predicated region
      $region21: #{_lambda_.13} parent=5 // pred_check
        %p148 = pneg %p147
      $region22: #{_lambda_.13} parent=5 // pred_check_branch
        %150 = sbr.rel (%p148) target = $region24
      $region23: #{_lambda_.13} parent=5 // pred_region
        // Predicated region
        $region25: #{_lambda_.13} parent=23 // pred_check
          %p151 = pneg %p90
        $region26: #{_lambda_.13} parent=23 // pred_check_branch
          %153 = sbr.rel (%p151) target = $region28
        $region27: #{_lambda_.13} parent=23 // pred_region
          %s154 = sand.u32 %s80, 1
          %s155 = sand.u32 %s80, 1
          %s156 = smul.addr %s155, 128
          %s157 = scalar_lea.vmem [#allocation3], %s156
          %s158 = smul.u32 16, %s17
          %s159 = smul.u32 2, %s16
          %s160 = smul.addr %s158, 6
          %s161 = sadd.s32 %s159, %s160
          %s162 = smul.addr %s161, 4
          %s163 = scalar_lea.vmem %s2, %s162
          // Predicated region
          $region29: #{_lambda_.13} parent=27 // pred_check
            _
          $region30: #{_lambda_.13} parent=27 // pred_check_branch
            %165 = sbr.rel (0) target = $region32
          $region31: #{_lambda_.13} parent=27 // pred_region
            // Predicated region
            $region33: #{_lambda_.13} parent=31 // pred_check
              _
            $region34: #{_lambda_.13} parent=31 // pred_check_branch
              %167 = sbr.rel (0) target = $region36
            $region35: #{_lambda_.13} parent=31 // pred_region
              // Predicated region
              $region48: #{_lambda_.13} parent=35 // pred_check
                _
              $region49: #{_lambda_.13} parent=35 // pred_check_branch
                %213 = sbr.rel (0) target = $region51
              $region50: #{_lambda_.13} parent=35 // pred_region
                loop: start=0, step=1, limit=1
                $region52: #{_lambda_.13} parent=50 // loop_pre_header
                  _
                $region53: #{_lambda_.13} parent=50 // loop_header
                  %s215 = sphi 0, %s219
                  %p216 = scmp.ge.s32.totalorder %s215, 1
                  %s220 = sphi %s163, %s163
                  %s221 = sphi %s157, %s157
                $region54: #{_lambda_.13} parent=50 // loop_header_branch
                  %218 = sbr.rel (%p216) target = $region58
                $region55: #{_lambda_.13} parent=50 // loop_body
                  %v222 = vld [vmem:[%s220] sm:$0xff]
                  %223 = vst [vmem:[%s221] sm:$0xff] %v222
                  %v224 = vld [vmem:[%s220 + $0x18] sm:$0xff]
                  %225 = vst [vmem:[%s221 + $0x8] sm:$0xff] %v224
                  %v226 = vld [vmem:[%s220 + $0x30] sm:$0xff]
                  %227 = vst [vmem:[%s221 + $0x10] sm:$0xff] %v226
                  %v228 = vld [vmem:[%s220 + $0x48] sm:$0xff]
                  %229 = vst [vmem:[%s221 + $0x18] sm:$0xff] %v228
                  %v230 = vld [vmem:[%s220 + $0x60] sm:$0xff]
                  %231 = vst [vmem:[%s221 + $0x20] sm:$0xff] %v230
                  %v232 = vld [vmem:[%s220 + $0x78] sm:$0xff]
                  %233 = vst [vmem:[%s221 + $0x28] sm:$0xff] %v232
                  %v234 = vld [vmem:[%s220 + $0x90] sm:$0xff]
                  %235 = vst [vmem:[%s221 + $0x30] sm:$0xff] %v234
                  %v236 = vld [vmem:[%s220 + $0xa8] sm:$0xff]
                  %237 = vst [vmem:[%s221 + $0x38] sm:$0xff] %v236
                  %v238 = vld [vmem:[%s220 + $0xc0] sm:$0xff]
                  %239 = vst [vmem:[%s221 + $0x40] sm:$0xff] %v238
                  %v240 = vld [vmem:[%s220 + $0xd8] sm:$0xff]
                  %241 = vst [vmem:[%s221 + $0x48] sm:$0xff] %v240
                  %v242 = vld [vmem:[%s220 + $0xf0] sm:$0xff]
                  %243 = vst [vmem:[%s221 + $0x50] sm:$0xff] %v242
                  %v244 = vld [vmem:[%s220 + $0x108] sm:$0xff]
                  %245 = vst [vmem:[%s221 + $0x58] sm:$0xff] %v244
                  %v246 = vld [vmem:[%s220 + $0x120] sm:$0xff]
                  %247 = vst [vmem:[%s221 + $0x60] sm:$0xff] %v246
                  %v248 = vld [vmem:[%s220 + $0x138] sm:$0xff]
                  %249 = vst [vmem:[%s221 + $0x68] sm:$0xff] %v248
                  %v250 = vld [vmem:[%s220 + $0x150] sm:$0xff]
                  %251 = vst [vmem:[%s221 + $0x70] sm:$0xff] %v250
                  %v252 = vld [vmem:[%s220 + $0x168] sm:$0xff]
                  %253 = vst [vmem:[%s221 + $0x78] sm:$0xff] %v252
                $region56: #{_lambda_.13} parent=50 // loop_footer
                  %s219 = sadd.s32 1, %s215
                $region57: #{_lambda_.13} parent=50 // loop_footer_branch
                  %214 = sbr.rel target = $region53
                $region58: #{_lambda_.13} parent=50 // loop_exit
                  _
              $region51: #{_lambda_.13} parent=35 // pred_fallthru
                _
              // Predicated region
              $region59: #{_lambda_.13} parent=35 // pred_check
                _
              $region60: #{_lambda_.13} parent=35 // pred_check_branch
                %255 = sbr.rel target = $region62
              $region61: #{_lambda_.13} parent=35 // pred_region
                _
              $region62: #{_lambda_.13} parent=35 // pred_fallthru
                _
            $region36: #{_lambda_.13} parent=31 // pred_fallthru
              _
            // Predicated region
            $region37: #{_lambda_.13} parent=31 // pred_check
              _
            $region38: #{_lambda_.13} parent=31 // pred_check_branch
              %169 = sbr.rel target = $region40
            $region39: #{_lambda_.13} parent=31 // pred_region
              %s171 = ssub.s32 256, 1
              loop: start=0, step=1, limit=1
              $region41: #{_lambda_.13} parent=39 // loop_pre_header
                _
              $region42: #{_lambda_.13} parent=39 // loop_header
                %s173 = sphi 0, %s177
                %p174 = scmp.ge.s32.totalorder %s173, 1
                %s178 = sphi %s163, %s163
                %s179 = sphi %s157, %s157
              $region43: #{_lambda_.13} parent=39 // loop_header_branch
                %176 = sbr.rel (%p174) target = $region47
              $region44: #{_lambda_.13} parent=39 // loop_body
                %v180 = vld [vmem:[%s178] sm:%s171]
                %181 = vst [vmem:[%s179] sm:%s171] %v180
                %v182 = vld [vmem:[%s178 + $0x18] sm:%s171]
                %183 = vst [vmem:[%s179 + $0x8] sm:%s171] %v182
                %v184 = vld [vmem:[%s178 + $0x30] sm:%s171]
                %185 = vst [vmem:[%s179 + $0x10] sm:%s171] %v184
                %v186 = vld [vmem:[%s178 + $0x48] sm:%s171]
                %187 = vst [vmem:[%s179 + $0x18] sm:%s171] %v186
                %v188 = vld [vmem:[%s178 + $0x60] sm:%s171]
                %189 = vst [vmem:[%s179 + $0x20] sm:%s171] %v188
                %v190 = vld [vmem:[%s178 + $0x78] sm:%s171]
                %191 = vst [vmem:[%s179 + $0x28] sm:%s171] %v190
                %v192 = vld [vmem:[%s178 + $0x90] sm:%s171]
                %193 = vst [vmem:[%s179 + $0x30] sm:%s171] %v192
                %v194 = vld [vmem:[%s178 + $0xa8] sm:%s171]
                %195 = vst [vmem:[%s179 + $0x38] sm:%s171] %v194
                %v196 = vld [vmem:[%s178 + $0xc0] sm:%s171]
                %197 = vst [vmem:[%s179 + $0x40] sm:%s171] %v196
                %v198 = vld [vmem:[%s178 + $0xd8] sm:%s171]
                %199 = vst [vmem:[%s179 + $0x48] sm:%s171] %v198
                %v200 = vld [vmem:[%s178 + $0xf0] sm:%s171]
                %201 = vst [vmem:[%s179 + $0x50] sm:%s171] %v200
                %v202 = vld [vmem:[%s178 + $0x108] sm:%s171]
                %203 = vst [vmem:[%s179 + $0x58] sm:%s171] %v202
                %v204 = vld [vmem:[%s178 + $0x120] sm:%s171]
                %205 = vst [vmem:[%s179 + $0x60] sm:%s171] %v204
                %v206 = vld [vmem:[%s178 + $0x138] sm:%s171]
                %207 = vst [vmem:[%s179 + $0x68] sm:%s171] %v206
                %v208 = vld [vmem:[%s178 + $0x150] sm:%s171]
                %209 = vst [vmem:[%s179 + $0x70] sm:%s171] %v208
                %v210 = vld [vmem:[%s178 + $0x168] sm:%s171]
                %211 = vst [vmem:[%s179 + $0x78] sm:%s171] %v210
              $region45: #{_lambda_.13} parent=39 // loop_footer
                %s177 = sadd.s32 1, %s173
              $region46: #{_lambda_.13} parent=39 // loop_footer_branch
                %172 = sbr.rel target = $region42
              $region47: #{_lambda_.13} parent=39 // loop_exit
                _
            $region40: #{_lambda_.13} parent=31 // pred_fallthru
              _
          $region32: #{_lambda_.13} parent=27 // pred_fallthru
            _
          %256 = vnop
        $region28: #{_lambda_.13} parent=23 // pred_fallthru
          _
      $region24: #{_lambda_.13} parent=5 // pred_fallthru
        _
      %p257 = scmp.le.s32.totalorder 1, %s9
      %p258 = scmp.lt.s32.totalorder %s9, 4
      %p259 = pnand %p257, %p258
      %p260 = pneg %p259
      // Predicated region
      $region63: #{_lambda_.13} parent=5 // pred_check
        _
      $region64: #{_lambda_.13} parent=5 // pred_check_branch
        %262 = sbr.rel (%p259) target = $region66
      $region65: #{_lambda_.13} parent=5 // pred_region
        %s263 = ssub.s32 %s9, 1
        %s264 = sand.u32 %s83, 1
        %s265 = sand.u32 %s83, 1
        %s266 = smul.addr %s265, 128
        %s267 = scalar_lea.vmem [#allocation3], %s266
        // Predicated region
        $region67: #{_lambda_.13} parent=65 // pred_check
          %p268 = pneg %p96
        $region68: #{_lambda_.13} parent=65 // pred_check_branch
          %270 = sbr.rel (%p268) target = $region70
        $region69: #{_lambda_.13} parent=65 // pred_region
          _
        $region70: #{_lambda_.13} parent=65 // pred_fallthru
          _
        %p271 = scmp.lt.s32.totalorder %s19, 0
        %s272 = scalar_select %p271, %s19, 0
        %s273 = smul.addr %s272, 4
        %s274 = scalar_lea.vmem %s0, %s273
        %p275 = pneg %p47
        %p276 = pneg %p44
        %p277 = pneg %p68
        %p278 = pneg %p65
        %s279 = sand.u32 %s83, 1
        %s280 = sand.u32 %s83, 1
        %s281 = smul.addr %s280, 128
        %s282 = scalar_lea.vmem [#allocation3], %s281
        %p283 = pneg %p96
        %p284 = pneg %p93
        %p285 = pneg %p122
        %p286 = pneg %p119
        %s287 = sand.u32 %s109, 1
        %s288 = sand.u32 %s109, 1
        %s289 = smul.addr %s288, 16
        %s290 = scalar_lea.vmem [#allocation4], %s289
        %p291 = scmp.lt.s32.totalorder %s19, 0
        %s292 = scalar_select %p291, %s19, 0
        %s293 = smul.addr %s292, 4
        %s294 = scalar_lea.vmem %s0, %s293
        %s295 = smul.u32 16, %s19
        %s296 = smul.u32 2, %s18
        %s297 = smul.u32 2, %s18
        %p298 = scmp.eq.s32.totalorder %s19, 0
        // Predicated region
        $region71: #{_lambda_.13} parent=65 // pred_check
          %p299 = pneg %p298
        $region72: #{_lambda_.13} parent=65 // pred_check_branch
          %301 = sbr.rel (%p299) target = $region74
        $region73: #{_lambda_.13} parent=65 // pred_region
          %302 = vst [vmem:[#allocation2] sm:$0xff] 0.0
          %303 = vst [vmem:[#allocation2 + $0x8] sm:$0xff] 0.0
          %304 = vst [vmem:[#allocation2 + $0x10] sm:$0xff] 0.0
          %305 = vst [vmem:[#allocation2 + $0x18] sm:$0xff] 0.0
        $region74: #{_lambda_.13} parent=65 // pred_fallthru
          _
        %v306 = vld [vmem:[#allocation2] sm:$0xff]
        %v307 = vld [vmem:[#allocation2 + $0x8] sm:$0xff]
        %v308 = vld [vmem:[#allocation2 + $0x10] sm:$0xff]
        %v309 = vld [vmem:[#allocation2 + $0x18] sm:$0xff]
        %v310 = vld [vmem:[%s294] sm:$0xf]
        %v311 = vld [vmem:[%s294 + $0x4] sm:$0xf]
        %v312 = vld [vmem:[%s267] sm:$0xff]
        %v313 = vld [vmem:[%s267 + $0x8] sm:$0xff]
        %v314 = vld [vmem:[%s267 + $0x10] sm:$0xff]
        %v315 = vld [vmem:[%s267 + $0x18] sm:$0xff]
        %v316 = vld [vmem:[%s267 + $0x20] sm:$0xff]
        %v317 = vld [vmem:[%s267 + $0x28] sm:$0xff]
        %v318 = vld [vmem:[%s267 + $0x30] sm:$0xff]
        %v319 = vld [vmem:[%s267 + $0x38] sm:$0xff]
        %v320 = vld [vmem:[%s267 + $0x40] sm:$0xff]
        %v321 = vld [vmem:[%s267 + $0x48] sm:$0xff]
        %v322 = vld [vmem:[%s267 + $0x50] sm:$0xff]
        %v323 = vld [vmem:[%s267 + $0x58] sm:$0xff]
        %v324 = vld [vmem:[%s267 + $0x60] sm:$0xff]
        %v325 = vld [vmem:[%s267 + $0x68] sm:$0xff]
        %v326 = vld [vmem:[%s267 + $0x70] sm:$0xff]
        %v327 = vld [vmem:[%s267 + $0x78] sm:$0xff]
        %v330 = vunpack.c.l.b16 %v310
        %v331 = vunpack.c.l.b16 %v311
        %v332 = vpack.c.b16 %v331, %v330
        %v350 = vunpack.c.l.b16 %v312
        %v351 = vunpack.c.h.b16 %v312
        %v352 = vunpack.c.l.b16 %v313
        %v353 = vunpack.c.h.b16 %v313
        %v354 = vunpack.c.l.b16 %v314
        %v355 = vunpack.c.h.b16 %v314
        %v356 = vunpack.c.l.b16 %v315
        %v357 = vunpack.c.h.b16 %v315
        %v358 = vunpack.c.l.b16 %v316
        %v359 = vunpack.c.h.b16 %v316
        %v360 = vunpack.c.l.b16 %v317
        %v361 = vunpack.c.h.b16 %v317
        %v362 = vunpack.c.l.b16 %v318
        %v363 = vunpack.c.h.b16 %v318
        %v364 = vunpack.c.l.b16 %v319
        %v365 = vunpack.c.h.b16 %v319
        %v366 = vunpack.c.l.b16 %v320
        %v367 = vunpack.c.h.b16 %v320
        %v368 = vunpack.c.l.b16 %v321
        %v369 = vunpack.c.h.b16 %v321
        %v370 = vunpack.c.l.b16 %v322
        %v371 = vunpack.c.h.b16 %v322
        %v372 = vunpack.c.l.b16 %v323
        %v373 = vunpack.c.h.b16 %v323
        %v374 = vunpack.c.l.b16 %v324
        %v375 = vunpack.c.h.b16 %v324
        %v376 = vunpack.c.l.b16 %v325
        %v377 = vunpack.c.h.b16 %v325
        %v378 = vunpack.c.l.b16 %v326
        %v379 = vunpack.c.h.b16 %v326
        %v380 = vunpack.c.l.b16 %v327
        %v381 = vunpack.c.h.b16 %v327
        %v382 = vpack.c.b16 %v352, %v350
        %v383 = vpack.c.b16 %v353, %v351
        %v384 = vpack.c.b16 %v356, %v354
        %v385 = vpack.c.b16 %v357, %v355
        %v386 = vpack.c.b16 %v360, %v358
        %v387 = vpack.c.b16 %v361, %v359
        %v388 = vpack.c.b16 %v364, %v362
        %v389 = vpack.c.b16 %v365, %v363
        %v390 = vpack.c.b16 %v368, %v366
        %v391 = vpack.c.b16 %v369, %v367
        %v392 = vpack.c.b16 %v372, %v370
        %v393 = vpack.c.b16 %v373, %v371
        %v394 = vpack.c.b16 %v376, %v374
        %v395 = vpack.c.b16 %v377, %v375
        %v396 = vpack.c.b16 %v380, %v378
        %v397 = vpack.c.b16 %v381, %v379
        %414 = vmatpush.bf16.msra.mxu0 %v396
        %415 = vmatpush.bf16.msra.mxu0 %v394
        %416 = vmatpush.bf16.msra.mxu0 %v392
        %417 = vmatpush.bf16.msra.mxu0 %v390
        %418 = vmatpush.bf16.msra.mxu0 %v388
        %419 = vmatpush.bf16.msra.mxu0 %v386
        %420 = vmatpush.bf16.msra.mxu0 %v384
        %421 = vmatpush.bf16.msra.mxu0 %v382
        %422 = vmatmul.bf16.gmra.mxu0 %v332
        %v423 = vpop.f32.mrf.mxu0
        %v424 = vadd.f32 0.0, %v423
        %v425 = vpop.f32.mrf.mxu0
        %v426 = vadd.f32 0.0, %v425
        %427 = vdwg.mxu0
        %428 = vmatpush.bf16.msra.mxu0 %v397
        %429 = vmatpush.bf16.msra.mxu0 %v395
        %430 = vmatpush.bf16.msra.mxu0 %v393
        %431 = vmatpush.bf16.msra.mxu0 %v391
        %432 = vmatpush.bf16.msra.mxu0 %v389
        %433 = vmatpush.bf16.msra.mxu0 %v387
        %434 = vmatpush.bf16.msra.mxu0 %v385
        %435 = vmatpush.bf16.msra.mxu0 %v383
        %436 = vmatmul.bf16.gmra.mxu0 %v332
        %v437 = vpop.f32.mrf.mxu0
        %v438 = vadd.f32 0.0, %v437
        %v439 = vpop.f32.mrf.mxu0
        %v440 = vadd.f32 0.0, %v439
        %441 = vdwg.mxu0
        %v442 = vadd.f32 %v306, %v424
        %v443 = vadd.f32 %v307, %v438
        %v444 = vadd.f32 %v308, %v426
        %v445 = vadd.f32 %v309, %v440
        %446 = vst [vmem:[#allocation2] sm:$0xff] %v442
        %447 = vst [vmem:[#allocation2 + $0x8] sm:$0xff] %v443
        %448 = vst [vmem:[#allocation2 + $0x10] sm:$0xff] %v444
        %449 = vst [vmem:[#allocation2 + $0x18] sm:$0xff] %v445
        // Predicated region
        $region75: #{_lambda_.13} parent=65 // pred_check
          %p450 = pneg %p298
        $region76: #{_lambda_.13} parent=65 // pred_check_branch
          %452 = sbr.rel (%p450) target = $region78
        $region77: #{_lambda_.13} parent=65 // pred_region
          %v453 = vld [vmem:[#allocation2] sm:$0xff]
          %v454 = vld [vmem:[#allocation2 + $0x8] sm:$0xff]
          %v455 = vld [vmem:[#allocation2 + $0x10] sm:$0xff]
          %v456 = vld [vmem:[#allocation2 + $0x18] sm:$0xff]
          %v457 = vld [vmem:[%s1] sm:$0xff]
          %v458 = vld [vmem:[%s1 + $0x8] sm:$0xff]
          %460 = vset.pattern.permute.xlu0 0
          %461 = vperm.xlu0 %460, %v457
          %v462 = vpop.permute.xlu0 %461
          %465 = vset.pattern.permute.xlu0 0
          %466 = vperm.xlu0 %465, %v458
          %v467 = vpop.permute.xlu0 %466
          %v469 = vadd.f32 %v453, %v462
          %v470 = vadd.f32 %v454, %v462
          %v471 = vadd.f32 %v455, %v467
          %v472 = vadd.f32 %v456, %v467
          %vm473 = vcmp.gt.f32.partialorder %v469, 0.0
          %vm474 = vcmp.gt.f32.partialorder %v470, 0.0
          %vm475 = vcmp.gt.f32.partialorder %v471, 0.0
          %vm476 = vcmp.gt.f32.partialorder %v472, 0.0
          %v477 = vmul.f32 %v469, 0.2
          %v478 = vmul.f32 %v470, 0.2
          %v479 = vmul.f32 %v471, 0.2
          %v480 = vmul.f32 %v472, 0.2
          %v481 = vsel %vm473, %v469, %v477
          %v482 = vsel %vm474, %v470, %v478
          %v483 = vsel %vm475, %v471, %v479
          %v484 = vsel %vm476, %v472, %v480
          %v485 = vpack.c.bf16 %v482, %v481
          %v486 = vpack.c.bf16 %v484, %v483
          %487 = vst [vmem:[%s290] sm:$0xff] %v485
          %488 = vst [vmem:[%s290 + $0x8] sm:$0xff] %v486
        $region78: #{_lambda_.13} parent=65 // pred_fallthru
          _
        %s489 = sand.u32 %s109, 1
        %s490 = sand.u32 %s109, 1
        %s491 = smul.addr %s490, 16
        %s492 = scalar_lea.vmem [#allocation4], %s491
        // Predicated region
        $region79: #{_lambda_.13} parent=65 // pred_check
          %p493 = pneg %p119
        $region80: #{_lambda_.13} parent=65 // pred_check_branch
          %495 = sbr.rel (%p493) target = $region82
        $region81: #{_lambda_.13} parent=65 // pred_region
          %s496 = smul.u32 2, %s18
          %s497 = smul.addr %s496, 4
          %s498 = scalar_lea.vmem %s3, %s497
          // Predicated region
          $region83: #{_lambda_.13} parent=81 // pred_check
            _
          $region84: #{_lambda_.13} parent=81 // pred_check_branch
            %500 = sbr.rel (0) target = $region86
          $region85: #{_lambda_.13} parent=81 // pred_region
            // Predicated region
            $region87: #{_lambda_.13} parent=85 // pred_check
              _
            $region88: #{_lambda_.13} parent=85 // pred_check_branch
              %502 = sbr.rel (0) target = $region90
            $region89: #{_lambda_.13} parent=85 // pred_region
              // Predicated region
              $region102: #{_lambda_.13} parent=89 // pred_check
                _
              $region103: #{_lambda_.13} parent=89 // pred_check_branch
                %520 = sbr.rel (0) target = $region105
              $region104: #{_lambda_.13} parent=89 // pred_region
                loop: start=0, step=1, limit=1
                $region106: #{_lambda_.13} parent=104 // loop_pre_header
                  _
                $region107: #{_lambda_.13} parent=104 // loop_header
                  %s522 = sphi 0, %s526
                  %p523 = scmp.ge.s32.totalorder %s522, 1
                  %s527 = sphi %s492, %s492
                  %s528 = sphi %s498, %s498
                $region108: #{_lambda_.13} parent=104 // loop_header_branch
                  %525 = sbr.rel (%p523) target = $region112
                $region109: #{_lambda_.13} parent=104 // loop_body
                  %v529 = vld [vmem:[%s527] sm:$0xff]
                  %530 = vst [vmem:[%s528] sm:$0xff] %v529
                  %v531 = vld [vmem:[%s527 + $0x8] sm:$0xff]
                  %532 = vst [vmem:[%s528 + $0x18] sm:$0xff] %v531
                $region110: #{_lambda_.13} parent=104 // loop_footer
                  %s526 = sadd.s32 1, %s522
                $region111: #{_lambda_.13} parent=104 // loop_footer_branch
                  %521 = sbr.rel target = $region107
                $region112: #{_lambda_.13} parent=104 // loop_exit
                  _
              $region105: #{_lambda_.13} parent=89 // pred_fallthru
                _
              // Predicated region
              $region113: #{_lambda_.13} parent=89 // pred_check
                _
              $region114: #{_lambda_.13} parent=89 // pred_check_branch
                %534 = sbr.rel target = $region116
              $region115: #{_lambda_.13} parent=89 // pred_region
                _
              $region116: #{_lambda_.13} parent=89 // pred_fallthru
                _
            $region90: #{_lambda_.13} parent=85 // pred_fallthru
              _
            // Predicated region
            $region91: #{_lambda_.13} parent=85 // pred_check
              _
            $region92: #{_lambda_.13} parent=85 // pred_check_branch
              %504 = sbr.rel target = $region94
            $region93: #{_lambda_.13} parent=85 // pred_region
              %s506 = ssub.s32 256, 1
              loop: start=0, step=1, limit=1
              $region95: #{_lambda_.13} parent=93 // loop_pre_header
                _
              $region96: #{_lambda_.13} parent=93 // loop_header
                %s508 = sphi 0, %s512
                %p509 = scmp.ge.s32.totalorder %s508, 1
                %s513 = sphi %s492, %s492
                %s514 = sphi %s498, %s498
              $region97: #{_lambda_.13} parent=93 // loop_header_branch
                %511 = sbr.rel (%p509) target = $region101
              $region98: #{_lambda_.13} parent=93 // loop_body
                %v515 = vld [vmem:[%s513] sm:%s506]
                %516 = vst [vmem:[%s514] sm:%s506] %v515
                %v517 = vld [vmem:[%s513 + $0x8] sm:%s506]
                %518 = vst [vmem:[%s514 + $0x18] sm:%s506] %v517
              $region99: #{_lambda_.13} parent=93 // loop_footer
                %s512 = sadd.s32 1, %s508
              $region100: #{_lambda_.13} parent=93 // loop_footer_branch
                %507 = sbr.rel target = $region96
              $region101: #{_lambda_.13} parent=93 // loop_exit
                _
            $region94: #{_lambda_.13} parent=85 // pred_fallthru
              _
          $region86: #{_lambda_.13} parent=81 // pred_fallthru
            _
          %535 = vnop
        $region82: #{_lambda_.13} parent=65 // pred_fallthru
          _
      $region66: #{_lambda_.13} parent=5 // pred_fallthru
        _
      %p536 = scmp.le.s32.totalorder 2, %s9
      // Predicated region
      $region117: #{_lambda_.13} parent=5 // pred_check
        %p537 = pneg %p536
      $region118: #{_lambda_.13} parent=5 // pred_check_branch
        %539 = sbr.rel (%p537) target = $region120
      $region119: #{_lambda_.13} parent=5 // pred_region
        %s540 = ssub.s32 %s9, 2
        // Predicated region
        $region121: #{_lambda_.13} parent=119 // pred_check
          %p541 = pneg %p125
        $region122: #{_lambda_.13} parent=119 // pred_check_branch
          %543 = sbr.rel (%p541) target = $region124
        $region123: #{_lambda_.13} parent=119 // pred_region
          %s544 = sand.u32 %s110, 1
          %s545 = sand.u32 %s110, 1
          %s546 = smul.addr %s545, 16
          %s547 = scalar_lea.vmem [#allocation4], %s546
        $region124: #{_lambda_.13} parent=119 // pred_fallthru
          _
      $region120: #{_lambda_.13} parent=5 // pred_fallthru
        _
    $region6: #{_lambda_.13} parent=1 // loop_footer
      %s13 = sadd.s32 1, %s9
    $region7: #{_lambda_.13} parent=1 // loop_footer_branch
      %8 = sbr.rel target = $region3
    $region8: #{_lambda_.13} parent=1 // loop_exit
      _

// kernel: _lambda_.14
$region0: #{_lambda_.14}
  #allocation0 [shape = 'u32[]', space=smem, size = 0x4, offset = 0x4, fixed_abs, tag = 'smem constant byte address 0x4 - core index']
  #allocation1 [shape = 'u32[72,128]{1,0:T(1,128)}', space=vmem, size = 0x9000, scoped, tag = 'internal scratch']
  #allocation2 [shape = 'f32[16,256]{1,0:T(8,128)}', space=vmem, size = 0x4000, scoped, tag = 'scratch operand']
  %s0 = inlined_call_operand.vmem [shape: bf16[16,128], index: 0, kind: input, shape index: {}]
  %s1 = inlined_call_operand.vmem [shape: f32[16,1], index: 1, kind: input, shape index: {}]
  %s2 = inlined_call_operand.vmem [shape: bf16[128,256], index: 2, kind: input, shape index: {}]
  %s3 = inlined_call_operand.vmem [shape: bf16[16,256], index: 3, kind: output, shape index: {}]
  %s4 = sld [smem:[#allocation0]]
  $region30: #{_lambda_.14} parent=0
    _
  %s6 = ssub.s32 1, %s4
  %s7 = scalar_select 0, %s6, %s4
  // Predicated region
  $region2: #{_lambda_.14} parent=0 // pred_check
    _
  $region3: #{_lambda_.14} parent=0 // pred_check_branch
    %9 = sbr.rel (0) target = $region5
  $region4: #{_lambda_.14} parent=0 // pred_region
    _
  $region5: #{_lambda_.14} parent=0 // pred_fallthru
    _
  // Predicated region
  $region6: #{_lambda_.14} parent=0 // pred_check
    _
  $region7: #{_lambda_.14} parent=0 // pred_check_branch
    %11 = sbr.rel (0) target = $region9
  $region8: #{_lambda_.14} parent=0 // pred_region
    _
  $region9: #{_lambda_.14} parent=0 // pred_fallthru
    _
  // Predicated region
  $region10: #{_lambda_.14} parent=0 // pred_check
    _
  $region11: #{_lambda_.14} parent=0 // pred_check_branch
    %13 = sbr.rel (0) target = $region13
  $region12: #{_lambda_.14} parent=0 // pred_region
    _
  $region13: #{_lambda_.14} parent=0 // pred_fallthru
    _
  %p14 = scmp.eq.s32.totalorder 0, 0
  // Predicated region
  $region14: #{_lambda_.14} parent=0 // pred_check
    %p15 = pneg %p14
  $region15: #{_lambda_.14} parent=0 // pred_check_branch
    %17 = sbr.rel (%p15) target = $region17
  $region16: #{_lambda_.14} parent=0 // pred_region
    %18 = vst [vmem:[#allocation2] sm:$0xff] 0.0
    %19 = vst [vmem:[#allocation2 + $0x8] sm:$0xff] 0.0
    %20 = vst [vmem:[#allocation2 + $0x10] sm:$0xff] 0.0
    %21 = vst [vmem:[#allocation2 + $0x18] sm:$0xff] 0.0
  $region17: #{_lambda_.14} parent=0 // pred_fallthru
    _
  %v22 = vld [vmem:[#allocation2] sm:$0xff]
  %v23 = vld [vmem:[#allocation2 + $0x8] sm:$0xff]
  %v24 = vld [vmem:[#allocation2 + $0x10] sm:$0xff]
  %v25 = vld [vmem:[#allocation2 + $0x18] sm:$0xff]
  %v26 = vld [vmem:[%s0] sm:$0xf]
  %v27 = vld [vmem:[%s0 + $0x4] sm:$0xf]
  %v28 = vld [vmem:[%s2] sm:$0xff]
  %v29 = vld [vmem:[%s2 + $0x8] sm:$0xff]
  %v30 = vld [vmem:[%s2 + $0x10] sm:$0xff]
  %v31 = vld [vmem:[%s2 + $0x18] sm:$0xff]
  %v32 = vld [vmem:[%s2 + $0x20] sm:$0xff]
  %v33 = vld [vmem:[%s2 + $0x28] sm:$0xff]
  %v34 = vld [vmem:[%s2 + $0x30] sm:$0xff]
  %v35 = vld [vmem:[%s2 + $0x38] sm:$0xff]
  %v36 = vld [vmem:[%s2 + $0x40] sm:$0xff]
  %v37 = vld [vmem:[%s2 + $0x48] sm:$0xff]
  %v38 = vld [vmem:[%s2 + $0x50] sm:$0xff]
  %v39 = vld [vmem:[%s2 + $0x58] sm:$0xff]
  %v40 = vld [vmem:[%s2 + $0x60] sm:$0xff]
  %v41 = vld [vmem:[%s2 + $0x68] sm:$0xff]
  %v42 = vld [vmem:[%s2 + $0x70] sm:$0xff]
  %v43 = vld [vmem:[%s2 + $0x78] sm:$0xff]
  %v46 = vunpack.c.l.b16 %v26
  %v47 = vunpack.c.l.b16 %v27
  %v48 = vpack.c.b16 %v47, %v46
  %v66 = vunpack.c.l.b16 %v28
  %v67 = vunpack.c.h.b16 %v28
  %v68 = vunpack.c.l.b16 %v29
  %v69 = vunpack.c.h.b16 %v29
  %v70 = vunpack.c.l.b16 %v30
  %v71 = vunpack.c.h.b16 %v30
  %v72 = vunpack.c.l.b16 %v31
  %v73 = vunpack.c.h.b16 %v31
  %v74 = vunpack.c.l.b16 %v32
  %v75 = vunpack.c.h.b16 %v32
  %v76 = vunpack.c.l.b16 %v33
  %v77 = vunpack.c.h.b16 %v33
  %v78 = vunpack.c.l.b16 %v34
  %v79 = vunpack.c.h.b16 %v34
  %v80 = vunpack.c.l.b16 %v35
  %v81 = vunpack.c.h.b16 %v35
  %v82 = vunpack.c.l.b16 %v36
  %v83 = vunpack.c.h.b16 %v36
  %v84 = vunpack.c.l.b16 %v37
  %v85 = vunpack.c.h.b16 %v37
  %v86 = vunpack.c.l.b16 %v38
  %v87 = vunpack.c.h.b16 %v38
  %v88 = vunpack.c.l.b16 %v39
  %v89 = vunpack.c.h.b16 %v39
  %v90 = vunpack.c.l.b16 %v40
  %v91 = vunpack.c.h.b16 %v40
  %v92 = vunpack.c.l.b16 %v41
  %v93 = vunpack.c.h.b16 %v41
  %v94 = vunpack.c.l.b16 %v42
  %v95 = vunpack.c.h.b16 %v42
  %v96 = vunpack.c.l.b16 %v43
  %v97 = vunpack.c.h.b16 %v43
  %v98 = vpack.c.b16 %v68, %v66
  %v99 = vpack.c.b16 %v69, %v67
  %v100 = vpack.c.b16 %v72, %v70
  %v101 = vpack.c.b16 %v73, %v71
  %v102 = vpack.c.b16 %v76, %v74
  %v103 = vpack.c.b16 %v77, %v75
  %v104 = vpack.c.b16 %v80, %v78
  %v105 = vpack.c.b16 %v81, %v79
  %v106 = vpack.c.b16 %v84, %v82
  %v107 = vpack.c.b16 %v85, %v83
  %v108 = vpack.c.b16 %v88, %v86
  %v109 = vpack.c.b16 %v89, %v87
  %v110 = vpack.c.b16 %v92, %v90
  %v111 = vpack.c.b16 %v93, %v91
  %v112 = vpack.c.b16 %v96, %v94
  %v113 = vpack.c.b16 %v97, %v95
  %130 = vmatpush.bf16.msra.mxu0 %v112
  %131 = vmatpush.bf16.msra.mxu0 %v110
  %132 = vmatpush.bf16.msra.mxu0 %v108
  %133 = vmatpush.bf16.msra.mxu0 %v106
  %134 = vmatpush.bf16.msra.mxu0 %v104
  %135 = vmatpush.bf16.msra.mxu0 %v102
  %136 = vmatpush.bf16.msra.mxu0 %v100
  %137 = vmatpush.bf16.msra.mxu0 %v98
  %138 = vmatmul.bf16.gmra.mxu0 %v48
  %v139 = vpop.f32.mrf.mxu0
  %v140 = vadd.f32 0.0, %v139
  %v141 = vpop.f32.mrf.mxu0
  %v142 = vadd.f32 0.0, %v141
  %143 = vdwg.mxu0
  %144 = vmatpush.bf16.msra.mxu0 %v113
  %145 = vmatpush.bf16.msra.mxu0 %v111
  %146 = vmatpush.bf16.msra.mxu0 %v109
  %147 = vmatpush.bf16.msra.mxu0 %v107
  %148 = vmatpush.bf16.msra.mxu0 %v105
  %149 = vmatpush.bf16.msra.mxu0 %v103
  %150 = vmatpush.bf16.msra.mxu0 %v101
  %151 = vmatpush.bf16.msra.mxu0 %v99
  %152 = vmatmul.bf16.gmra.mxu0 %v48
  %v153 = vpop.f32.mrf.mxu0
  %v154 = vadd.f32 0.0, %v153
  %v155 = vpop.f32.mrf.mxu0
  %v156 = vadd.f32 0.0, %v155
  %157 = vdwg.mxu0
  %v158 = vadd.f32 %v22, %v140
  %v159 = vadd.f32 %v23, %v154
  %v160 = vadd.f32 %v24, %v142
  %v161 = vadd.f32 %v25, %v156
  %162 = vst [vmem:[#allocation2] sm:$0xff] %v158
  %163 = vst [vmem:[#allocation2 + $0x8] sm:$0xff] %v159
  %164 = vst [vmem:[#allocation2 + $0x10] sm:$0xff] %v160
  %165 = vst [vmem:[#allocation2 + $0x18] sm:$0xff] %v161
  // Predicated region
  $region18: #{_lambda_.14} parent=0 // pred_check
    %p166 = pneg %p14
  $region19: #{_lambda_.14} parent=0 // pred_check_branch
    %168 = sbr.rel (%p166) target = $region21
  $region20: #{_lambda_.14} parent=0 // pred_region
    %v169 = vld [vmem:[#allocation2] sm:$0xff]
    %v170 = vld [vmem:[#allocation2 + $0x8] sm:$0xff]
    %v171 = vld [vmem:[#allocation2 + $0x10] sm:$0xff]
    %v172 = vld [vmem:[#allocation2 + $0x18] sm:$0xff]
    %v173 = vld [vmem:[%s1] sm:$0xff]
    %v174 = vld [vmem:[%s1 + $0x8] sm:$0xff]
    %176 = vset.pattern.permute.xlu0 0
    %177 = vperm.xlu0 %176, %v173
    %v178 = vpop.permute.xlu0 %177
    %181 = vset.pattern.permute.xlu0 0
    %182 = vperm.xlu0 %181, %v174
    %v183 = vpop.permute.xlu0 %182
    %v185 = vadd.f32 %v169, %v178
    %v186 = vadd.f32 %v170, %v178
    %v187 = vadd.f32 %v171, %v183
    %v188 = vadd.f32 %v172, %v183
    %vm189 = vcmp.gt.f32.partialorder %v185, 0.0
    %vm190 = vcmp.gt.f32.partialorder %v186, 0.0
    %vm191 = vcmp.gt.f32.partialorder %v187, 0.0
    %vm192 = vcmp.gt.f32.partialorder %v188, 0.0
    %v193 = vmul.f32 %v185, 0.2
    %v194 = vmul.f32 %v186, 0.2
    %v195 = vmul.f32 %v187, 0.2
    %v196 = vmul.f32 %v188, 0.2
    %v197 = vsel %vm189, %v185, %v193
    %v198 = vsel %vm190, %v186, %v194
    %v199 = vsel %vm191, %v187, %v195
    %v200 = vsel %vm192, %v188, %v196
    %v201 = vpack.c.bf16 %v198, %v197
    %v202 = vpack.c.bf16 %v200, %v199
    %203 = vst [vmem:[%s3] sm:$0xff] %v201
    %204 = vst [vmem:[%s3 + $0x8] sm:$0xff] %v202
  $region21: #{_lambda_.14} parent=0 // pred_fallthru
    _
  // Predicated region
  $region22: #{_lambda_.14} parent=0 // pred_check
    _
  $region23: #{_lambda_.14} parent=0 // pred_check_branch
    %206 = sbr.rel (0) target = $region25
  $region24: #{_lambda_.14} parent=0 // pred_region
    _
  $region25: #{_lambda_.14} parent=0 // pred_fallthru
    _
  // Predicated region
  $region26: #{_lambda_.14} parent=0 // pred_check
    _
  $region27: #{_lambda_.14} parent=0 // pred_check_branch
    %208 = sbr.rel (0) target = $region29
  $region28: #{_lambda_.14} parent=0 // pred_region
    _
  $region29: #{_lambda_.14} parent=0 // pred_fallthru
    _

// kernel: _lambda_.15
$region0: #{_lambda_.15}
  #allocation0 [shape = 'u32[]', space=smem, size = 0x4, offset = 0x4, fixed_abs, tag = 'smem constant byte address 0x4 - core index']
  #allocation1 [shape = 'u32[72,128]{1,0:T(1,128)}', space=vmem, size = 0x9000, scoped, tag = 'internal scratch']
  #allocation2 [shape = 'f32[32,128]{1,0:T(8,128)}', space=vmem, size = 0x4000, scoped, tag = 'scratch operand']
  %s0 = inlined_call_operand.vmem [shape: bf16[32,256], index: 0, kind: input, shape index: {}]
  %s1 = inlined_call_operand.vmem [shape: f32[32,1], index: 1, kind: input, shape index: {}]
  %s2 = inlined_call_operand.vmem [shape: bf16[256,128], index: 2, kind: input, shape index: {}]
  %s3 = inlined_call_operand.vmem [shape: bf16[32,128], index: 3, kind: output, shape index: {}]
  %s4 = sld [smem:[#allocation0]]
  $region30: #{_lambda_.15} parent=0
    _
  %s6 = ssub.s32 1, %s4
  %s7 = scalar_select 0, %s6, %s4
  // Predicated region
  $region2: #{_lambda_.15} parent=0 // pred_check
    _
  $region3: #{_lambda_.15} parent=0 // pred_check_branch
    %9 = sbr.rel (0) target = $region5
  $region4: #{_lambda_.15} parent=0 // pred_region
    _
  $region5: #{_lambda_.15} parent=0 // pred_fallthru
    _
  // Predicated region
  $region6: #{_lambda_.15} parent=0 // pred_check
    _
  $region7: #{_lambda_.15} parent=0 // pred_check_branch
    %11 = sbr.rel (0) target = $region9
  $region8: #{_lambda_.15} parent=0 // pred_region
    _
  $region9: #{_lambda_.15} parent=0 // pred_fallthru
    _
  // Predicated region
  $region10: #{_lambda_.15} parent=0 // pred_check
    _
  $region11: #{_lambda_.15} parent=0 // pred_check_branch
    %13 = sbr.rel (0) target = $region13
  $region12: #{_lambda_.15} parent=0 // pred_region
    _
  $region13: #{_lambda_.15} parent=0 // pred_fallthru
    _
  %p14 = scmp.eq.s32.totalorder 0, 0
  // Predicated region
  $region14: #{_lambda_.15} parent=0 // pred_check
    %p15 = pneg %p14
  $region15: #{_lambda_.15} parent=0 // pred_check_branch
    %17 = sbr.rel (%p15) target = $region17
  $region16: #{_lambda_.15} parent=0 // pred_region
    %18 = vst [vmem:[#allocation2] sm:$0xff] 0.0
    %19 = vst [vmem:[#allocation2 + $0x8] sm:$0xff] 0.0
    %20 = vst [vmem:[#allocation2 + $0x10] sm:$0xff] 0.0
    %21 = vst [vmem:[#allocation2 + $0x18] sm:$0xff] 0.0
  $region17: #{_lambda_.15} parent=0 // pred_fallthru
    _
  %v22 = vld [vmem:[#allocation2] sm:$0xff]
  %v23 = vld [vmem:[#allocation2 + $0x8] sm:$0xff]
  %v24 = vld [vmem:[#allocation2 + $0x10] sm:$0xff]
  %v25 = vld [vmem:[#allocation2 + $0x18] sm:$0xff]
  %v26 = vld [vmem:[%s0] sm:$0xff]
  %v27 = vld [vmem:[%s0 + $0x8] sm:$0xff]
  %v28 = vld [vmem:[%s0 + $0x10] sm:$0xff]
  %v29 = vld [vmem:[%s0 + $0x18] sm:$0xff]
  %v30 = vld [vmem:[%s2] sm:$0xf]
  %v31 = vld [vmem:[%s2 + $0x4] sm:$0xf]
  %v32 = vld [vmem:[%s2 + $0x8] sm:$0xf]
  %v33 = vld [vmem:[%s2 + $0xc] sm:$0xf]
  %v34 = vld [vmem:[%s2 + $0x10] sm:$0xf]
  %v35 = vld [vmem:[%s2 + $0x14] sm:$0xf]
  %v36 = vld [vmem:[%s2 + $0x18] sm:$0xf]
  %v37 = vld [vmem:[%s2 + $0x1c] sm:$0xf]
  %v38 = vld [vmem:[%s2 + $0x20] sm:$0xf]
  %v39 = vld [vmem:[%s2 + $0x24] sm:$0xf]
  %v40 = vld [vmem:[%s2 + $0x28] sm:$0xf]
  %v41 = vld [vmem:[%s2 + $0x2c] sm:$0xf]
  %v42 = vld [vmem:[%s2 + $0x30] sm:$0xf]
  %v43 = vld [vmem:[%s2 + $0x34] sm:$0xf]
  %v44 = vld [vmem:[%s2 + $0x38] sm:$0xf]
  %v45 = vld [vmem:[%s2 + $0x3c] sm:$0xf]
  %v46 = vld [vmem:[%s2 + $0x40] sm:$0xf]
  %v47 = vld [vmem:[%s2 + $0x44] sm:$0xf]
  %v48 = vld [vmem:[%s2 + $0x48] sm:$0xf]
  %v49 = vld [vmem:[%s2 + $0x4c] sm:$0xf]
  %v50 = vld [vmem:[%s2 + $0x50] sm:$0xf]
  %v51 = vld [vmem:[%s2 + $0x54] sm:$0xf]
  %v52 = vld [vmem:[%s2 + $0x58] sm:$0xf]
  %v53 = vld [vmem:[%s2 + $0x5c] sm:$0xf]
  %v54 = vld [vmem:[%s2 + $0x60] sm:$0xf]
  %v55 = vld [vmem:[%s2 + $0x64] sm:$0xf]
  %v56 = vld [vmem:[%s2 + $0x68] sm:$0xf]
  %v57 = vld [vmem:[%s2 + $0x6c] sm:$0xf]
  %v58 = vld [vmem:[%s2 + $0x70] sm:$0xf]
  %v59 = vld [vmem:[%s2 + $0x74] sm:$0xf]
  %v60 = vld [vmem:[%s2 + $0x78] sm:$0xf]
  %v61 = vld [vmem:[%s2 + $0x7c] sm:$0xf]
  %v66 = vunpack.c.l.b16 %v26
  %v67 = vunpack.c.h.b16 %v26
  %v68 = vunpack.c.l.b16 %v27
  %v69 = vunpack.c.h.b16 %v27
  %v70 = vunpack.c.l.b16 %v28
  %v71 = vunpack.c.h.b16 %v28
  %v72 = vunpack.c.l.b16 %v29
  %v73 = vunpack.c.h.b16 %v29
  %v74 = vpack.c.b16 %v68, %v66
  %v75 = vpack.c.b16 %v69, %v67
  %v76 = vpack.c.b16 %v72, %v70
  %v77 = vpack.c.b16 %v73, %v71
  %v114 = vunpack.c.l.b16 %v30
  %v115 = vunpack.c.l.b16 %v31
  %v116 = vunpack.c.l.b16 %v32
  %v117 = vunpack.c.l.b16 %v33
  %v118 = vunpack.c.l.b16 %v34
  %v119 = vunpack.c.l.b16 %v35
  %v120 = vunpack.c.l.b16 %v36
  %v121 = vunpack.c.l.b16 %v37
  %v122 = vunpack.c.l.b16 %v38
  %v123 = vunpack.c.l.b16 %v39
  %v124 = vunpack.c.l.b16 %v40
  %v125 = vunpack.c.l.b16 %v41
  %v126 = vunpack.c.l.b16 %v42
  %v127 = vunpack.c.l.b16 %v43
  %v128 = vunpack.c.l.b16 %v44
  %v129 = vunpack.c.l.b16 %v45
  %v130 = vunpack.c.l.b16 %v46
  %v131 = vunpack.c.l.b16 %v47
  %v132 = vunpack.c.l.b16 %v48
  %v133 = vunpack.c.l.b16 %v49
  %v134 = vunpack.c.l.b16 %v50
  %v135 = vunpack.c.l.b16 %v51
  %v136 = vunpack.c.l.b16 %v52
  %v137 = vunpack.c.l.b16 %v53
  %v138 = vunpack.c.l.b16 %v54
  %v139 = vunpack.c.l.b16 %v55
  %v140 = vunpack.c.l.b16 %v56
  %v141 = vunpack.c.l.b16 %v57
  %v142 = vunpack.c.l.b16 %v58
  %v143 = vunpack.c.l.b16 %v59
  %v144 = vunpack.c.l.b16 %v60
  %v145 = vunpack.c.l.b16 %v61
  %v146 = vpack.c.b16 %v115, %v114
  %v147 = vpack.c.b16 %v117, %v116
  %v148 = vpack.c.b16 %v119, %v118
  %v149 = vpack.c.b16 %v121, %v120
  %v150 = vpack.c.b16 %v123, %v122
  %v151 = vpack.c.b16 %v125, %v124
  %v152 = vpack.c.b16 %v127, %v126
  %v153 = vpack.c.b16 %v129, %v128
  %v154 = vpack.c.b16 %v131, %v130
  %v155 = vpack.c.b16 %v133, %v132
  %v156 = vpack.c.b16 %v135, %v134
  %v157 = vpack.c.b16 %v137, %v136
  %v158 = vpack.c.b16 %v139, %v138
  %v159 = vpack.c.b16 %v141, %v140
  %v160 = vpack.c.b16 %v143, %v142
  %v161 = vpack.c.b16 %v145, %v144
  %178 = vmatpush.bf16.msra.mxu0 %v153
  %179 = vmatpush.bf16.msra.mxu0 %v152
  %180 = vmatpush.bf16.msra.mxu0 %v151
  %181 = vmatpush.bf16.msra.mxu0 %v150
  %182 = vmatpush.bf16.msra.mxu0 %v149
  %183 = vmatpush.bf16.msra.mxu0 %v148
  %184 = vmatpush.bf16.msra.mxu0 %v147
  %185 = vmatpush.bf16.msra.mxu0 %v146
  %186 = vmatmul.bf16.gmra.mxu0 %v74
  %v187 = vpop.f32.mrf.mxu0
  %v188 = vadd.f32 0.0, %v187
  %v189 = vpop.f32.mrf.mxu0
  %v190 = vadd.f32 0.0, %v189
  %191 = vmatmul.bf16.gmra.mxu0 %v76
  %v192 = vpop.f32.mrf.mxu0
  %v193 = vadd.f32 0.0, %v192
  %v194 = vpop.f32.mrf.mxu0
  %v195 = vadd.f32 0.0, %v194
  %196 = vdwg.mxu0
  %197 = vmatpush.bf16.msra.mxu0 %v161
  %198 = vmatpush.bf16.msra.mxu0 %v160
  %199 = vmatpush.bf16.msra.mxu0 %v159
  %200 = vmatpush.bf16.msra.mxu0 %v158
  %201 = vmatpush.bf16.msra.mxu0 %v157
  %202 = vmatpush.bf16.msra.mxu0 %v156
  %203 = vmatpush.bf16.msra.mxu0 %v155
  %204 = vmatpush.bf16.msra.mxu0 %v154
  %205 = vmatmul.bf16.gmra.mxu0 %v75
  %v206 = vpop.f32.mrf.mxu0
  %v207 = vadd.f32 %v188, %v206
  %v208 = vpop.f32.mrf.mxu0
  %v209 = vadd.f32 %v190, %v208
  %210 = vmatmul.bf16.gmra.mxu0 %v77
  %v211 = vpop.f32.mrf.mxu0
  %v212 = vadd.f32 %v193, %v211
  %v213 = vpop.f32.mrf.mxu0
  %v214 = vadd.f32 %v195, %v213
  %215 = vdwg.mxu0
  %v216 = vadd.f32 %v22, %v207
  %v217 = vadd.f32 %v23, %v209
  %v218 = vadd.f32 %v24, %v212
  %v219 = vadd.f32 %v25, %v214
  %220 = vst [vmem:[#allocation2] sm:$0xff] %v216
  %221 = vst [vmem:[#allocation2 + $0x8] sm:$0xff] %v217
  %222 = vst [vmem:[#allocation2 + $0x10] sm:$0xff] %v218
  %223 = vst [vmem:[#allocation2 + $0x18] sm:$0xff] %v219
  // Predicated region
  $region18: #{_lambda_.15} parent=0 // pred_check
    %p224 = pneg %p14
  $region19: #{_lambda_.15} parent=0 // pred_check_branch
    %226 = sbr.rel (%p224) target = $region21
  $region20: #{_lambda_.15} parent=0 // pred_region
    %v227 = vld [vmem:[#allocation2] sm:$0xff]
    %v228 = vld [vmem:[#allocation2 + $0x8] sm:$0xff]
    %v229 = vld [vmem:[#allocation2 + $0x10] sm:$0xff]
    %v230 = vld [vmem:[#allocation2 + $0x18] sm:$0xff]
    %v231 = vld [vmem:[%s1] sm:$0xff]
    %v232 = vld [vmem:[%s1 + $0x8] sm:$0xff]
    %v233 = vld [vmem:[%s1 + $0x10] sm:$0xff]
    %v234 = vld [vmem:[%s1 + $0x18] sm:$0xff]
    %236 = vset.pattern.permute.xlu0 0
    %237 = vperm.xlu0 %236, %v231
    %v238 = vpop.permute.xlu0 %237
    %241 = vset.pattern.permute.xlu0 0
    %242 = vperm.xlu0 %241, %v232
    %v243 = vpop.permute.xlu0 %242
    %246 = vset.pattern.permute.xlu0 0
    %247 = vperm.xlu0 %246, %v233
    %v248 = vpop.permute.xlu0 %247
    %251 = vset.pattern.permute.xlu0 0
    %252 = vperm.xlu0 %251, %v234
    %v253 = vpop.permute.xlu0 %252
    %v255 = vadd.f32 %v227, %v238
    %v256 = vadd.f32 %v228, %v243
    %v257 = vadd.f32 %v229, %v248
    %v258 = vadd.f32 %v230, %v253
    %vm259 = vcmp.gt.f32.partialorder %v255, 0.0
    %vm260 = vcmp.gt.f32.partialorder %v256, 0.0
    %vm261 = vcmp.gt.f32.partialorder %v257, 0.0
    %vm262 = vcmp.gt.f32.partialorder %v258, 0.0
    %v263 = vmul.f32 %v255, 0.2
    %v264 = vmul.f32 %v256, 0.2
    %v265 = vmul.f32 %v257, 0.2
    %v266 = vmul.f32 %v258, 0.2
    %v267 = vsel %vm259, %v255, %v263
    %v268 = vsel %vm260, %v256, %v264
    %v269 = vsel %vm261, %v257, %v265
    %v270 = vsel %vm262, %v258, %v266
    %v271 = vpack.c.bf16 %v267, %v267
    %v272 = vpack.c.bf16 %v268, %v268
    %v273 = vpack.c.bf16 %v269, %v269
    %v274 = vpack.c.bf16 %v270, %v270
    %275 = vst [vmem:[%s3] sm:$0xf] %v271
    %276 = vst [vmem:[%s3 + $0x4] sm:$0xf] %v272
    %277 = vst [vmem:[%s3 + $0x8] sm:$0xf] %v273
    %278 = vst [vmem:[%s3 + $0xc] sm:$0xf] %v274
  $region21: #{_lambda_.15} parent=0 // pred_fallthru
    _
  // Predicated region
  $region22: #{_lambda_.15} parent=0 // pred_check
    _
  $region23: #{_lambda_.15} parent=0 // pred_check_branch
    %280 = sbr.rel (0) target = $region25
  $region24: #{_lambda_.15} parent=0 // pred_region
    _
  $region25: #{_lambda_.15} parent=0 // pred_fallthru
    _
  // Predicated region
  $region26: #{_lambda_.15} parent=0 // pred_check
    _
  $region27: #{_lambda_.15} parent=0 // pred_check_branch
    %282 = sbr.rel (0) target = $region29
  $region28: #{_lambda_.15} parent=0 // pred_region
    _
  $region29: #{_lambda_.15} parent=0 // pred_fallthru
    _

// kernel: _lambda_.16
$region0: #{_lambda_.16}
  #allocation0 [shape = 'u32[]', space=smem, size = 0x4, offset = 0x4, fixed_abs, tag = 'smem constant byte address 0x4 - core index']
  #allocation1 [shape = 'u32[72,128]{1,0:T(1,128)}', space=vmem, size = 0x9000, scoped, tag = 'internal scratch']
  #allocation2 [shape = 'f32[16,128]{1,0:T(8,128)}', space=vmem, size = 0x2000, scoped, tag = 'scratch operand']
  %s0 = inlined_call_operand.vmem [shape: bf16[16,512], index: 0, kind: input, shape index: {}]
  %s1 = inlined_call_operand.vmem [shape: f32[16,1], index: 1, kind: input, shape index: {}]
  %s2 = inlined_call_operand.vmem [shape: bf16[512,128], index: 2, kind: input, shape index: {}]
  %s3 = inlined_call_operand.vmem [shape: f32[16,128], index: 3, kind: output, shape index: {}]
  %s4 = sld [smem:[#allocation0]]
  $region30: #{_lambda_.16} parent=0
    _
  %s6 = ssub.s32 1, %s4
  %s7 = scalar_select 0, %s6, %s4
  // Predicated region
  $region2: #{_lambda_.16} parent=0 // pred_check
    _
  $region3: #{_lambda_.16} parent=0 // pred_check_branch
    %9 = sbr.rel (0) target = $region5
  $region4: #{_lambda_.16} parent=0 // pred_region
    _
  $region5: #{_lambda_.16} parent=0 // pred_fallthru
    _
  // Predicated region
  $region6: #{_lambda_.16} parent=0 // pred_check
    _
  $region7: #{_lambda_.16} parent=0 // pred_check_branch
    %11 = sbr.rel (0) target = $region9
  $region8: #{_lambda_.16} parent=0 // pred_region
    _
  $region9: #{_lambda_.16} parent=0 // pred_fallthru
    _
  // Predicated region
  $region10: #{_lambda_.16} parent=0 // pred_check
    _
  $region11: #{_lambda_.16} parent=0 // pred_check_branch
    %13 = sbr.rel (0) target = $region13
  $region12: #{_lambda_.16} parent=0 // pred_region
    _
  $region13: #{_lambda_.16} parent=0 // pred_fallthru
    _
  %p14 = scmp.eq.s32.totalorder 0, 0
  // Predicated region
  $region14: #{_lambda_.16} parent=0 // pred_check
    %p15 = pneg %p14
  $region15: #{_lambda_.16} parent=0 // pred_check_branch
    %17 = sbr.rel (%p15) target = $region17
  $region16: #{_lambda_.16} parent=0 // pred_region
    %18 = vst [vmem:[#allocation2] sm:$0xff] 0.0
    %19 = vst [vmem:[#allocation2 + $0x8] sm:$0xff] 0.0
  $region17: #{_lambda_.16} parent=0 // pred_fallthru
    _
  %v20 = vld [vmem:[#allocation2] sm:$0xff]
  %v21 = vld [vmem:[#allocation2 + $0x8] sm:$0xff]
  %v22 = vld [vmem:[%s0] sm:$0xff]
  %v23 = vld [vmem:[%s0 + $0x8] sm:$0xff]
  %v24 = vld [vmem:[%s0 + $0x10] sm:$0xff]
  %v25 = vld [vmem:[%s0 + $0x18] sm:$0xff]
  %v26 = vld [vmem:[%s2] sm:$0xf]
  %v27 = vld [vmem:[%s2 + $0x4] sm:$0xf]
  %v28 = vld [vmem:[%s2 + $0x8] sm:$0xf]
  %v29 = vld [vmem:[%s2 + $0xc] sm:$0xf]
  %v30 = vld [vmem:[%s2 + $0x10] sm:$0xf]
  %v31 = vld [vmem:[%s2 + $0x14] sm:$0xf]
  %v32 = vld [vmem:[%s2 + $0x18] sm:$0xf]
  %v33 = vld [vmem:[%s2 + $0x1c] sm:$0xf]
  %v34 = vld [vmem:[%s2 + $0x20] sm:$0xf]
  %v35 = vld [vmem:[%s2 + $0x24] sm:$0xf]
  %v36 = vld [vmem:[%s2 + $0x28] sm:$0xf]
  %v37 = vld [vmem:[%s2 + $0x2c] sm:$0xf]
  %v38 = vld [vmem:[%s2 + $0x30] sm:$0xf]
  %v39 = vld [vmem:[%s2 + $0x34] sm:$0xf]
  %v40 = vld [vmem:[%s2 + $0x38] sm:$0xf]
  %v41 = vld [vmem:[%s2 + $0x3c] sm:$0xf]
  %v42 = vld [vmem:[%s2 + $0x40] sm:$0xf]
  %v43 = vld [vmem:[%s2 + $0x44] sm:$0xf]
  %v44 = vld [vmem:[%s2 + $0x48] sm:$0xf]
  %v45 = vld [vmem:[%s2 + $0x4c] sm:$0xf]
  %v46 = vld [vmem:[%s2 + $0x50] sm:$0xf]
  %v47 = vld [vmem:[%s2 + $0x54] sm:$0xf]
  %v48 = vld [vmem:[%s2 + $0x58] sm:$0xf]
  %v49 = vld [vmem:[%s2 + $0x5c] sm:$0xf]
  %v50 = vld [vmem:[%s2 + $0x60] sm:$0xf]
  %v51 = vld [vmem:[%s2 + $0x64] sm:$0xf]
  %v52 = vld [vmem:[%s2 + $0x68] sm:$0xf]
  %v53 = vld [vmem:[%s2 + $0x6c] sm:$0xf]
  %v54 = vld [vmem:[%s2 + $0x70] sm:$0xf]
  %v55 = vld [vmem:[%s2 + $0x74] sm:$0xf]
  %v56 = vld [vmem:[%s2 + $0x78] sm:$0xf]
  %v57 = vld [vmem:[%s2 + $0x7c] sm:$0xf]
  %v58 = vld [vmem:[%s2 + $0x80] sm:$0xf]
  %v59 = vld [vmem:[%s2 + $0x84] sm:$0xf]
  %v60 = vld [vmem:[%s2 + $0x88] sm:$0xf]
  %v61 = vld [vmem:[%s2 + $0x8c] sm:$0xf]
  %v62 = vld [vmem:[%s2 + $0x90] sm:$0xf]
  %v63 = vld [vmem:[%s2 + $0x94] sm:$0xf]
  %v64 = vld [vmem:[%s2 + $0x98] sm:$0xf]
  %v65 = vld [vmem:[%s2 + $0x9c] sm:$0xf]
  %v66 = vld [vmem:[%s2 + $0xa0] sm:$0xf]
  %v67 = vld [vmem:[%s2 + $0xa4] sm:$0xf]
  %v68 = vld [vmem:[%s2 + $0xa8] sm:$0xf]
  %v69 = vld [vmem:[%s2 + $0xac] sm:$0xf]
  %v70 = vld [vmem:[%s2 + $0xb0] sm:$0xf]
  %v71 = vld [vmem:[%s2 + $0xb4] sm:$0xf]
  %v72 = vld [vmem:[%s2 + $0xb8] sm:$0xf]
  %v73 = vld [vmem:[%s2 + $0xbc] sm:$0xf]
  %v74 = vld [vmem:[%s2 + $0xc0] sm:$0xf]
  %v75 = vld [vmem:[%s2 + $0xc4] sm:$0xf]
  %v76 = vld [vmem:[%s2 + $0xc8] sm:$0xf]
  %v77 = vld [vmem:[%s2 + $0xcc] sm:$0xf]
  %v78 = vld [vmem:[%s2 + $0xd0] sm:$0xf]
  %v79 = vld [vmem:[%s2 + $0xd4] sm:$0xf]
  %v80 = vld [vmem:[%s2 + $0xd8] sm:$0xf]
  %v81 = vld [vmem:[%s2 + $0xdc] sm:$0xf]
  %v82 = vld [vmem:[%s2 + $0xe0] sm:$0xf]
  %v83 = vld [vmem:[%s2 + $0xe4] sm:$0xf]
  %v84 = vld [vmem:[%s2 + $0xe8] sm:$0xf]
  %v85 = vld [vmem:[%s2 + $0xec] sm:$0xf]
  %v86 = vld [vmem:[%s2 + $0xf0] sm:$0xf]
  %v87 = vld [vmem:[%s2 + $0xf4] sm:$0xf]
  %v88 = vld [vmem:[%s2 + $0xf8] sm:$0xf]
  %v89 = vld [vmem:[%s2 + $0xfc] sm:$0xf]
  %v94 = vunpack.c.l.b16 %v22
  %v95 = vunpack.c.h.b16 %v22
  %v96 = vunpack.c.l.b16 %v23
  %v97 = vunpack.c.h.b16 %v23
  %v98 = vunpack.c.l.b16 %v24
  %v99 = vunpack.c.h.b16 %v24
  %v100 = vunpack.c.l.b16 %v25
  %v101 = vunpack.c.h.b16 %v25
  %v102 = vpack.c.b16 %v98, %v94
  %v103 = vpack.c.b16 %v99, %v95
  %v104 = vpack.c.b16 %v100, %v96
  %v105 = vpack.c.b16 %v101, %v97
  %v174 = vunpack.c.l.b16 %v26
  %v175 = vunpack.c.l.b16 %v27
  %v176 = vunpack.c.l.b16 %v28
  %v177 = vunpack.c.l.b16 %v29
  %v178 = vunpack.c.l.b16 %v30
  %v179 = vunpack.c.l.b16 %v31
  %v180 = vunpack.c.l.b16 %v32
  %v181 = vunpack.c.l.b16 %v33
  %v182 = vunpack.c.l.b16 %v34
  %v183 = vunpack.c.l.b16 %v35
  %v184 = vunpack.c.l.b16 %v36
  %v185 = vunpack.c.l.b16 %v37
  %v186 = vunpack.c.l.b16 %v38
  %v187 = vunpack.c.l.b16 %v39
  %v188 = vunpack.c.l.b16 %v40
  %v189 = vunpack.c.l.b16 %v41
  %v190 = vunpack.c.l.b16 %v42
  %v191 = vunpack.c.l.b16 %v43
  %v192 = vunpack.c.l.b16 %v44
  %v193 = vunpack.c.l.b16 %v45
  %v194 = vunpack.c.l.b16 %v46
  %v195 = vunpack.c.l.b16 %v47
  %v196 = vunpack.c.l.b16 %v48
  %v197 = vunpack.c.l.b16 %v49
  %v198 = vunpack.c.l.b16 %v50
  %v199 = vunpack.c.l.b16 %v51
  %v200 = vunpack.c.l.b16 %v52
  %v201 = vunpack.c.l.b16 %v53
  %v202 = vunpack.c.l.b16 %v54
  %v203 = vunpack.c.l.b16 %v55
  %v204 = vunpack.c.l.b16 %v56
  %v205 = vunpack.c.l.b16 %v57
  %v206 = vunpack.c.l.b16 %v58
  %v207 = vunpack.c.l.b16 %v59
  %v208 = vunpack.c.l.b16 %v60
  %v209 = vunpack.c.l.b16 %v61
  %v210 = vunpack.c.l.b16 %v62
  %v211 = vunpack.c.l.b16 %v63
  %v212 = vunpack.c.l.b16 %v64
  %v213 = vunpack.c.l.b16 %v65
  %v214 = vunpack.c.l.b16 %v66
  %v215 = vunpack.c.l.b16 %v67
  %v216 = vunpack.c.l.b16 %v68
  %v217 = vunpack.c.l.b16 %v69
  %v218 = vunpack.c.l.b16 %v70
  %v219 = vunpack.c.l.b16 %v71
  %v220 = vunpack.c.l.b16 %v72
  %v221 = vunpack.c.l.b16 %v73
  %v222 = vunpack.c.l.b16 %v74
  %v223 = vunpack.c.l.b16 %v75
  %v224 = vunpack.c.l.b16 %v76
  %v225 = vunpack.c.l.b16 %v77
  %v226 = vunpack.c.l.b16 %v78
  %v227 = vunpack.c.l.b16 %v79
  %v228 = vunpack.c.l.b16 %v80
  %v229 = vunpack.c.l.b16 %v81
  %v230 = vunpack.c.l.b16 %v82
  %v231 = vunpack.c.l.b16 %v83
  %v232 = vunpack.c.l.b16 %v84
  %v233 = vunpack.c.l.b16 %v85
  %v234 = vunpack.c.l.b16 %v86
  %v235 = vunpack.c.l.b16 %v87
  %v236 = vunpack.c.l.b16 %v88
  %v237 = vunpack.c.l.b16 %v89
  %v238 = vpack.c.b16 %v175, %v174
  %v239 = vpack.c.b16 %v177, %v176
  %v240 = vpack.c.b16 %v179, %v178
  %v241 = vpack.c.b16 %v181, %v180
  %v242 = vpack.c.b16 %v183, %v182
  %v243 = vpack.c.b16 %v185, %v184
  %v244 = vpack.c.b16 %v187, %v186
  %v245 = vpack.c.b16 %v189, %v188
  %v246 = vpack.c.b16 %v191, %v190
  %v247 = vpack.c.b16 %v193, %v192
  %v248 = vpack.c.b16 %v195, %v194
  %v249 = vpack.c.b16 %v197, %v196
  %v250 = vpack.c.b16 %v199, %v198
  %v251 = vpack.c.b16 %v201, %v200
  %v252 = vpack.c.b16 %v203, %v202
  %v253 = vpack.c.b16 %v205, %v204
  %v254 = vpack.c.b16 %v207, %v206
  %v255 = vpack.c.b16 %v209, %v208
  %v256 = vpack.c.b16 %v211, %v210
  %v257 = vpack.c.b16 %v213, %v212
  %v258 = vpack.c.b16 %v215, %v214
  %v259 = vpack.c.b16 %v217, %v216
  %v260 = vpack.c.b16 %v219, %v218
  %v261 = vpack.c.b16 %v221, %v220
  %v262 = vpack.c.b16 %v223, %v222
  %v263 = vpack.c.b16 %v225, %v224
  %v264 = vpack.c.b16 %v227, %v226
  %v265 = vpack.c.b16 %v229, %v228
  %v266 = vpack.c.b16 %v231, %v230
  %v267 = vpack.c.b16 %v233, %v232
  %v268 = vpack.c.b16 %v235, %v234
  %v269 = vpack.c.b16 %v237, %v236
  %302 = vmatpush.bf16.msra.mxu0 %v245
  %303 = vmatpush.bf16.msra.mxu0 %v244
  %304 = vmatpush.bf16.msra.mxu0 %v243
  %305 = vmatpush.bf16.msra.mxu0 %v242
  %306 = vmatpush.bf16.msra.mxu0 %v241
  %307 = vmatpush.bf16.msra.mxu0 %v240
  %308 = vmatpush.bf16.msra.mxu0 %v239
  %309 = vmatpush.bf16.msra.mxu0 %v238
  %310 = vmatmul.bf16.gmra.mxu0 %v102
  %v311 = vpop.f32.mrf.mxu0
  %v312 = vadd.f32 0.0, %v311
  %v313 = vpop.f32.mrf.mxu0
  %v314 = vadd.f32 0.0, %v313
  %315 = vdwg.mxu0
  %316 = vmatpush.bf16.msra.mxu0 %v253
  %317 = vmatpush.bf16.msra.mxu0 %v252
  %318 = vmatpush.bf16.msra.mxu0 %v251
  %319 = vmatpush.bf16.msra.mxu0 %v250
  %320 = vmatpush.bf16.msra.mxu0 %v249
  %321 = vmatpush.bf16.msra.mxu0 %v248
  %322 = vmatpush.bf16.msra.mxu0 %v247
  %323 = vmatpush.bf16.msra.mxu0 %v246
  %324 = vmatmul.bf16.gmra.mxu0 %v103
  %v325 = vpop.f32.mrf.mxu0
  %v326 = vadd.f32 %v312, %v325
  %v327 = vpop.f32.mrf.mxu0
  %v328 = vadd.f32 %v314, %v327
  %329 = vdwg.mxu0
  %330 = vmatpush.bf16.msra.mxu0 %v261
  %331 = vmatpush.bf16.msra.mxu0 %v260
  %332 = vmatpush.bf16.msra.mxu0 %v259
  %333 = vmatpush.bf16.msra.mxu0 %v258
  %334 = vmatpush.bf16.msra.mxu0 %v257
  %335 = vmatpush.bf16.msra.mxu0 %v256
  %336 = vmatpush.bf16.msra.mxu0 %v255
  %337 = vmatpush.bf16.msra.mxu0 %v254
  %338 = vmatmul.bf16.gmra.mxu0 %v104
  %v339 = vpop.f32.mrf.mxu0
  %v340 = vadd.f32 %v326, %v339
  %v341 = vpop.f32.mrf.mxu0
  %v342 = vadd.f32 %v328, %v341
  %343 = vdwg.mxu0
  %344 = vmatpush.bf16.msra.mxu0 %v269
  %345 = vmatpush.bf16.msra.mxu0 %v268
  %346 = vmatpush.bf16.msra.mxu0 %v267
  %347 = vmatpush.bf16.msra.mxu0 %v266
  %348 = vmatpush.bf16.msra.mxu0 %v265
  %349 = vmatpush.bf16.msra.mxu0 %v264
  %350 = vmatpush.bf16.msra.mxu0 %v263
  %351 = vmatpush.bf16.msra.mxu0 %v262
  %352 = vmatmul.bf16.gmra.mxu0 %v105
  %v353 = vpop.f32.mrf.mxu0
  %v354 = vadd.f32 %v340, %v353
  %v355 = vpop.f32.mrf.mxu0
  %v356 = vadd.f32 %v342, %v355
  %357 = vdwg.mxu0
  %v358 = vadd.f32 %v20, %v354
  %v359 = vadd.f32 %v21, %v356
  %360 = vst [vmem:[#allocation2] sm:$0xff] %v358
  %361 = vst [vmem:[#allocation2 + $0x8] sm:$0xff] %v359
  // Predicated region
  $region18: #{_lambda_.16} parent=0 // pred_check
    %p362 = pneg %p14
  $region19: #{_lambda_.16} parent=0 // pred_check_branch
    %364 = sbr.rel (%p362) target = $region21
  $region20: #{_lambda_.16} parent=0 // pred_region
    %v365 = vld [vmem:[#allocation2] sm:$0xff]
    %v366 = vld [vmem:[#allocation2 + $0x8] sm:$0xff]
    %v367 = vld [vmem:[%s1] sm:$0xff]
    %v368 = vld [vmem:[%s1 + $0x8] sm:$0xff]
    %370 = vset.pattern.permute.xlu0 0
    %371 = vperm.xlu0 %370, %v367
    %v372 = vpop.permute.xlu0 %371
    %375 = vset.pattern.permute.xlu0 0
    %376 = vperm.xlu0 %375, %v368
    %v377 = vpop.permute.xlu0 %376
    %v379 = vadd.f32 %v365, %v372
    %v380 = vadd.f32 %v366, %v377
    %381 = vst [vmem:[%s3] sm:$0xff] %v379
    %382 = vst [vmem:[%s3 + $0x8] sm:$0xff] %v380
  $region21: #{_lambda_.16} parent=0 // pred_fallthru
    _
  // Predicated region
  $region22: #{_lambda_.16} parent=0 // pred_check
    _
  $region23: #{_lambda_.16} parent=0 // pred_check_branch
    %384 = sbr.rel (0) target = $region25
  $region24: #{_lambda_.16} parent=0 // pred_region
    _
  $region25: #{_lambda_.16} parent=0 // pred_fallthru
    _
  // Predicated region
  $region26: #{_lambda_.16} parent=0 // pred_check
    _
  $region27: #{_lambda_.16} parent=0 // pred_check_branch
    %386 = sbr.rel (0) target = $region29
  $region28: #{_lambda_.16} parent=0 // pred_region
    _
  $region29: #{_lambda_.16} parent=0 // pred_fallthru
    _

// kernel: tile.12
$region0: #{tile.12}
  #allocation0 [shape = 's32[1]{0}', space=sflag, size = 0x4, scoped, tag = 'scoped memory for tile.12']
  %s0 = inlined_call_operand.vmem [shape: f32[16], index: 0, kind: input, shape index: {}]
  %s1 = inlined_call_operand.vmem [shape: f32[4,16], index: 1, kind: output, shape index: {}]
  // Predicated region
  $region2: #{tile.12} parent=0 // pred_check
    _
  $region3: #{tile.12} parent=0 // pred_check_branch
    %3 = sbr.rel (0) target = $region5
  $region4: #{tile.12} parent=0 // pred_region
    _
  $region5: #{tile.12} parent=0 // pred_fallthru
    _
  %v4 = vld [vmem:[%s0] ss:$0 sm:$0xff]
  %5 = vst [vmem:[%s1] sm:$0xf] %v4

// kernel: mul.35
$region0: #{mul.35}
  %s0 = inlined_call_operand.vmem [shape: f32[4,16], index: 0, kind: input, shape index: {}]
  %s1 = inlined_call_operand.vmem [shape: f32[64], index: 1, kind: output, shape index: {}]
  $region1: #{mul.35} parent=0
    #allocation0 [shape = 'u8[4096]{0}', space=vmem, size = 0x1000, scoped, tag = 'scoped mem for output reshape']
    #allocation1 [shape = 'u8[4096]{0}', space=vmem, size = 0x1000, scoped, tag = 'scoped mem for input reshape']
    %s3 = ssub.s32 16, 1
    %v4 = vld [vmem:[%s0] sm:%s3]
    %5 = vst [vmem:[#allocation1] sm:%s3] %v4
    %v6 = vld [vmem:[#allocation1] sm:$0x1]
    %vm7 = vcmask 130048
    %8 = vst.msk [vmem:[#allocation0] sm:$0x1] %vm7, %v6
    %s9 = scalar_lea.vmem [#allocation1], 3
    %v10 = vld [vmem:[%s9] sm:$0x1]
    %11 = vrot.lane.b32.xlu0 %v10, 48
    %v12 = vpop.permute.xlu0 %11
    %vm13 = vcmask 523648
    %14 = vst.msk [vmem:[#allocation0] sm:$0x1] %vm13, %v12
    %s15 = scalar_lea.vmem [#allocation1], 2
    %v16 = vld [vmem:[%s15] sm:$0x1]
    %17 = vrot.lane.b32.xlu0 %v16, 32
    %v18 = vpop.permute.xlu0 %17
    %vm19 = vcmask 392448
    %20 = vst.msk [vmem:[#allocation0] sm:$0x1] %vm19, %v18
    %s21 = scalar_lea.vmem [#allocation1], 1
    %v22 = vld [vmem:[%s21] sm:$0x1]
    %23 = vrot.lane.b32.xlu0 %v22, 16
    %v24 = vpop.permute.xlu0 %23
    %vm25 = vcmask 261248
    %26 = vst.msk [vmem:[#allocation0] sm:$0x1] %vm25, %v24
    %s28 = ssub.s32 2, 1
    %v29 = vld [vmem:[#allocation0] sm:%s28]
    %s31 = ssub.s32 2, 1
    %32 = vst [vmem:[%s1] sm:%s31] %v29

// kernel: _lambda_.18
$region0: #{_lambda_.18}
  #allocation0 [shape = 'u32[]', space=smem, size = 0x4, offset = 0x4, fixed_abs, tag = 'smem constant byte address 0x4 - core index']
  #allocation1 [shape = 'u32[72,128]{1,0:T(1,128)}', space=vmem, size = 0x9000, scoped, tag = 'internal scratch']
  #allocation2 [shape = 'f32[64,128]{1,0:T(8,128)}', space=vmem, size = 0x8000, scoped, tag = 'scratch operand']
  %s0 = inlined_call_operand.vmem [shape: bf16[64,384], index: 0, kind: input, shape index: {}]
  %s1 = inlined_call_operand.vmem [shape: f32[64,1], index: 1, kind: input, shape index: {}]
  %s2 = inlined_call_operand.vmem [shape: bf16[384,128], index: 2, kind: input, shape index: {}]
  %s3 = inlined_call_operand.vmem [shape: bf16[64,128], index: 3, kind: output, shape index: {}]
  %s4 = sld [smem:[#allocation0]]
  $region30: #{_lambda_.18} parent=0
    _
  %s6 = ssub.s32 1, %s4
  %s7 = scalar_select 0, %s6, %s4
  // Predicated region
  $region2: #{_lambda_.18} parent=0 // pred_check
    _
  $region3: #{_lambda_.18} parent=0 // pred_check_branch
    %9 = sbr.rel (0) target = $region5
  $region4: #{_lambda_.18} parent=0 // pred_region
    _
  $region5: #{_lambda_.18} parent=0 // pred_fallthru
    _
  // Predicated region
  $region6: #{_lambda_.18} parent=0 // pred_check
    _
  $region7: #{_lambda_.18} parent=0 // pred_check_branch
    %11 = sbr.rel (0) target = $region9
  $region8: #{_lambda_.18} parent=0 // pred_region
    _
  $region9: #{_lambda_.18} parent=0 // pred_fallthru
    _
  // Predicated region
  $region10: #{_lambda_.18} parent=0 // pred_check
    _
  $region11: #{_lambda_.18} parent=0 // pred_check_branch
    %13 = sbr.rel (0) target = $region13
  $region12: #{_lambda_.18} parent=0 // pred_region
    _
  $region13: #{_lambda_.18} parent=0 // pred_fallthru
    _
  %p14 = scmp.eq.s32.totalorder 0, 0
  // Predicated region
  $region14: #{_lambda_.18} parent=0 // pred_check
    %p15 = pneg %p14
  $region15: #{_lambda_.18} parent=0 // pred_check_branch
    %17 = sbr.rel (%p15) target = $region17
  $region16: #{_lambda_.18} parent=0 // pred_region
    %18 = vst [vmem:[#allocation2] sm:$0xff] 0.0
    %19 = vst [vmem:[#allocation2 + $0x8] sm:$0xff] 0.0
    %20 = vst [vmem:[#allocation2 + $0x10] sm:$0xff] 0.0
    %21 = vst [vmem:[#allocation2 + $0x18] sm:$0xff] 0.0
    %22 = vst [vmem:[#allocation2 + $0x20] sm:$0xff] 0.0
    %23 = vst [vmem:[#allocation2 + $0x28] sm:$0xff] 0.0
    %24 = vst [vmem:[#allocation2 + $0x30] sm:$0xff] 0.0
    %25 = vst [vmem:[#allocation2 + $0x38] sm:$0xff] 0.0
  $region17: #{_lambda_.18} parent=0 // pred_fallthru
    _
  %v26 = vld [vmem:[#allocation2] sm:$0xff]
  %v27 = vld [vmem:[#allocation2 + $0x8] sm:$0xff]
  %v28 = vld [vmem:[#allocation2 + $0x10] sm:$0xff]
  %v29 = vld [vmem:[#allocation2 + $0x18] sm:$0xff]
  %v30 = vld [vmem:[#allocation2 + $0x20] sm:$0xff]
  %v31 = vld [vmem:[#allocation2 + $0x28] sm:$0xff]
  %v32 = vld [vmem:[#allocation2 + $0x30] sm:$0xff]
  %v33 = vld [vmem:[#allocation2 + $0x38] sm:$0xff]
  %v34 = vld [vmem:[%s0] sm:$0xff]
  %v35 = vld [vmem:[%s0 + $0x8] sm:$0xf]
  %v36 = vld [vmem:[%s0 + $0xc] sm:$0xff]
  %v37 = vld [vmem:[%s0 + $0x14] sm:$0xf]
  %v38 = vld [vmem:[%s0 + $0x18] sm:$0xff]
  %v39 = vld [vmem:[%s0 + $0x20] sm:$0xf]
  %v40 = vld [vmem:[%s0 + $0x24] sm:$0xff]
  %v41 = vld [vmem:[%s0 + $0x2c] sm:$0xf]
  %v42 = vld [vmem:[%s0 + $0x30] sm:$0xff]
  %v43 = vld [vmem:[%s0 + $0x38] sm:$0xf]
  %v44 = vld [vmem:[%s0 + $0x3c] sm:$0xff]
  %v45 = vld [vmem:[%s0 + $0x44] sm:$0xf]
  %v46 = vld [vmem:[%s0 + $0x48] sm:$0xff]
  %v47 = vld [vmem:[%s0 + $0x50] sm:$0xf]
  %v48 = vld [vmem:[%s0 + $0x54] sm:$0xff]
  %v49 = vld [vmem:[%s0 + $0x5c] sm:$0xf]
  %v50 = vld [vmem:[%s2] sm:$0xf]
  %v51 = vld [vmem:[%s2 + $0x4] sm:$0xf]
  %v52 = vld [vmem:[%s2 + $0x8] sm:$0xf]
  %v53 = vld [vmem:[%s2 + $0xc] sm:$0xf]
  %v54 = vld [vmem:[%s2 + $0x10] sm:$0xf]
  %v55 = vld [vmem:[%s2 + $0x14] sm:$0xf]
  %v56 = vld [vmem:[%s2 + $0x18] sm:$0xf]
  %v57 = vld [vmem:[%s2 + $0x1c] sm:$0xf]
  %v58 = vld [vmem:[%s2 + $0x20] sm:$0xf]
  %v59 = vld [vmem:[%s2 + $0x24] sm:$0xf]
  %v60 = vld [vmem:[%s2 + $0x28] sm:$0xf]
  %v61 = vld [vmem:[%s2 + $0x2c] sm:$0xf]
  %v62 = vld [vmem:[%s2 + $0x30] sm:$0xf]
  %v63 = vld [vmem:[%s2 + $0x34] sm:$0xf]
  %v64 = vld [vmem:[%s2 + $0x38] sm:$0xf]
  %v65 = vld [vmem:[%s2 + $0x3c] sm:$0xf]
  %v66 = vld [vmem:[%s2 + $0x40] sm:$0xf]
  %v67 = vld [vmem:[%s2 + $0x44] sm:$0xf]
  %v68 = vld [vmem:[%s2 + $0x48] sm:$0xf]
  %v69 = vld [vmem:[%s2 + $0x4c] sm:$0xf]
  %v70 = vld [vmem:[%s2 + $0x50] sm:$0xf]
  %v71 = vld [vmem:[%s2 + $0x54] sm:$0xf]
  %v72 = vld [vmem:[%s2 + $0x58] sm:$0xf]
  %v73 = vld [vmem:[%s2 + $0x5c] sm:$0xf]
  %v74 = vld [vmem:[%s2 + $0x60] sm:$0xf]
  %v75 = vld [vmem:[%s2 + $0x64] sm:$0xf]
  %v76 = vld [vmem:[%s2 + $0x68] sm:$0xf]
  %v77 = vld [vmem:[%s2 + $0x6c] sm:$0xf]
  %v78 = vld [vmem:[%s2 + $0x70] sm:$0xf]
  %v79 = vld [vmem:[%s2 + $0x74] sm:$0xf]
  %v80 = vld [vmem:[%s2 + $0x78] sm:$0xf]
  %v81 = vld [vmem:[%s2 + $0x7c] sm:$0xf]
  %v82 = vld [vmem:[%s2 + $0x80] sm:$0xf]
  %v83 = vld [vmem:[%s2 + $0x84] sm:$0xf]
  %v84 = vld [vmem:[%s2 + $0x88] sm:$0xf]
  %v85 = vld [vmem:[%s2 + $0x8c] sm:$0xf]
  %v86 = vld [vmem:[%s2 + $0x90] sm:$0xf]
  %v87 = vld [vmem:[%s2 + $0x94] sm:$0xf]
  %v88 = vld [vmem:[%s2 + $0x98] sm:$0xf]
  %v89 = vld [vmem:[%s2 + $0x9c] sm:$0xf]
  %v90 = vld [vmem:[%s2 + $0xa0] sm:$0xf]
  %v91 = vld [vmem:[%s2 + $0xa4] sm:$0xf]
  %v92 = vld [vmem:[%s2 + $0xa8] sm:$0xf]
  %v93 = vld [vmem:[%s2 + $0xac] sm:$0xf]
  %v94 = vld [vmem:[%s2 + $0xb0] sm:$0xf]
  %v95 = vld [vmem:[%s2 + $0xb4] sm:$0xf]
  %v96 = vld [vmem:[%s2 + $0xb8] sm:$0xf]
  %v97 = vld [vmem:[%s2 + $0xbc] sm:$0xf]
  %v114 = vunpack.c.l.b16 %v34
  %v115 = vunpack.c.h.b16 %v34
  %v116 = vunpack.c.l.b16 %v35
  %v117 = vunpack.c.l.b16 %v36
  %v118 = vunpack.c.h.b16 %v36
  %v119 = vunpack.c.l.b16 %v37
  %v120 = vunpack.c.l.b16 %v38
  %v121 = vunpack.c.h.b16 %v38
  %v122 = vunpack.c.l.b16 %v39
  %v123 = vunpack.c.l.b16 %v40
  %v124 = vunpack.c.h.b16 %v40
  %v125 = vunpack.c.l.b16 %v41
  %v126 = vunpack.c.l.b16 %v42
  %v127 = vunpack.c.h.b16 %v42
  %v128 = vunpack.c.l.b16 %v43
  %v129 = vunpack.c.l.b16 %v44
  %v130 = vunpack.c.h.b16 %v44
  %v131 = vunpack.c.l.b16 %v45
  %v132 = vunpack.c.l.b16 %v46
  %v133 = vunpack.c.h.b16 %v46
  %v134 = vunpack.c.l.b16 %v47
  %v135 = vunpack.c.l.b16 %v48
  %v136 = vunpack.c.h.b16 %v48
  %v137 = vunpack.c.l.b16 %v49
  %v138 = vpack.c.b16 %v117, %v114
  %v139 = vpack.c.b16 %v118, %v115
  %v140 = vpack.c.b16 %v119, %v116
  %v141 = vpack.c.b16 %v123, %v120
  %v142 = vpack.c.b16 %v124, %v121
  %v143 = vpack.c.b16 %v125, %v122
  %v144 = vpack.c.b16 %v129, %v126
  %v145 = vpack.c.b16 %v130, %v127
  %v146 = vpack.c.b16 %v131, %v128
  %v147 = vpack.c.b16 %v135, %v132
  %v148 = vpack.c.b16 %v136, %v133
  %v149 = vpack.c.b16 %v137, %v134
  %v210 = vunpack.c.l.b16 %v50
  %v211 = vunpack.c.l.b16 %v51
  %v212 = vunpack.c.l.b16 %v52
  %v213 = vunpack.c.l.b16 %v53
  %v214 = vunpack.c.l.b16 %v54
  %v215 = vunpack.c.l.b16 %v55
  %v216 = vunpack.c.l.b16 %v56
  %v217 = vunpack.c.l.b16 %v57
  %v218 = vunpack.c.l.b16 %v58
  %v219 = vunpack.c.l.b16 %v59
  %v220 = vunpack.c.l.b16 %v60
  %v221 = vunpack.c.l.b16 %v61
  %v222 = vunpack.c.l.b16 %v62
  %v223 = vunpack.c.l.b16 %v63
  %v224 = vunpack.c.l.b16 %v64
  %v225 = vunpack.c.l.b16 %v65
  %v226 = vunpack.c.l.b16 %v66
  %v227 = vunpack.c.l.b16 %v67
  %v228 = vunpack.c.l.b16 %v68
  %v229 = vunpack.c.l.b16 %v69
  %v230 = vunpack.c.l.b16 %v70
  %v231 = vunpack.c.l.b16 %v71
  %v232 = vunpack.c.l.b16 %v72
  %v233 = vunpack.c.l.b16 %v73
  %v234 = vunpack.c.l.b16 %v74
  %v235 = vunpack.c.l.b16 %v75
  %v236 = vunpack.c.l.b16 %v76
  %v237 = vunpack.c.l.b16 %v77
  %v238 = vunpack.c.l.b16 %v78
  %v239 = vunpack.c.l.b16 %v79
  %v240 = vunpack.c.l.b16 %v80
  %v241 = vunpack.c.l.b16 %v81
  %v242 = vunpack.c.l.b16 %v82
  %v243 = vunpack.c.l.b16 %v83
  %v244 = vunpack.c.l.b16 %v84
  %v245 = vunpack.c.l.b16 %v85
  %v246 = vunpack.c.l.b16 %v86
  %v247 = vunpack.c.l.b16 %v87
  %v248 = vunpack.c.l.b16 %v88
  %v249 = vunpack.c.l.b16 %v89
  %v250 = vunpack.c.l.b16 %v90
  %v251 = vunpack.c.l.b16 %v91
  %v252 = vunpack.c.l.b16 %v92
  %v253 = vunpack.c.l.b16 %v93
  %v254 = vunpack.c.l.b16 %v94
  %v255 = vunpack.c.l.b16 %v95
  %v256 = vunpack.c.l.b16 %v96
  %v257 = vunpack.c.l.b16 %v97
  %v258 = vpack.c.b16 %v211, %v210
  %v259 = vpack.c.b16 %v213, %v212
  %v260 = vpack.c.b16 %v215, %v214
  %v261 = vpack.c.b16 %v217, %v216
  %v262 = vpack.c.b16 %v219, %v218
  %v263 = vpack.c.b16 %v221, %v220
  %v264 = vpack.c.b16 %v223, %v222
  %v265 = vpack.c.b16 %v225, %v224
  %v266 = vpack.c.b16 %v227, %v226
  %v267 = vpack.c.b16 %v229, %v228
  %v268 = vpack.c.b16 %v231, %v230
  %v269 = vpack.c.b16 %v233, %v232
  %v270 = vpack.c.b16 %v235, %v234
  %v271 = vpack.c.b16 %v237, %v236
  %v272 = vpack.c.b16 %v239, %v238
  %v273 = vpack.c.b16 %v241, %v240
  %v274 = vpack.c.b16 %v243, %v242
  %v275 = vpack.c.b16 %v245, %v244
  %v276 = vpack.c.b16 %v247, %v246
  %v277 = vpack.c.b16 %v249, %v248
  %v278 = vpack.c.b16 %v251, %v250
  %v279 = vpack.c.b16 %v253, %v252
  %v280 = vpack.c.b16 %v255, %v254
  %v281 = vpack.c.b16 %v257, %v256
  %306 = vmatpush.bf16.msra.mxu0 %v265
  %307 = vmatpush.bf16.msra.mxu0 %v264
  %308 = vmatpush.bf16.msra.mxu0 %v263
  %309 = vmatpush.bf16.msra.mxu0 %v262
  %310 = vmatpush.bf16.msra.mxu0 %v261
  %311 = vmatpush.bf16.msra.mxu0 %v260
  %312 = vmatpush.bf16.msra.mxu0 %v259
  %313 = vmatpush.bf16.msra.mxu0 %v258
  %314 = vmatmul.bf16.gmra.mxu0 %v138
  %v315 = vpop.f32.mrf.mxu0
  %v316 = vadd.f32 0.0, %v315
  %v317 = vpop.f32.mrf.mxu0
  %v318 = vadd.f32 0.0, %v317
  %319 = vmatmul.bf16.gmra.mxu0 %v141
  %v320 = vpop.f32.mrf.mxu0
  %v321 = vadd.f32 0.0, %v320
  %v322 = vpop.f32.mrf.mxu0
  %v323 = vadd.f32 0.0, %v322
  %324 = vmatmul.bf16.gmra.mxu0 %v144
  %v325 = vpop.f32.mrf.mxu0
  %v326 = vadd.f32 0.0, %v325
  %v327 = vpop.f32.mrf.mxu0
  %v328 = vadd.f32 0.0, %v327
  %329 = vmatmul.bf16.gmra.mxu0 %v147
  %v330 = vpop.f32.mrf.mxu0
  %v331 = vadd.f32 0.0, %v330
  %v332 = vpop.f32.mrf.mxu0
  %v333 = vadd.f32 0.0, %v332
  %334 = vdwg.mxu0
  %335 = vmatpush.bf16.msra.mxu0 %v273
  %336 = vmatpush.bf16.msra.mxu0 %v272
  %337 = vmatpush.bf16.msra.mxu0 %v271
  %338 = vmatpush.bf16.msra.mxu0 %v270
  %339 = vmatpush.bf16.msra.mxu0 %v269
  %340 = vmatpush.bf16.msra.mxu0 %v268
  %341 = vmatpush.bf16.msra.mxu0 %v267
  %342 = vmatpush.bf16.msra.mxu0 %v266
  %343 = vmatmul.bf16.gmra.mxu0 %v139
  %v344 = vpop.f32.mrf.mxu0
  %v345 = vadd.f32 %v316, %v344
  %v346 = vpop.f32.mrf.mxu0
  %v347 = vadd.f32 %v318, %v346
  %348 = vmatmul.bf16.gmra.mxu0 %v142
  %v349 = vpop.f32.mrf.mxu0
  %v350 = vadd.f32 %v321, %v349
  %v351 = vpop.f32.mrf.mxu0
  %v352 = vadd.f32 %v323, %v351
  %353 = vmatmul.bf16.gmra.mxu0 %v145
  %v354 = vpop.f32.mrf.mxu0
  %v355 = vadd.f32 %v326, %v354
  %v356 = vpop.f32.mrf.mxu0
  %v357 = vadd.f32 %v328, %v356
  %358 = vmatmul.bf16.gmra.mxu0 %v148
  %v359 = vpop.f32.mrf.mxu0
  %v360 = vadd.f32 %v331, %v359
  %v361 = vpop.f32.mrf.mxu0
  %v362 = vadd.f32 %v333, %v361
  %363 = vdwg.mxu0
  %364 = vmatpush.bf16.msra.mxu0 %v281
  %365 = vmatpush.bf16.msra.mxu0 %v280
  %366 = vmatpush.bf16.msra.mxu0 %v279
  %367 = vmatpush.bf16.msra.mxu0 %v278
  %368 = vmatpush.bf16.msra.mxu0 %v277
  %369 = vmatpush.bf16.msra.mxu0 %v276
  %370 = vmatpush.bf16.msra.mxu0 %v275
  %371 = vmatpush.bf16.msra.mxu0 %v274
  %372 = vmatmul.bf16.gmra.mxu0 %v140
  %v373 = vpop.f32.mrf.mxu0
  %v374 = vadd.f32 %v345, %v373
  %v375 = vpop.f32.mrf.mxu0
  %v376 = vadd.f32 %v347, %v375
  %377 = vmatmul.bf16.gmra.mxu0 %v143
  %v378 = vpop.f32.mrf.mxu0
  %v379 = vadd.f32 %v350, %v378
  %v380 = vpop.f32.mrf.mxu0
  %v381 = vadd.f32 %v352, %v380
  %382 = vmatmul.bf16.gmra.mxu0 %v146
  %v383 = vpop.f32.mrf.mxu0
  %v384 = vadd.f32 %v355, %v383
  %v385 = vpop.f32.mrf.mxu0
  %v386 = vadd.f32 %v357, %v385
  %387 = vmatmul.bf16.gmra.mxu0 %v149
  %v388 = vpop.f32.mrf.mxu0
  %v389 = vadd.f32 %v360, %v388
  %v390 = vpop.f32.mrf.mxu0
  %v391 = vadd.f32 %v362, %v390
  %392 = vdwg.mxu0
  %v393 = vadd.f32 %v26, %v374
  %v394 = vadd.f32 %v27, %v376
  %v395 = vadd.f32 %v28, %v379
  %v396 = vadd.f32 %v29, %v381
  %v397 = vadd.f32 %v30, %v384
  %v398 = vadd.f32 %v31, %v386
  %v399 = vadd.f32 %v32, %v389
  %v400 = vadd.f32 %v33, %v391
  %401 = vst [vmem:[#allocation2] sm:$0xff] %v393
  %402 = vst [vmem:[#allocation2 + $0x8] sm:$0xff] %v394
  %403 = vst [vmem:[#allocation2 + $0x10] sm:$0xff] %v395
  %404 = vst [vmem:[#allocation2 + $0x18] sm:$0xff] %v396
  %405 = vst [vmem:[#allocation2 + $0x20] sm:$0xff] %v397
  %406 = vst [vmem:[#allocation2 + $0x28] sm:$0xff] %v398
  %407 = vst [vmem:[#allocation2 + $0x30] sm:$0xff] %v399
  %408 = vst [vmem:[#allocation2 + $0x38] sm:$0xff] %v400
  // Predicated region
  $region18: #{_lambda_.18} parent=0 // pred_check
    %p409 = pneg %p14
  $region19: #{_lambda_.18} parent=0 // pred_check_branch
    %411 = sbr.rel (%p409) target = $region21
  $region20: #{_lambda_.18} parent=0 // pred_region
    %v412 = vld [vmem:[#allocation2] sm:$0xff]
    %v413 = vld [vmem:[#allocation2 + $0x8] sm:$0xff]
    %v414 = vld [vmem:[#allocation2 + $0x10] sm:$0xff]
    %v415 = vld [vmem:[#allocation2 + $0x18] sm:$0xff]
    %v416 = vld [vmem:[#allocation2 + $0x20] sm:$0xff]
    %v417 = vld [vmem:[#allocation2 + $0x28] sm:$0xff]
    %v418 = vld [vmem:[#allocation2 + $0x30] sm:$0xff]
    %v419 = vld [vmem:[#allocation2 + $0x38] sm:$0xff]
    %v420 = vld [vmem:[%s1] sm:$0xff]
    %v421 = vld [vmem:[%s1 + $0x8] sm:$0xff]
    %v422 = vld [vmem:[%s1 + $0x10] sm:$0xff]
    %v423 = vld [vmem:[%s1 + $0x18] sm:$0xff]
    %v424 = vld [vmem:[%s1 + $0x20] sm:$0xff]
    %v425 = vld [vmem:[%s1 + $0x28] sm:$0xff]
    %v426 = vld [vmem:[%s1 + $0x30] sm:$0xff]
    %v427 = vld [vmem:[%s1 + $0x38] sm:$0xff]
    %429 = vset.pattern.permute.xlu0 0
    %430 = vperm.xlu0 %429, %v420
    %v431 = vpop.permute.xlu0 %430
    %434 = vset.pattern.permute.xlu0 0
    %435 = vperm.xlu0 %434, %v421
    %v436 = vpop.permute.xlu0 %435
    %439 = vset.pattern.permute.xlu0 0
    %440 = vperm.xlu0 %439, %v422
    %v441 = vpop.permute.xlu0 %440
    %444 = vset.pattern.permute.xlu0 0
    %445 = vperm.xlu0 %444, %v423
    %v446 = vpop.permute.xlu0 %445
    %449 = vset.pattern.permute.xlu0 0
    %450 = vperm.xlu0 %449, %v424
    %v451 = vpop.permute.xlu0 %450
    %454 = vset.pattern.permute.xlu0 0
    %455 = vperm.xlu0 %454, %v425
    %v456 = vpop.permute.xlu0 %455
    %459 = vset.pattern.permute.xlu0 0
    %460 = vperm.xlu0 %459, %v426
    %v461 = vpop.permute.xlu0 %460
    %464 = vset.pattern.permute.xlu0 0
    %465 = vperm.xlu0 %464, %v427
    %v466 = vpop.permute.xlu0 %465
    %v468 = vadd.f32 %v412, %v431
    %v469 = vadd.f32 %v413, %v436
    %v470 = vadd.f32 %v414, %v441
    %v471 = vadd.f32 %v415, %v446
    %v472 = vadd.f32 %v416, %v451
    %v473 = vadd.f32 %v417, %v456
    %v474 = vadd.f32 %v418, %v461
    %v475 = vadd.f32 %v419, %v466
    %vm476 = vcmp.gt.f32.partialorder %v468, 0.0
    %vm477 = vcmp.gt.f32.partialorder %v469, 0.0
    %vm478 = vcmp.gt.f32.partialorder %v470, 0.0
    %vm479 = vcmp.gt.f32.partialorder %v471, 0.0
    %vm480 = vcmp.gt.f32.partialorder %v472, 0.0
    %vm481 = vcmp.gt.f32.partialorder %v473, 0.0
    %vm482 = vcmp.gt.f32.partialorder %v474, 0.0
    %vm483 = vcmp.gt.f32.partialorder %v475, 0.0
    %v484 = vmul.f32 %v468, 0.2
    %v485 = vmul.f32 %v469, 0.2
    %v486 = vmul.f32 %v470, 0.2
    %v487 = vmul.f32 %v471, 0.2
    %v488 = vmul.f32 %v472, 0.2
    %v489 = vmul.f32 %v473, 0.2
    %v490 = vmul.f32 %v474, 0.2
    %v491 = vmul.f32 %v475, 0.2
    %v492 = vsel %vm476, %v468, %v484
    %v493 = vsel %vm477, %v469, %v485
    %v494 = vsel %vm478, %v470, %v486
    %v495 = vsel %vm479, %v471, %v487
    %v496 = vsel %vm480, %v472, %v488
    %v497 = vsel %vm481, %v473, %v489
    %v498 = vsel %vm482, %v474, %v490
    %v499 = vsel %vm483, %v475, %v491
    %v500 = vpack.c.bf16 %v492, %v492
    %v501 = vpack.c.bf16 %v493, %v493
    %v502 = vpack.c.bf16 %v494, %v494
    %v503 = vpack.c.bf16 %v495, %v495
    %v504 = vpack.c.bf16 %v496, %v496
    %v505 = vpack.c.bf16 %v497, %v497
    %v506 = vpack.c.bf16 %v498, %v498
    %v507 = vpack.c.bf16 %v499, %v499
    %508 = vst [vmem:[%s3] sm:$0xf] %v500
    %509 = vst [vmem:[%s3 + $0x4] sm:$0xf] %v501
    %510 = vst [vmem:[%s3 + $0x8] sm:$0xf] %v502
    %511 = vst [vmem:[%s3 + $0xc] sm:$0xf] %v503
    %512 = vst [vmem:[%s3 + $0x10] sm:$0xf] %v504
    %513 = vst [vmem:[%s3 + $0x14] sm:$0xf] %v505
    %514 = vst [vmem:[%s3 + $0x18] sm:$0xf] %v506
    %515 = vst [vmem:[%s3 + $0x1c] sm:$0xf] %v507
  $region21: #{_lambda_.18} parent=0 // pred_fallthru
    _
  // Predicated region
  $region22: #{_lambda_.18} parent=0 // pred_check
    _
  $region23: #{_lambda_.18} parent=0 // pred_check_branch
    %517 = sbr.rel (0) target = $region25
  $region24: #{_lambda_.18} parent=0 // pred_region
    _
  $region25: #{_lambda_.18} parent=0 // pred_fallthru
    _
  // Predicated region
  $region26: #{_lambda_.18} parent=0 // pred_check
    _
  $region27: #{_lambda_.18} parent=0 // pred_check_branch
    %519 = sbr.rel (0) target = $region29
  $region28: #{_lambda_.18} parent=0 // pred_region
    _
  $region29: #{_lambda_.18} parent=0 // pred_fallthru
    _

// kernel: tile.16
$region0: #{tile.16}
  #allocation0 [shape = 's32[1]{0}', space=sflag, size = 0x4, scoped, tag = 'scoped memory for tile.16']
  %s0 = inlined_call_operand.vmem [shape: f32[8], index: 0, kind: input, shape index: {}]
  %s1 = inlined_call_operand.vmem [shape: f32[4,8], index: 1, kind: output, shape index: {}]
  // Predicated region
  $region2: #{tile.16} parent=0 // pred_check
    _
  $region3: #{tile.16} parent=0 // pred_check_branch
    %3 = sbr.rel (0) target = $region5
  $region4: #{tile.16} parent=0 // pred_region
    _
  $region5: #{tile.16} parent=0 // pred_fallthru
    _
  %v4 = vld [vmem:[%s0] ss:$0 sm:$0xff]
  %5 = vst [vmem:[%s1] sm:$0xf] %v4

// kernel: mul.39
$region0: #{mul.39}
  %s0 = inlined_call_operand.vmem [shape: f32[4,8], index: 0, kind: input, shape index: {}]
  %s1 = inlined_call_operand.vmem [shape: f32[32], index: 1, kind: output, shape index: {}]
  $region1: #{mul.39} parent=0
    #allocation0 [shape = 'u8[4096]{0}', space=vmem, size = 0x1000, scoped, tag = 'scoped mem for output reshape']
    #allocation1 [shape = 'u8[4096]{0}', space=vmem, size = 0x1000, scoped, tag = 'scoped mem for input reshape']
    %s3 = ssub.s32 16, 1
    %v4 = vld [vmem:[%s0] sm:%s3]
    %5 = vst [vmem:[#allocation1] sm:%s3] %v4
    %v6 = vld [vmem:[#allocation1] sm:$0x1]
    %vm7 = vcmask 64512
    %8 = vst.msk [vmem:[#allocation0] sm:$0x1] %vm7, %v6
    %s9 = scalar_lea.vmem [#allocation1], 3
    %v10 = vld [vmem:[%s9] sm:$0x1]
    %11 = vrot.lane.b32.xlu0 %v10, 24
    %v12 = vpop.permute.xlu0 %11
    %vm13 = vcmask 261312
    %14 = vst.msk [vmem:[#allocation0] sm:$0x1] %vm13, %v12
    %s15 = scalar_lea.vmem [#allocation1], 2
    %v16 = vld [vmem:[%s15] sm:$0x1]
    %17 = vrot.lane.b32.xlu0 %v16, 16
    %v18 = vpop.permute.xlu0 %17
    %vm19 = vcmask 195712
    %20 = vst.msk [vmem:[#allocation0] sm:$0x1] %vm19, %v18
    %s21 = scalar_lea.vmem [#allocation1], 1
    %v22 = vld [vmem:[%s21] sm:$0x1]
    %23 = vrot.lane.b32.xlu0 %v22, 8
    %v24 = vpop.permute.xlu0 %23
    %vm25 = vcmask 130112
    %26 = vst.msk [vmem:[#allocation0] sm:$0x1] %vm25, %v24
    %s28 = ssub.s32 2, 1
    %v29 = vld [vmem:[#allocation0] sm:%s28]
    %s31 = ssub.s32 2, 1
    %32 = vst [vmem:[%s1] sm:%s31] %v29

// kernel: _lambda_.20
$region0: #{_lambda_.20}
  #allocation0 [shape = 'u32[]', space=smem, size = 0x4, offset = 0x4, fixed_abs, tag = 'smem constant byte address 0x4 - core index']
  #allocation1 [shape = 'u32[72,128]{1,0:T(1,128)}', space=vmem, size = 0x9000, scoped, tag = 'internal scratch']
  #allocation2 [shape = 'f32[16,256]{1,0:T(8,128)}', space=vmem, size = 0x4000, scoped, tag = 'scratch operand']
  %s0 = inlined_call_operand.vmem [shape: bf16[16,128], index: 0, kind: input, shape index: {}]
  %s1 = inlined_call_operand.vmem [shape: f32[16,1], index: 1, kind: input, shape index: {}]
  %s2 = inlined_call_operand.vmem [shape: bf16[128,512], index: 2, kind: input, shape index: {}]
  %s3 = inlined_call_operand.vmem [shape: f32[16,512], index: 3, kind: output, shape index: {}]
  %s4 = sld [smem:[#allocation0]]
  $region110: #{_lambda_.20} parent=0
    _
  %s6 = ssub.s32 1, %s4
  %s7 = scalar_select 0, %s6, %s4
  $region1: #{_lambda_.20} parent=0
    #allocation3 [shape = 'u8[131072]{0}', space=vmem, size = 0x20000, scoped, tag = 'input window, operand 2']
    #allocation4 [shape = 'u8[32768]{0}', space=vmem, size = 0x8000, scoped, tag = 'output window, operand 0']
    loop: start=0, step=1, limit=4
    $region2: #{_lambda_.20} parent=1 // loop_pre_header
      _
    $region3: #{_lambda_.20} parent=1 // loop_header
      %s9 = sphi 0, %s13
      %p10 = scmp.ge.s32.totalorder %s9, 4
      %s16 = sphi 0, %s28
      %s17 = sphi 0, %s24
      %s18 = sphi 0, %s16
      %s19 = sphi 0, %s17
      %s20 = sphi 0, %s18
      %s21 = sphi 0, %s19
      %s31 = sphi 0, %s33
      %s34 = sphi 0, %s31
      %s35 = sphi 0, %s34
      %s51 = sphi 0, %s35
      %s55 = sphi 0, %s55
      %s57 = sphi 0, %s55
      %s58 = sphi 0, %s57
      %s72 = sphi 0, %s58
      %s80 = sphi 0, %s82
      %s83 = sphi 0, %s80
      %s84 = sphi 0, %s83
      %s100 = sphi 0, %s84
      %s106 = sphi 0, %s108
      %s109 = sphi 0, %s106
      %s110 = sphi 0, %s109
      %s126 = sphi 0, %s110
    $region4: #{_lambda_.20} parent=1 // loop_header_branch
      %12 = sbr.rel (%p10) target = $region8
    $region5: #{_lambda_.20} parent=1 // loop_body
      %s14 = ssub.s32 %s9, 1
      %s15 = ssub.s32 %s9, 2
      %s22 = sadd.s32 1, %s17
      %p23 = scmp.ge.s32.totalorder %s22, 1
      %s24 = scalar_select %p23, 0, %s22
      %s25 = sadd.s32 1, %s16
      %s26 = scalar_select %p23, %s25, %s16
      %p27 = scmp.ge.s32.totalorder %s26, 2
      %s28 = scalar_select %p27, 0, %s26
      %s29 = ssub.s32 %s17, %s24
      %p30 = scmp.eq.s32.totalorder %s29, 0
      %s32 = sadd.s32 %s31, 1
      %s33 = scalar_select %p30, %s31, %s32
      %p36 = pneg %p30
      %p37 = scmp.eq.s32.totalorder %s9, 1
      %p38 = por %p36, %p37
      %p39 = scmp.ne.s32.totalorder %s31, %s34
      %p40 = scmp.eq.s32.totalorder %s9, 0
      %p41 = por %p39, %p40
      %p42 = scmp.ne.s32.totalorder %s31, %s34
      %p43 = scmp.eq.s32.totalorder %s14, 1
      %p44 = por %p42, %p43
      %p45 = scmp.ne.s32.totalorder %s34, %s35
      %p46 = scmp.eq.s32.totalorder %s14, 0
      %p47 = por %p45, %p46
      %p48 = scmp.ne.s32.totalorder %s34, %s35
      %p49 = scmp.eq.s32.totalorder %s15, 1
      %p50 = por %p48, %p49
      %p52 = scmp.ne.s32.totalorder %s35, %s51
      %p53 = scmp.eq.s32.totalorder %s15, 0
      %p54 = por %p52, %p53
      %s56 = sadd.s32 %s55, 1
      %p59 = scmp.eq.s32.totalorder %s9, 1
      %p60 = scmp.ne.s32.totalorder %s55, %s57
      %p61 = scmp.eq.s32.totalorder %s9, 0
      %p62 = por %p60, %p61
      %p63 = scmp.ne.s32.totalorder %s55, %s57
      %p64 = scmp.eq.s32.totalorder %s14, 1
      %p65 = por %p63, %p64
      %p66 = scmp.ne.s32.totalorder %s57, %s58
      %p67 = scmp.eq.s32.totalorder %s14, 0
      %p68 = por %p66, %p67
      %p69 = scmp.ne.s32.totalorder %s57, %s58
      %p70 = scmp.eq.s32.totalorder %s15, 1
      %p71 = por %p69, %p70
      %p73 = scmp.ne.s32.totalorder %s58, %s72
      %p74 = scmp.eq.s32.totalorder %s15, 0
      %p75 = por %p73, %p74
      %s76 = ssub.s32 %s17, %s24
      %s77 = ssub.s32 %s16, %s28
      %s78 = sor.u32 %s76, %s77
      %p79 = scmp.eq.s32.totalorder %s78, 0
      %s81 = sadd.s32 %s80, 1
      %s82 = scalar_select %p79, %s80, %s81
      %p85 = pneg %p79
      %p86 = scmp.eq.s32.totalorder %s9, 1
      %p87 = por %p85, %p86
      %p88 = scmp.ne.s32.totalorder %s80, %s83
      %p89 = scmp.eq.s32.totalorder %s9, 0
      %p90 = por %p88, %p89
      %p91 = scmp.ne.s32.totalorder %s80, %s83
      %p92 = scmp.eq.s32.totalorder %s14, 1
      %p93 = por %p91, %p92
      %p94 = scmp.ne.s32.totalorder %s83, %s84
      %p95 = scmp.eq.s32.totalorder %s14, 0
      %p96 = por %p94, %p95
      %p97 = scmp.ne.s32.totalorder %s83, %s84
      %p98 = scmp.eq.s32.totalorder %s15, 1
      %p99 = por %p97, %p98
      %p101 = scmp.ne.s32.totalorder %s84, %s100
      %p102 = scmp.eq.s32.totalorder %s15, 0
      %p103 = por %p101, %p102
      %s104 = ssub.s32 %s16, %s28
      %p105 = scmp.eq.s32.totalorder %s104, 0
      %s107 = sadd.s32 %s106, 1
      %s108 = scalar_select %p105, %s106, %s107
      %p111 = pneg %p105
      %p112 = scmp.eq.s32.totalorder %s9, 1
      %p113 = por %p111, %p112
      %p114 = scmp.ne.s32.totalorder %s106, %s109
      %p115 = scmp.eq.s32.totalorder %s9, 0
      %p116 = por %p114, %p115
      %p117 = scmp.ne.s32.totalorder %s106, %s109
      %p118 = scmp.eq.s32.totalorder %s14, 1
      %p119 = por %p117, %p118
      %p120 = scmp.ne.s32.totalorder %s109, %s110
      %p121 = scmp.eq.s32.totalorder %s14, 0
      %p122 = por %p120, %p121
      %p123 = scmp.ne.s32.totalorder %s109, %s110
      %p124 = scmp.eq.s32.totalorder %s15, 1
      %p125 = por %p123, %p124
      %p127 = scmp.ne.s32.totalorder %s110, %s126
      %p128 = scmp.eq.s32.totalorder %s15, 0
      %p129 = por %p127, %p128
      %p130 = scmp.le.s32.totalorder 1, %s9
      %p131 = scmp.lt.s32.totalorder %s9, 3
      %p132 = pnand %p130, %p131
      %p133 = pneg %p132
      // Predicated region
      $region9: #{_lambda_.20} parent=5 // pred_check
        _
      $region10: #{_lambda_.20} parent=5 // pred_check_branch
        %135 = sbr.rel (%p132) target = $region12
      $region11: #{_lambda_.20} parent=5 // pred_region
        %s136 = ssub.s32 %s9, 1
        // Predicated region
        $region13: #{_lambda_.20} parent=11 // pred_check
          %p137 = pneg %p47
        $region14: #{_lambda_.20} parent=11 // pred_check_branch
          %139 = sbr.rel (%p137) target = $region16
        $region15: #{_lambda_.20} parent=11 // pred_region
          %p140 = scmp.lt.s32.totalorder %s19, 0
          %s141 = scalar_select %p140, %s19, 0
          %s142 = smul.addr %s141, 4
          %s143 = scalar_lea.vmem %s0, %s142
        $region16: #{_lambda_.20} parent=11 // pred_fallthru
          _
        // Predicated region
        $region17: #{_lambda_.20} parent=11 // pred_check
          %p144 = pneg %p68
        $region18: #{_lambda_.20} parent=11 // pred_check_branch
          %146 = sbr.rel (%p144) target = $region20
        $region19: #{_lambda_.20} parent=11 // pred_region
          _
        $region20: #{_lambda_.20} parent=11 // pred_fallthru
          _
      $region12: #{_lambda_.20} parent=5 // pred_fallthru
        _
      %p147 = scmp.lt.s32.totalorder %s9, 2
      // Predicated region
      $region21: #{_lambda_.20} parent=5 // pred_check
        %p148 = pneg %p147
      $region22: #{_lambda_.20} parent=5 // pred_check_branch
        %150 = sbr.rel (%p148) target = $region24
      $region23: #{_lambda_.20} parent=5 // pred_region
        // Predicated region
        $region25: #{_lambda_.20} parent=23 // pred_check
          %p151 = pneg %p90
        $region26: #{_lambda_.20} parent=23 // pred_check_branch
          %153 = sbr.rel (%p151) target = $region28
        $region27: #{_lambda_.20} parent=23 // pred_region
          %s154 = sand.u32 %s80, 1
          %s155 = sand.u32 %s80, 1
          %s156 = smul.addr %s155, 128
          %s157 = scalar_lea.vmem [#allocation3], %s156
          %s158 = smul.u32 16, %s17
          %s159 = smul.u32 2, %s16
          %s160 = smul.addr %s158, 4
          %s161 = sadd.s32 %s159, %s160
          %s162 = smul.addr %s161, 4
          %s163 = scalar_lea.vmem %s2, %s162
          // Predicated region
          $region29: #{_lambda_.20} parent=27 // pred_check
            _
          $region30: #{_lambda_.20} parent=27 // pred_check_branch
            %165 = sbr.rel (0) target = $region32
          $region31: #{_lambda_.20} parent=27 // pred_region
            // Predicated region
            $region33: #{_lambda_.20} parent=31 // pred_check
              _
            $region34: #{_lambda_.20} parent=31 // pred_check_branch
              %167 = sbr.rel (0) target = $region36
            $region35: #{_lambda_.20} parent=31 // pred_region
              // Predicated region
              $region48: #{_lambda_.20} parent=35 // pred_check
                _
              $region49: #{_lambda_.20} parent=35 // pred_check_branch
                %213 = sbr.rel (0) target = $region51
              $region50: #{_lambda_.20} parent=35 // pred_region
                loop: start=0, step=1, limit=1
                $region52: #{_lambda_.20} parent=50 // loop_pre_header
                  _
                $region53: #{_lambda_.20} parent=50 // loop_header
                  %s215 = sphi 0, %s219
                  %p216 = scmp.ge.s32.totalorder %s215, 1
                  %s220 = sphi %s163, %s163
                  %s221 = sphi %s157, %s157
                $region54: #{_lambda_.20} parent=50 // loop_header_branch
                  %218 = sbr.rel (%p216) target = $region58
                $region55: #{_lambda_.20} parent=50 // loop_body
                  %v222 = vld [vmem:[%s220] sm:$0xff]
                  %223 = vst [vmem:[%s221] sm:$0xff] %v222
                  %v224 = vld [vmem:[%s220 + $0x10] sm:$0xff]
                  %225 = vst [vmem:[%s221 + $0x8] sm:$0xff] %v224
                  %v226 = vld [vmem:[%s220 + $0x20] sm:$0xff]
                  %227 = vst [vmem:[%s221 + $0x10] sm:$0xff] %v226
                  %v228 = vld [vmem:[%s220 + $0x30] sm:$0xff]
                  %229 = vst [vmem:[%s221 + $0x18] sm:$0xff] %v228
                  %v230 = vld [vmem:[%s220 + $0x40] sm:$0xff]
                  %231 = vst [vmem:[%s221 + $0x20] sm:$0xff] %v230
                  %v232 = vld [vmem:[%s220 + $0x50] sm:$0xff]
                  %233 = vst [vmem:[%s221 + $0x28] sm:$0xff] %v232
                  %v234 = vld [vmem:[%s220 + $0x60] sm:$0xff]
                  %235 = vst [vmem:[%s221 + $0x30] sm:$0xff] %v234
                  %v236 = vld [vmem:[%s220 + $0x70] sm:$0xff]
                  %237 = vst [vmem:[%s221 + $0x38] sm:$0xff] %v236
                  %v238 = vld [vmem:[%s220 + $0x80] sm:$0xff]
                  %239 = vst [vmem:[%s221 + $0x40] sm:$0xff] %v238
                  %v240 = vld [vmem:[%s220 + $0x90] sm:$0xff]
                  %241 = vst [vmem:[%s221 + $0x48] sm:$0xff] %v240
                  %v242 = vld [vmem:[%s220 + $0xa0] sm:$0xff]
                  %243 = vst [vmem:[%s221 + $0x50] sm:$0xff] %v242
                  %v244 = vld [vmem:[%s220 + $0xb0] sm:$0xff]
                  %245 = vst [vmem:[%s221 + $0x58] sm:$0xff] %v244
                  %v246 = vld [vmem:[%s220 + $0xc0] sm:$0xff]
                  %247 = vst [vmem:[%s221 + $0x60] sm:$0xff] %v246
                  %v248 = vld [vmem:[%s220 + $0xd0] sm:$0xff]
                  %249 = vst [vmem:[%s221 + $0x68] sm:$0xff] %v248
                  %v250 = vld [vmem:[%s220 + $0xe0] sm:$0xff]
                  %251 = vst [vmem:[%s221 + $0x70] sm:$0xff] %v250
                  %v252 = vld [vmem:[%s220 + $0xf0] sm:$0xff]
                  %253 = vst [vmem:[%s221 + $0x78] sm:$0xff] %v252
                $region56: #{_lambda_.20} parent=50 // loop_footer
                  %s219 = sadd.s32 1, %s215
                $region57: #{_lambda_.20} parent=50 // loop_footer_branch
                  %214 = sbr.rel target = $region53
                $region58: #{_lambda_.20} parent=50 // loop_exit
                  _
              $region51: #{_lambda_.20} parent=35 // pred_fallthru
                _
              // Predicated region
              $region59: #{_lambda_.20} parent=35 // pred_check
                _
              $region60: #{_lambda_.20} parent=35 // pred_check_branch
                %255 = sbr.rel target = $region62
              $region61: #{_lambda_.20} parent=35 // pred_region
                _
              $region62: #{_lambda_.20} parent=35 // pred_fallthru
                _
            $region36: #{_lambda_.20} parent=31 // pred_fallthru
              _
            // Predicated region
            $region37: #{_lambda_.20} parent=31 // pred_check
              _
            $region38: #{_lambda_.20} parent=31 // pred_check_branch
              %169 = sbr.rel target = $region40
            $region39: #{_lambda_.20} parent=31 // pred_region
              %s171 = ssub.s32 256, 1
              loop: start=0, step=1, limit=1
              $region41: #{_lambda_.20} parent=39 // loop_pre_header
                _
              $region42: #{_lambda_.20} parent=39 // loop_header
                %s173 = sphi 0, %s177
                %p174 = scmp.ge.s32.totalorder %s173, 1
                %s178 = sphi %s163, %s163
                %s179 = sphi %s157, %s157
              $region43: #{_lambda_.20} parent=39 // loop_header_branch
                %176 = sbr.rel (%p174) target = $region47
              $region44: #{_lambda_.20} parent=39 // loop_body
                %v180 = vld [vmem:[%s178] sm:%s171]
                %181 = vst [vmem:[%s179] sm:%s171] %v180
                %v182 = vld [vmem:[%s178 + $0x10] sm:%s171]
                %183 = vst [vmem:[%s179 + $0x8] sm:%s171] %v182
                %v184 = vld [vmem:[%s178 + $0x20] sm:%s171]
                %185 = vst [vmem:[%s179 + $0x10] sm:%s171] %v184
                %v186 = vld [vmem:[%s178 + $0x30] sm:%s171]
                %187 = vst [vmem:[%s179 + $0x18] sm:%s171] %v186
                %v188 = vld [vmem:[%s178 + $0x40] sm:%s171]
                %189 = vst [vmem:[%s179 + $0x20] sm:%s171] %v188
                %v190 = vld [vmem:[%s178 + $0x50] sm:%s171]
                %191 = vst [vmem:[%s179 + $0x28] sm:%s171] %v190
                %v192 = vld [vmem:[%s178 + $0x60] sm:%s171]
                %193 = vst [vmem:[%s179 + $0x30] sm:%s171] %v192
                %v194 = vld [vmem:[%s178 + $0x70] sm:%s171]
                %195 = vst [vmem:[%s179 + $0x38] sm:%s171] %v194
                %v196 = vld [vmem:[%s178 + $0x80] sm:%s171]
                %197 = vst [vmem:[%s179 + $0x40] sm:%s171] %v196
                %v198 = vld [vmem:[%s178 + $0x90] sm:%s171]
                %199 = vst [vmem:[%s179 + $0x48] sm:%s171] %v198
                %v200 = vld [vmem:[%s178 + $0xa0] sm:%s171]
                %201 = vst [vmem:[%s179 + $0x50] sm:%s171] %v200
                %v202 = vld [vmem:[%s178 + $0xb0] sm:%s171]
                %203 = vst [vmem:[%s179 + $0x58] sm:%s171] %v202
                %v204 = vld [vmem:[%s178 + $0xc0] sm:%s171]
                %205 = vst [vmem:[%s179 + $0x60] sm:%s171] %v204
                %v206 = vld [vmem:[%s178 + $0xd0] sm:%s171]
                %207 = vst [vmem:[%s179 + $0x68] sm:%s171] %v206
                %v208 = vld [vmem:[%s178 + $0xe0] sm:%s171]
                %209 = vst [vmem:[%s179 + $0x70] sm:%s171] %v208
                %v210 = vld [vmem:[%s178 + $0xf0] sm:%s171]
                %211 = vst [vmem:[%s179 + $0x78] sm:%s171] %v210
              $region45: #{_lambda_.20} parent=39 // loop_footer
                %s177 = sadd.s32 1, %s173
              $region46: #{_lambda_.20} parent=39 // loop_footer_branch
                %172 = sbr.rel target = $region42
              $region47: #{_lambda_.20} parent=39 // loop_exit
                _
            $region40: #{_lambda_.20} parent=31 // pred_fallthru
              _
          $region32: #{_lambda_.20} parent=27 // pred_fallthru
            _
          %256 = vnop
        $region28: #{_lambda_.20} parent=23 // pred_fallthru
          _
      $region24: #{_lambda_.20} parent=5 // pred_fallthru
        _
      %p257 = scmp.le.s32.totalorder 1, %s9
      %p258 = scmp.lt.s32.totalorder %s9, 3
      %p259 = pnand %p257, %p258
      %p260 = pneg %p259
      // Predicated region
      $region63: #{_lambda_.20} parent=5 // pred_check
        _
      $region64: #{_lambda_.20} parent=5 // pred_check_branch
        %262 = sbr.rel (%p259) target = $region66
      $region65: #{_lambda_.20} parent=5 // pred_region
        %s263 = ssub.s32 %s9, 1
        %s264 = sand.u32 %s83, 1
        %s265 = sand.u32 %s83, 1
        %s266 = smul.addr %s265, 128
        %s267 = scalar_lea.vmem [#allocation3], %s266
        // Predicated region
        $region67: #{_lambda_.20} parent=65 // pred_check
          %p268 = pneg %p96
        $region68: #{_lambda_.20} parent=65 // pred_check_branch
          %270 = sbr.rel (%p268) target = $region70
        $region69: #{_lambda_.20} parent=65 // pred_region
          _
        $region70: #{_lambda_.20} parent=65 // pred_fallthru
          _
        %p271 = scmp.lt.s32.totalorder %s19, 0
        %s272 = scalar_select %p271, %s19, 0
        %s273 = smul.addr %s272, 4
        %s274 = scalar_lea.vmem %s0, %s273
        %p275 = pneg %p47
        %p276 = pneg %p44
        %p277 = pneg %p68
        %p278 = pneg %p65
        %s279 = sand.u32 %s83, 1
        %s280 = sand.u32 %s83, 1
        %s281 = smul.addr %s280, 128
        %s282 = scalar_lea.vmem [#allocation3], %s281
        %p283 = pneg %p96
        %p284 = pneg %p93
        %p285 = pneg %p122
        %p286 = pneg %p119
        %s287 = sand.u32 %s109, 1
        %s288 = sand.u32 %s109, 1
        %s289 = smul.addr %s288, 32
        %s290 = scalar_lea.vmem [#allocation4], %s289
        %p291 = scmp.lt.s32.totalorder %s19, 0
        %s292 = scalar_select %p291, %s19, 0
        %s293 = smul.addr %s292, 4
        %s294 = scalar_lea.vmem %s0, %s293
        %s295 = smul.u32 16, %s19
        %s296 = smul.u32 2, %s18
        %s297 = smul.u32 2, %s18
        %p298 = scmp.eq.s32.totalorder %s19, 0
        // Predicated region
        $region71: #{_lambda_.20} parent=65 // pred_check
          %p299 = pneg %p298
        $region72: #{_lambda_.20} parent=65 // pred_check_branch
          %301 = sbr.rel (%p299) target = $region74
        $region73: #{_lambda_.20} parent=65 // pred_region
          %302 = vst [vmem:[#allocation2] sm:$0xff] 0.0
          %303 = vst [vmem:[#allocation2 + $0x8] sm:$0xff] 0.0
          %304 = vst [vmem:[#allocation2 + $0x10] sm:$0xff] 0.0
          %305 = vst [vmem:[#allocation2 + $0x18] sm:$0xff] 0.0
        $region74: #{_lambda_.20} parent=65 // pred_fallthru
          _
        %v306 = vld [vmem:[#allocation2] sm:$0xff]
        %v307 = vld [vmem:[#allocation2 + $0x8] sm:$0xff]
        %v308 = vld [vmem:[#allocation2 + $0x10] sm:$0xff]
        %v309 = vld [vmem:[#allocation2 + $0x18] sm:$0xff]
        %v310 = vld [vmem:[%s294] sm:$0xf]
        %v311 = vld [vmem:[%s294 + $0x4] sm:$0xf]
        %v312 = vld [vmem:[%s267] sm:$0xff]
        %v313 = vld [vmem:[%s267 + $0x8] sm:$0xff]
        %v314 = vld [vmem:[%s267 + $0x10] sm:$0xff]
        %v315 = vld [vmem:[%s267 + $0x18] sm:$0xff]
        %v316 = vld [vmem:[%s267 + $0x20] sm:$0xff]
        %v317 = vld [vmem:[%s267 + $0x28] sm:$0xff]
        %v318 = vld [vmem:[%s267 + $0x30] sm:$0xff]
        %v319 = vld [vmem:[%s267 + $0x38] sm:$0xff]
        %v320 = vld [vmem:[%s267 + $0x40] sm:$0xff]
        %v321 = vld [vmem:[%s267 + $0x48] sm:$0xff]
        %v322 = vld [vmem:[%s267 + $0x50] sm:$0xff]
        %v323 = vld [vmem:[%s267 + $0x58] sm:$0xff]
        %v324 = vld [vmem:[%s267 + $0x60] sm:$0xff]
        %v325 = vld [vmem:[%s267 + $0x68] sm:$0xff]
        %v326 = vld [vmem:[%s267 + $0x70] sm:$0xff]
        %v327 = vld [vmem:[%s267 + $0x78] sm:$0xff]
        %v330 = vunpack.c.l.b16 %v310
        %v331 = vunpack.c.l.b16 %v311
        %v332 = vpack.c.b16 %v331, %v330
        %v350 = vunpack.c.l.b16 %v312
        %v351 = vunpack.c.h.b16 %v312
        %v352 = vunpack.c.l.b16 %v313
        %v353 = vunpack.c.h.b16 %v313
        %v354 = vunpack.c.l.b16 %v314
        %v355 = vunpack.c.h.b16 %v314
        %v356 = vunpack.c.l.b16 %v315
        %v357 = vunpack.c.h.b16 %v315
        %v358 = vunpack.c.l.b16 %v316
        %v359 = vunpack.c.h.b16 %v316
        %v360 = vunpack.c.l.b16 %v317
        %v361 = vunpack.c.h.b16 %v317
        %v362 = vunpack.c.l.b16 %v318
        %v363 = vunpack.c.h.b16 %v318
        %v364 = vunpack.c.l.b16 %v319
        %v365 = vunpack.c.h.b16 %v319
        %v366 = vunpack.c.l.b16 %v320
        %v367 = vunpack.c.h.b16 %v320
        %v368 = vunpack.c.l.b16 %v321
        %v369 = vunpack.c.h.b16 %v321
        %v370 = vunpack.c.l.b16 %v322
        %v371 = vunpack.c.h.b16 %v322
        %v372 = vunpack.c.l.b16 %v323
        %v373 = vunpack.c.h.b16 %v323
        %v374 = vunpack.c.l.b16 %v324
        %v375 = vunpack.c.h.b16 %v324
        %v376 = vunpack.c.l.b16 %v325
        %v377 = vunpack.c.h.b16 %v325
        %v378 = vunpack.c.l.b16 %v326
        %v379 = vunpack.c.h.b16 %v326
        %v380 = vunpack.c.l.b16 %v327
        %v381 = vunpack.c.h.b16 %v327
        %v382 = vpack.c.b16 %v352, %v350
        %v383 = vpack.c.b16 %v353, %v351
        %v384 = vpack.c.b16 %v356, %v354
        %v385 = vpack.c.b16 %v357, %v355
        %v386 = vpack.c.b16 %v360, %v358
        %v387 = vpack.c.b16 %v361, %v359
        %v388 = vpack.c.b16 %v364, %v362
        %v389 = vpack.c.b16 %v365, %v363
        %v390 = vpack.c.b16 %v368, %v366
        %v391 = vpack.c.b16 %v369, %v367
        %v392 = vpack.c.b16 %v372, %v370
        %v393 = vpack.c.b16 %v373, %v371
        %v394 = vpack.c.b16 %v376, %v374
        %v395 = vpack.c.b16 %v377, %v375
        %v396 = vpack.c.b16 %v380, %v378
        %v397 = vpack.c.b16 %v381, %v379
        %414 = vmatpush.bf16.msra.mxu0 %v396
        %415 = vmatpush.bf16.msra.mxu0 %v394
        %416 = vmatpush.bf16.msra.mxu0 %v392
        %417 = vmatpush.bf16.msra.mxu0 %v390
        %418 = vmatpush.bf16.msra.mxu0 %v388
        %419 = vmatpush.bf16.msra.mxu0 %v386
        %420 = vmatpush.bf16.msra.mxu0 %v384
        %421 = vmatpush.bf16.msra.mxu0 %v382
        %422 = vmatmul.bf16.gmra.mxu0 %v332
        %v423 = vpop.f32.mrf.mxu0
        %v424 = vadd.f32 0.0, %v423
        %v425 = vpop.f32.mrf.mxu0
        %v426 = vadd.f32 0.0, %v425
        %427 = vdwg.mxu0
        %428 = vmatpush.bf16.msra.mxu0 %v397
        %429 = vmatpush.bf16.msra.mxu0 %v395
        %430 = vmatpush.bf16.msra.mxu0 %v393
        %431 = vmatpush.bf16.msra.mxu0 %v391
        %432 = vmatpush.bf16.msra.mxu0 %v389
        %433 = vmatpush.bf16.msra.mxu0 %v387
        %434 = vmatpush.bf16.msra.mxu0 %v385
        %435 = vmatpush.bf16.msra.mxu0 %v383
        %436 = vmatmul.bf16.gmra.mxu0 %v332
        %v437 = vpop.f32.mrf.mxu0
        %v438 = vadd.f32 0.0, %v437
        %v439 = vpop.f32.mrf.mxu0
        %v440 = vadd.f32 0.0, %v439
        %441 = vdwg.mxu0
        %v442 = vadd.f32 %v306, %v424
        %v443 = vadd.f32 %v307, %v438
        %v444 = vadd.f32 %v308, %v426
        %v445 = vadd.f32 %v309, %v440
        %446 = vst [vmem:[#allocation2] sm:$0xff] %v442
        %447 = vst [vmem:[#allocation2 + $0x8] sm:$0xff] %v443
        %448 = vst [vmem:[#allocation2 + $0x10] sm:$0xff] %v444
        %449 = vst [vmem:[#allocation2 + $0x18] sm:$0xff] %v445
        // Predicated region
        $region75: #{_lambda_.20} parent=65 // pred_check
          %p450 = pneg %p298
        $region76: #{_lambda_.20} parent=65 // pred_check_branch
          %452 = sbr.rel (%p450) target = $region78
        $region77: #{_lambda_.20} parent=65 // pred_region
          %v453 = vld [vmem:[#allocation2] sm:$0xff]
          %v454 = vld [vmem:[#allocation2 + $0x8] sm:$0xff]
          %v455 = vld [vmem:[#allocation2 + $0x10] sm:$0xff]
          %v456 = vld [vmem:[#allocation2 + $0x18] sm:$0xff]
          %v457 = vld [vmem:[%s1] sm:$0xff]
          %v458 = vld [vmem:[%s1 + $0x8] sm:$0xff]
          %460 = vset.pattern.permute.xlu0 0
          %461 = vperm.xlu0 %460, %v457
          %v462 = vpop.permute.xlu0 %461
          %465 = vset.pattern.permute.xlu0 0
          %466 = vperm.xlu0 %465, %v458
          %v467 = vpop.permute.xlu0 %466
          %v469 = vadd.f32 %v453, %v462
          %v470 = vadd.f32 %v454, %v462
          %v471 = vadd.f32 %v455, %v467
          %v472 = vadd.f32 %v456, %v467
          %v473 = vtanh.pop %v469
          %v474 = vtanh.pop %v470
          %v475 = vtanh.pop %v471
          %v476 = vtanh.pop %v472
          %477 = vst [vmem:[%s290] sm:$0xff] %v473
          %478 = vst [vmem:[%s290 + $0x8] sm:$0xff] %v474
          %479 = vst [vmem:[%s290 + $0x10] sm:$0xff] %v475
          %480 = vst [vmem:[%s290 + $0x18] sm:$0xff] %v476
        $region78: #{_lambda_.20} parent=65 // pred_fallthru
          _
        %s481 = sand.u32 %s109, 1
        %s482 = sand.u32 %s109, 1
        %s483 = smul.addr %s482, 32
        %s484 = scalar_lea.vmem [#allocation4], %s483
        // Predicated region
        $region79: #{_lambda_.20} parent=65 // pred_check
          %p485 = pneg %p119
        $region80: #{_lambda_.20} parent=65 // pred_check_branch
          %487 = sbr.rel (%p485) target = $region82
        $region81: #{_lambda_.20} parent=65 // pred_region
          %s488 = smul.u32 2, %s18
          %s489 = smul.addr %s488, 8
          %s490 = scalar_lea.vmem %s3, %s489
          // Predicated region
          $region83: #{_lambda_.20} parent=81 // pred_check
            _
          $region84: #{_lambda_.20} parent=81 // pred_check_branch
            %492 = sbr.rel (0) target = $region86
          $region85: #{_lambda_.20} parent=81 // pred_region
            // Predicated region
            $region87: #{_lambda_.20} parent=85 // pred_check
              _
            $region88: #{_lambda_.20} parent=85 // pred_check_branch
              %494 = sbr.rel (0) target = $region90
            $region89: #{_lambda_.20} parent=85 // pred_region
              loop: start=0, step=1, limit=1
              $region91: #{_lambda_.20} parent=89 // loop_pre_header
                _
              $region92: #{_lambda_.20} parent=89 // loop_header
                %s496 = sphi 0, %s500
                %p497 = scmp.ge.s32.totalorder %s496, 1
                %s501 = sphi %s484, %s484
                %s502 = sphi %s490, %s490
              $region93: #{_lambda_.20} parent=89 // loop_header_branch
                %499 = sbr.rel (%p497) target = $region97
              $region94: #{_lambda_.20} parent=89 // loop_body
                %v503 = vld [vmem:[%s501] sm:$0xff]
                %504 = vst [vmem:[%s502] sm:$0xff] %v503
                %v505 = vld [vmem:[%s501 + $0x8] sm:$0xff]
                %506 = vst [vmem:[%s502 + $0x8] sm:$0xff] %v505
                %v507 = vld [vmem:[%s501 + $0x10] sm:$0xff]
                %508 = vst [vmem:[%s502 + $0x20] sm:$0xff] %v507
                %v509 = vld [vmem:[%s501 + $0x18] sm:$0xff]
                %510 = vst [vmem:[%s502 + $0x28] sm:$0xff] %v509
              $region95: #{_lambda_.20} parent=89 // loop_footer
                %s500 = sadd.s32 1, %s496
              $region96: #{_lambda_.20} parent=89 // loop_footer_branch
                %495 = sbr.rel target = $region92
              $region97: #{_lambda_.20} parent=89 // loop_exit
                _
            $region90: #{_lambda_.20} parent=85 // pred_fallthru
              _
            // Predicated region
            $region98: #{_lambda_.20} parent=85 // pred_check
              _
            $region99: #{_lambda_.20} parent=85 // pred_check_branch
              %512 = sbr.rel target = $region101
            $region100: #{_lambda_.20} parent=85 // pred_region
              _
            $region101: #{_lambda_.20} parent=85 // pred_fallthru
              _
          $region86: #{_lambda_.20} parent=81 // pred_fallthru
            _
          %513 = vnop
        $region82: #{_lambda_.20} parent=65 // pred_fallthru
          _
      $region66: #{_lambda_.20} parent=5 // pred_fallthru
        _
      %p514 = scmp.le.s32.totalorder 2, %s9
      // Predicated region
      $region102: #{_lambda_.20} parent=5 // pred_check
        %p515 = pneg %p514
      $region103: #{_lambda_.20} parent=5 // pred_check_branch
        %517 = sbr.rel (%p515) target = $region105
      $region104: #{_lambda_.20} parent=5 // pred_region
        %s518 = ssub.s32 %s9, 2
        // Predicated region
        $region106: #{_lambda_.20} parent=104 // pred_check
          %p519 = pneg %p125
        $region107: #{_lambda_.20} parent=104 // pred_check_branch
          %521 = sbr.rel (%p519) target = $region109
        $region108: #{_lambda_.20} parent=104 // pred_region
          %s522 = sand.u32 %s110, 1
          %s523 = sand.u32 %s110, 1
          %s524 = smul.addr %s523, 32
          %s525 = scalar_lea.vmem [#allocation4], %s524
        $region109: #{_lambda_.20} parent=104 // pred_fallthru
          _
      $region105: #{_lambda_.20} parent=5 // pred_fallthru
        _
    $region6: #{_lambda_.20} parent=1 // loop_footer
      %s13 = sadd.s32 1, %s9
    $region7: #{_lambda_.20} parent=1 // loop_footer_branch
      %8 = sbr.rel target = $region3
    $region8: #{_lambda_.20} parent=1 // loop_exit
      _

// kernel: _lambda_.25
$region0: #{_lambda_.25}
  #allocation0 [shape = 'u32[]', space=smem, size = 0x4, offset = 0x4, fixed_abs, tag = 'smem constant byte address 0x4 - core index']
  #allocation1 [shape = 'u32[72,128]{1,0:T(1,128)}', space=vmem, size = 0x9000, scoped, tag = 'internal scratch']
  %s0 = inlined_call_operand.vmem [shape: f32[16,128], index: 0, kind: input, shape index: {}]
  %s1 = inlined_call_operand.vmem [shape: f32[16,128], index: 1, kind: input, shape index: {}]
  %s2 = inlined_call_operand.vmem [shape: f32[1,128], index: 2, kind: output, shape index: {}]
  %s3 = sld [smem:[#allocation0]]
  $region18: #{_lambda_.25} parent=0
    _
  %s5 = ssub.s32 1, %s3
  %s6 = scalar_select 0, %s5, %s3
  // Predicated region
  $region2: #{_lambda_.25} parent=0 // pred_check
    _
  $region3: #{_lambda_.25} parent=0 // pred_check_branch
    %8 = sbr.rel (0) target = $region5
  $region4: #{_lambda_.25} parent=0 // pred_region
    _
  $region5: #{_lambda_.25} parent=0 // pred_fallthru
    _
  // Predicated region
  $region6: #{_lambda_.25} parent=0 // pred_check
    _
  $region7: #{_lambda_.25} parent=0 // pred_check_branch
    %10 = sbr.rel (0) target = $region9
  $region8: #{_lambda_.25} parent=0 // pred_region
    _
  $region9: #{_lambda_.25} parent=0 // pred_fallthru
    _
  %v11 = vld [vmem:[%s0] sm:$0xff]
  %v12 = vld [vmem:[%s0 + $0x8] sm:$0xff]
  %v13 = vld [vmem:[%s1] sm:$0xff]
  %v14 = vld [vmem:[%s1 + $0x8] sm:$0xff]
  %v15 = vsub.f32 %v11, %v13
  %v16 = vsub.f32 %v12, %v14
  %v17 = vmul.f32 %v15, %v15
  %v18 = vmul.f32 %v16, %v16
  %v19 = vadd.f32 %v17, %v18
  %v20 = vrot.slane %v19, 4
  %v21 = vadd.f32 %v19, %v20
  %v22 = vrot.slane %v21, 2
  %v23 = vadd.f32 %v21, %v22
  %v24 = vrot.slane %v23, 1
  %v25 = vadd.f32 %v23, %v24
  %v26 = vmul.f32 %v25, 0.0625
  %27 = vst [vmem:[%s2] sm:$0x1] %v26
  // Predicated region
  $region10: #{_lambda_.25} parent=0 // pred_check
    _
  $region11: #{_lambda_.25} parent=0 // pred_check_branch
    %29 = sbr.rel (0) target = $region13
  $region12: #{_lambda_.25} parent=0 // pred_region
    _
  $region13: #{_lambda_.25} parent=0 // pred_fallthru
    _
  // Predicated region
  $region14: #{_lambda_.25} parent=0 // pred_check
    _
  $region15: #{_lambda_.25} parent=0 // pred_check_branch
    %31 = sbr.rel (0) target = $region17
  $region16: #{_lambda_.25} parent=0 // pred_region
    _
  $region17: #{_lambda_.25} parent=0 // pred_fallthru
    _

</llo_original>
